<compile_context>
chip_gen: v5e
topology: v5e:2x2
jax: 0.10.0
libtpu: 0.0.40
codegen_flags: <defaults>
</compile_context>

<pallas_src>
import jax
import jax.numpy as jnp
from jax import lax
from jax.experimental import pallas as pl
from jax.experimental.pallas import tpu as pltpu


def _expand_feats_kernel(x_ref, w1_ref, s1_ref, b1_ref,
                         w2_ref, s2_ref, b2_ref,
                         out_ref, xpad_ref, ypad_ref):
    """Fused (3x3 conv + folded BN + ReLU) x 2 for one image, NHWC layout.

    x_ref   : (H, W, Cin)       input image tile
    w1_ref  : (9*Cin, Cout)     layer-1 taps in im2col order ((ky,kx) major, ci minor)
    s1_ref  : (1, Cout)         folded BN scale  = gamma / sqrt(var + eps)
    b1_ref  : (1, Cout)         folded BN bias   = (conv_bias - mean)*scale + beta
    w2_ref  : (9*Cout, Cout)    layer-2 taps
    s2_ref, b2_ref : (1, Cout)
    out_ref : (H*W, Cout)       output, flattened spatial (bit-identical to NHWC)
    xpad_ref: VMEM (H+2, W+2, Cin)   zero-padded input scratch
    ypad_ref: VMEM (H+2, W+2, Cout)  zero-padded intermediate scratch
    """
    H, W, Cin = x_ref.shape
    Cout = out_ref.shape[-1]

    def im2col(pad_ref, c):
        # Gather the 9 shifted 3x3 taps into one (H*W, 9*c) operand so the
        # whole conv layer is a single MXU matmul (instead of 9 tiny ones).
        cols = []
        for t in range(9):
            ky, kx = divmod(t, 3)
            cols.append(pad_ref[ky:ky + H, kx:kx + W, :].reshape(H * W, c))
        return jnp.concatenate(cols, axis=-1)

    # ---- layer 1: conv3x3 + folded BN + ReLU -------------------------------
    # Zero-pad in VMEM (no HBM round trip through jnp.pad).
    xpad_ref[...] = jnp.zeros_like(xpad_ref)
    xpad_ref[1:H + 1, 1:W + 1, :] = x_ref[...]

    p1 = im2col(xpad_ref, Cin)                                # (H*W, 9*Cin)
    y1 = jnp.dot(p1, w1_ref[...], preferred_element_type=jnp.float32)
    y1 = jnp.maximum(y1 * s1_ref[...] + b1_ref[...], 0.0)     # BN + ReLU

    # ---- layer 2: intermediate never leaves VMEM ---------------------------
    ypad_ref[...] = jnp.zeros_like(ypad_ref)
    ypad_ref[1:H + 1, 1:W + 1, :] = y1.reshape(H, W, Cout)

    p2 = im2col(ypad_ref, Cout)                               # (H*W, 9*Cout)
    y2 = jnp.dot(p2, w2_ref[...], preferred_element_type=jnp.float32)
    y2 = jnp.maximum(y2 * s2_ref[...] + b2_ref[...], 0.0)

    out_ref[...] = y2.astype(out_ref.dtype)


def _fold_bn(conv_b, gamma, beta, mean, var, eps):
    scale = gamma / jnp.sqrt(var + eps)
    bias = (conv_b - mean) * scale + beta
    return scale, bias


def expand_feats_forward(x_nchw,
                         w1, b1, g1, be1, m1, v1,
                         w2, b2, g2, be2, m2, v2, eps=1e-5):
    """x_nchw: (N, Cin, H, W); weights are HWIO (3, 3, Cin/Cout, Cout)."""
    N, Cin, H, W = x_nchw.shape
    Cout = w1.shape[-1]

    x_nhwc = jnp.transpose(x_nchw, (0, 2, 3, 1))              # NCHW -> NHWC

    s1, bb1 = _fold_bn(b1, g1, be1, m1, v1, eps)
    s2, bb2 = _fold_bn(b2, g2, be2, m2, v2, eps)

    # Pre-reshape weights to im2col layout so the kernel does no reshuffling.
    w1f = w1.reshape(9 * Cin, Cout)
    w2f = w2.reshape(9 * Cout, Cout)

    out_flat = pl.pallas_call(
        _expand_feats_kernel,
        out_shape=jax.ShapeDtypeStruct((N, H * W, Cout), x_nhwc.dtype),
        grid=(N,),
        in_specs=[
            pl.BlockSpec((None, H, W, Cin), lambda n: (n, 0, 0, 0)),
            pl.BlockSpec((9 * Cin, Cout), lambda n: (0, 0)),
            pl.BlockSpec((1, Cout), lambda n: (0, 0)),
            pl.BlockSpec((1, Cout), lambda n: (0, 0)),
            pl.BlockSpec((9 * Cout, Cout), lambda n: (0, 0)),
            pl.BlockSpec((1, Cout), lambda n: (0, 0)),
            pl.BlockSpec((1, Cout), lambda n: (0, 0)),
        ],
        out_specs=pl.BlockSpec((None, H * W, Cout), lambda n: (n, 0, 0)),
        scratch_shapes=[
            pltpu.VMEM((H + 2, W + 2, Cin), jnp.float32),
            pltpu.VMEM((H + 2, W + 2, Cout), jnp.float32),
        ],
        compiler_params=pltpu.CompilerParams(
            dimension_semantics=("parallel",)),
    )(x_nhwc, w1f, s1.reshape(1, Cout), bb1.reshape(1, Cout),
      w2f, s2.reshape(1, Cout), bb2.reshape(1, Cout))

    # (N, H*W, Cout) is bit-identical to NHWC; reshape is free, then -> NCHW.
    return jnp.transpose(out_flat.reshape(N, H, W, Cout), (0, 3, 1, 2))


class ExpandFeats:
    """JAX/Pallas port of expand_feats (Conv3x3 -> BN -> ReLU, twice)."""

    def __init__(self, in_channel, out_channel, key):
        ks = jax.random.split(key, 12)

        def conv_w(k, cin, cout):
            bound = 1.0 / jnp.sqrt(float(cin * 9))            # kaiming-uniform-ish
            return jax.random.uniform(k, (3, 3, cin, cout), jnp.float32,
                                      -bound, bound)

        # block 1
        self.w1 = conv_w(ks[0], in_channel, out_channel)
        self.b1 = jax.random.uniform(ks[1], (out_channel,), jnp.float32, -0.1, 0.1)
        self.gamma1 = jax.random.uniform(ks[2], (out_channel,), jnp.float32, 0.5, 1.5)
        self.beta1 = jax.random.uniform(ks[3], (out_channel,), jnp.float32, -0.1, 0.1)
        self.mean1 = 0.1 * jax.random.normal(ks[4], (out_channel,), jnp.float32)
        self.var1 = jax.random.uniform(ks[5], (out_channel,), jnp.float32, 0.5, 1.5)
        # block 2
        self.w2 = conv_w(ks[6], out_channel, out_channel)
        self.b2 = jax.random.uniform(ks[7], (out_channel,), jnp.float32, -0.1, 0.1)
        self.gamma2 = jax.random.uniform(ks[8], (out_channel,), jnp.float32, 0.5, 1.5)
        self.beta2 = jax.random.uniform(ks[9], (out_channel,), jnp.float32, -0.1, 0.1)
        self.mean2 = 0.1 * jax.random.normal(ks[10], (out_channel,), jnp.float32)
        self.var2 = jax.random.uniform(ks[11], (out_channel,), jnp.float32, 0.5, 1.5)

    def __call__(self, x_nchw):
        return expand_feats_forward(
            x_nchw,
            self.w1, self.b1, self.gamma1, self.beta1, self.mean1, self.var1,
            self.w2, self.b2, self.gamma2, self.beta2, self.mean2, self.var2)


# ---------------------------------------------------------------------------
# Pure-JAX reference (used only to validate the Pallas kernel).
# ---------------------------------------------------------------------------
def _ref_block(x_nhwc, w, b, gamma, beta, mean, var, eps=1e-5):
    y = lax.conv_general_dilated(
        x_nhwc, w, window_strides=(1, 1), padding="SAME",
        dimension_numbers=("NHWC", "HWIO", "NHWC"))
    y = y + b
    y = (y - mean) / jnp.sqrt(var + eps) * gamma + beta
    return jnp.maximum(y, 0.0)


def _ref_forward(model, x_nchw):
    x = jnp.transpose(x_nchw, (0, 2, 3, 1))
    y = _ref_block(x, model.w1, model.b1, model.gamma1, model.beta1,
                   model.mean1, model.var1)
    y = _ref_block(y, model.w2, model.b2, model.gamma2, model.beta2,
                   model.mean2, model.var2)
    return jnp.transpose(y, (0, 3, 1, 2))


if __name__ == "__main__":
    key = jax.random.PRNGKey(0)
    k_x, k_p = jax.random.split(key)

    N, Cin, H, W = 2, 4, 16, 16
    Cout = 8
    x = jax.random.normal(k_x, (N, Cin, H, W), jnp.float32)   # PyTorch NCHW input

    model = ExpandFeats(Cin, Cout, k_p)

    out = jax.block_until_ready(model(x))
    ref = jax.block_until_ready(_ref_forward(model, x))

    assert out.shape == (N, Cout, H, W)
    assert jnp.allclose(out, ref, rtol=1e-4, atol=1e-4), float(
        jnp.max(jnp.abs(out - ref)))

    print("KERNEL_OK")
</pallas_src>

<mosaic_0001>
module attributes {stable_mosaic.version = 11 : i64} {
  func.func @_expand_feats_kernel(%arg0: i32, %arg1: memref<1x16x16x4xf32, #tpu.memory_space<vmem>>, %arg2: memref<36x8xf32, #tpu.memory_space<vmem>>, %arg3: memref<1x8xf32, #tpu.memory_space<vmem>>, %arg4: memref<1x8xf32, #tpu.memory_space<vmem>>, %arg5: memref<72x8xf32, #tpu.memory_space<vmem>>, %arg6: memref<1x8xf32, #tpu.memory_space<vmem>>, %arg7: memref<1x8xf32, #tpu.memory_space<vmem>>, %arg8: memref<1x256x8xf32, #tpu.memory_space<vmem>>, %arg9: memref<18x18x4xf32, #tpu.memory_space<vmem>>, %arg10: memref<18x18x8xf32, #tpu.memory_space<vmem>>) attributes {dimension_semantics = [#tpu.dimension_semantics<parallel>], iteration_bounds = array<i64: 2>, scalar_prefetch = 0 : i64, scratch_operands = 2 : i64, tpu.core_type = #tpu.core_type<tc>, window_params = [{transform_indices = @transform_0, window_bounds = array<i64: 1, 16, 16, 4>}, {pipeline_mode = #tpu.pipeline_mode<synchronous>, transform_indices = @transform_1, window_bounds = array<i64: 36, 8>}, {pipeline_mode = #tpu.pipeline_mode<synchronous>, transform_indices = @transform_2, window_bounds = array<i64: 1, 8>}, {pipeline_mode = #tpu.pipeline_mode<synchronous>, transform_indices = @transform_3, window_bounds = array<i64: 1, 8>}, {pipeline_mode = #tpu.pipeline_mode<synchronous>, transform_indices = @transform_4, window_bounds = array<i64: 72, 8>}, {pipeline_mode = #tpu.pipeline_mode<synchronous>, transform_indices = @transform_5, window_bounds = array<i64: 1, 8>}, {pipeline_mode = #tpu.pipeline_mode<synchronous>, transform_indices = @transform_6, window_bounds = array<i64: 1, 8>}, {transform_indices = @transform_7, window_bounds = array<i64: 1, 256, 8>}]} {
    %cst = arith.constant 0.000000e+00 : f32
    %0 = vector.broadcast %cst : f32 to vector<18x18x4xf32>
    %c0 = arith.constant 0 : index
    %c0_0 = arith.constant 0 : index
    %c0_1 = arith.constant 0 : index
    %1 = vector.load %arg9[%c0, %c0_0, %c0_1] : memref<18x18x4xf32, #tpu.memory_space<vmem>>, vector<18x18x4xf32>
    tpu.vector_store %arg9[%c0, %c0_0, %c0_1], %0 {strides = array<i32>} : memref<18x18x4xf32, #tpu.memory_space<vmem>>, vector<18x18x4xf32>,
    %c0_2 = arith.constant 0 : index
    %c0_3 = arith.constant 0 : index
    %c0_4 = arith.constant 0 : index
    %c0_5 = arith.constant 0 : index
    %2 = vector.load %arg1[%c0_2, %c0_3, %c0_4, %c0_5] : memref<1x16x16x4xf32, #tpu.memory_space<vmem>>, vector<1x16x16x4xf32>
    %3 = vector.shape_cast %2 : vector<1x16x16x4xf32> to vector<16x16x4xf32>
    %c1 = arith.constant 1 : index
    %c1_6 = arith.constant 1 : index
    %c0_7 = arith.constant 0 : index
    %4 = vector.load %arg9[%c1, %c1_6, %c0_7] : memref<18x18x4xf32, #tpu.memory_space<vmem>>, vector<16x16x4xf32>
    tpu.vector_store %arg9[%c1, %c1_6, %c0_7], %3 {strides = array<i32>} : memref<18x18x4xf32, #tpu.memory_space<vmem>>, vector<16x16x4xf32>,
    %c0_8 = arith.constant 0 : index
    %c0_9 = arith.constant 0 : index
    %c0_10 = arith.constant 0 : index
    %5 = vector.load %arg9[%c0_8, %c0_9, %c0_10] : memref<18x18x4xf32, #tpu.memory_space<vmem>>, vector<16x16x4xf32>
    %6 = vector.shape_cast %5 : vector<16x16x4xf32> to vector<256x4xf32>
    %c0_11 = arith.constant 0 : index
    %c1_12 = arith.constant 1 : index
    %c0_13 = arith.constant 0 : index
    %7 = vector.load %arg9[%c0_11, %c1_12, %c0_13] : memref<18x18x4xf32, #tpu.memory_space<vmem>>, vector<16x16x4xf32>
    %8 = vector.shape_cast %7 : vector<16x16x4xf32> to vector<256x4xf32>
    %c0_14 = arith.constant 0 : index
    %c2 = arith.constant 2 : index
    %c0_15 = arith.constant 0 : index
    %9 = vector.load %arg9[%c0_14, %c2, %c0_15] : memref<18x18x4xf32, #tpu.memory_space<vmem>>, vector<16x16x4xf32>
    %10 = vector.shape_cast %9 : vector<16x16x4xf32> to vector<256x4xf32>
    %c1_16 = arith.constant 1 : index
    %c0_17 = arith.constant 0 : index
    %c0_18 = arith.constant 0 : index
    %11 = vector.load %arg9[%c1_16, %c0_17, %c0_18] : memref<18x18x4xf32, #tpu.memory_space<vmem>>, vector<16x16x4xf32>
    %12 = vector.shape_cast %11 : vector<16x16x4xf32> to vector<256x4xf32>
    %c1_19 = arith.constant 1 : index
    %c1_20 = arith.constant 1 : index
    %c0_21 = arith.constant 0 : index
    %13 = vector.load %arg9[%c1_19, %c1_20, %c0_21] : memref<18x18x4xf32, #tpu.memory_space<vmem>>, vector<16x16x4xf32>
    %14 = vector.shape_cast %13 : vector<16x16x4xf32> to vector<256x4xf32>
    %c1_22 = arith.constant 1 : index
    %c2_23 = arith.constant 2 : index
    %c0_24 = arith.constant 0 : index
    %15 = vector.load %arg9[%c1_22, %c2_23, %c0_24] : memref<18x18x4xf32, #tpu.memory_space<vmem>>, vector<16x16x4xf32>
    %16 = vector.shape_cast %15 : vector<16x16x4xf32> to vector<256x4xf32>
    %c2_25 = arith.constant 2 : index
    %c0_26 = arith.constant 0 : index
    %c0_27 = arith.constant 0 : index
    %17 = vector.load %arg9[%c2_25, %c0_26, %c0_27] : memref<18x18x4xf32, #tpu.memory_space<vmem>>, vector<16x16x4xf32>
    %18 = vector.shape_cast %17 : vector<16x16x4xf32> to vector<256x4xf32>
    %c2_28 = arith.constant 2 : index
    %c1_29 = arith.constant 1 : index
    %c0_30 = arith.constant 0 : index
    %19 = vector.load %arg9[%c2_28, %c1_29, %c0_30] : memref<18x18x4xf32, #tpu.memory_space<vmem>>, vector<16x16x4xf32>
    %20 = vector.shape_cast %19 : vector<16x16x4xf32> to vector<256x4xf32>
    %c2_31 = arith.constant 2 : index
    %c2_32 = arith.constant 2 : index
    %c0_33 = arith.constant 0 : index
    %21 = vector.load %arg9[%c2_31, %c2_32, %c0_33] : memref<18x18x4xf32, #tpu.memory_space<vmem>>, vector<16x16x4xf32>
    %22 = vector.shape_cast %21 : vector<16x16x4xf32> to vector<256x4xf32>
    %23 = tpu.concatenate %6, %8, %10, %12, %14, %16, %18, %20, %22 in 1 : vector<256x4xf32>, vector<256x4xf32>, vector<256x4xf32>, vector<256x4xf32>, vector<256x4xf32>, vector<256x4xf32>, vector<256x4xf32>, vector<256x4xf32>, vector<256x4xf32> -> vector<256x36xf32>
    %c0_34 = arith.constant 0 : index
    %c0_35 = arith.constant 0 : index
    %24 = vector.load %arg2[%c0_34, %c0_35] : memref<36x8xf32, #tpu.memory_space<vmem>>, vector<36x8xf32>
    %cst_36 = arith.constant dense<0.000000e+00> : vector<256x8xf32>
    %25 = tpu.matmul %23, %24, %cst_36 {dimension_numbers = #tpu.dot_dimension_numbers<[1], [0], [0], [1], [0, 0, 1, 1], [], []>} : vector<256x36xf32>, vector<36x8xf32>, vector<256x8xf32> -> vector<256x8xf32>
    %c0_37 = arith.constant 0 : index
    %c0_38 = arith.constant 0 : index
    %26 = vector.load %arg3[%c0_37, %c0_38] : memref<1x8xf32, #tpu.memory_space<vmem>>, vector<1x8xf32>
    %27 = vector.broadcast %26 : vector<1x8xf32> to vector<256x8xf32>
    %28 = arith.mulf %25, %27 : vector<256x8xf32>
    %c0_39 = arith.constant 0 : index
    %c0_40 = arith.constant 0 : index
    %29 = vector.load %arg4[%c0_39, %c0_40] : memref<1x8xf32, #tpu.memory_space<vmem>>, vector<1x8xf32>
    %30 = vector.broadcast %29 : vector<1x8xf32> to vector<256x8xf32>
    %31 = arith.addf %28, %30 : vector<256x8xf32>
    %cst_41 = arith.constant 0.000000e+00 : f32
    %32 = vector.broadcast %cst_41 : f32 to vector<256x8xf32>
    %33 = arith.maximumf %31, %32 : vector<256x8xf32>
    %cst_42 = arith.constant 0.000000e+00 : f32
    %34 = vector.broadcast %cst_42 : f32 to vector<18x18x8xf32>
    %c0_43 = arith.constant 0 : index
    %c0_44 = arith.constant 0 : index
    %c0_45 = arith.constant 0 : index
    %35 = vector.load %arg10[%c0_43, %c0_44, %c0_45] : memref<18x18x8xf32, #tpu.memory_space<vmem>>, vector<18x18x8xf32>
    tpu.vector_store %arg10[%c0_43, %c0_44, %c0_45], %34 {strides = array<i32>} : memref<18x18x8xf32, #tpu.memory_space<vmem>>, vector<18x18x8xf32>,
    %36 = vector.shape_cast %33 : vector<256x8xf32> to vector<16x16x8xf32>
    %c1_46 = arith.constant 1 : index
    %c1_47 = arith.constant 1 : index
    %c0_48 = arith.constant 0 : index
    %37 = vector.load %arg10[%c1_46, %c1_47, %c0_48] : memref<18x18x8xf32, #tpu.memory_space<vmem>>, vector<16x16x8xf32>
    tpu.vector_store %arg10[%c1_46, %c1_47, %c0_48], %36 {strides = array<i32>} : memref<18x18x8xf32, #tpu.memory_space<vmem>>, vector<16x16x8xf32>,
    %c0_49 = arith.constant 0 : index
    %c0_50 = arith.constant 0 : index
    %c0_51 = arith.constant 0 : index
    %38 = vector.load %arg10[%c0_49, %c0_50, %c0_51] : memref<18x18x8xf32, #tpu.memory_space<vmem>>, vector<16x16x8xf32>
    %39 = vector.shape_cast %38 : vector<16x16x8xf32> to vector<256x8xf32>
    %c0_52 = arith.constant 0 : index
    %c1_53 = arith.constant 1 : index
    %c0_54 = arith.constant 0 : index
    %40 = vector.load %arg10[%c0_52, %c1_53, %c0_54] : memref<18x18x8xf32, #tpu.memory_space<vmem>>, vector<16x16x8xf32>
    %41 = vector.shape_cast %40 : vector<16x16x8xf32> to vector<256x8xf32>
    %c0_55 = arith.constant 0 : index
    %c2_56 = arith.constant 2 : index
    %c0_57 = arith.constant 0 : index
    %42 = vector.load %arg10[%c0_55, %c2_56, %c0_57] : memref<18x18x8xf32, #tpu.memory_space<vmem>>, vector<16x16x8xf32>
    %43 = vector.shape_cast %42 : vector<16x16x8xf32> to vector<256x8xf32>
    %c1_58 = arith.constant 1 : index
    %c0_59 = arith.constant 0 : index
    %c0_60 = arith.constant 0 : index
    %44 = vector.load %arg10[%c1_58, %c0_59, %c0_60] : memref<18x18x8xf32, #tpu.memory_space<vmem>>, vector<16x16x8xf32>
    %45 = vector.shape_cast %44 : vector<16x16x8xf32> to vector<256x8xf32>
    %c1_61 = arith.constant 1 : index
    %c1_62 = arith.constant 1 : index
    %c0_63 = arith.constant 0 : index
    %46 = vector.load %arg10[%c1_61, %c1_62, %c0_63] : memref<18x18x8xf32, #tpu.memory_space<vmem>>, vector<16x16x8xf32>
    %47 = vector.shape_cast %46 : vector<16x16x8xf32> to vector<256x8xf32>
    %c1_64 = arith.constant 1 : index
    %c2_65 = arith.constant 2 : index
    %c0_66 = arith.constant 0 : index
    %48 = vector.load %arg10[%c1_64, %c2_65, %c0_66] : memref<18x18x8xf32, #tpu.memory_space<vmem>>, vector<16x16x8xf32>
    %49 = vector.shape_cast %48 : vector<16x16x8xf32> to vector<256x8xf32>
    %c2_67 = arith.constant 2 : index
    %c0_68 = arith.constant 0 : index
    %c0_69 = arith.constant 0 : index
    %50 = vector.load %arg10[%c2_67, %c0_68, %c0_69] : memref<18x18x8xf32, #tpu.memory_space<vmem>>, vector<16x16x8xf32>
    %51 = vector.shape_cast %50 : vector<16x16x8xf32> to vector<256x8xf32>
    %c2_70 = arith.constant 2 : index
    %c1_71 = arith.constant 1 : index
    %c0_72 = arith.constant 0 : index
    %52 = vector.load %arg10[%c2_70, %c1_71, %c0_72] : memref<18x18x8xf32, #tpu.memory_space<vmem>>, vector<16x16x8xf32>
    %53 = vector.shape_cast %52 : vector<16x16x8xf32> to vector<256x8xf32>
    %c2_73 = arith.constant 2 : index
    %c2_74 = arith.constant 2 : index
    %c0_75 = arith.constant 0 : index
    %54 = vector.load %arg10[%c2_73, %c2_74, %c0_75] : memref<18x18x8xf32, #tpu.memory_space<vmem>>, vector<16x16x8xf32>
    %55 = vector.shape_cast %54 : vector<16x16x8xf32> to vector<256x8xf32>
    %56 = tpu.concatenate %39, %41, %43, %45, %47, %49, %51, %53, %55 in 1 : vector<256x8xf32>, vector<256x8xf32>, vector<256x8xf32>, vector<256x8xf32>, vector<256x8xf32>, vector<256x8xf32>, vector<256x8xf32>, vector<256x8xf32>, vector<256x8xf32> -> vector<256x72xf32>
    %c0_76 = arith.constant 0 : index
    %c0_77 = arith.constant 0 : index
    %57 = vector.load %arg5[%c0_76, %c0_77] : memref<72x8xf32, #tpu.memory_space<vmem>>, vector<72x8xf32>
    %cst_78 = arith.constant dense<0.000000e+00> : vector<256x8xf32>
    %58 = tpu.matmul %56, %57, %cst_78 {dimension_numbers = #tpu.dot_dimension_numbers<[1], [0], [0], [1], [0, 0, 1, 1], [], []>} : vector<256x72xf32>, vector<72x8xf32>, vector<256x8xf32> -> vector<256x8xf32>
    %c0_79 = arith.constant 0 : index
    %c0_80 = arith.constant 0 : index
    %59 = vector.load %arg6[%c0_79, %c0_80] : memref<1x8xf32, #tpu.memory_space<vmem>>, vector<1x8xf32>
    %60 = vector.broadcast %59 : vector<1x8xf32> to vector<256x8xf32>
    %61 = arith.mulf %58, %60 : vector<256x8xf32>
    %c0_81 = arith.constant 0 : index
    %c0_82 = arith.constant 0 : index
    %62 = vector.load %arg7[%c0_81, %c0_82] : memref<1x8xf32, #tpu.memory_space<vmem>>, vector<1x8xf32>
    %63 = vector.broadcast %62 : vector<1x8xf32> to vector<256x8xf32>
    %64 = arith.addf %61, %63 : vector<256x8xf32>
    %cst_83 = arith.constant 0.000000e+00 : f32
    %65 = vector.broadcast %cst_83 : f32 to vector<256x8xf32>
    %66 = arith.maximumf %64, %65 : vector<256x8xf32>
    %c0_84 = arith.constant 0 : index
    %c0_85 = arith.constant 0 : index
    %c0_86 = arith.constant 0 : index
    %67 = vector.load %arg8[%c0_84, %c0_85, %c0_86] : memref<1x256x8xf32, #tpu.memory_space<vmem>>, vector<1x256x8xf32>
    %68 = vector.shape_cast %67 : vector<1x256x8xf32> to vector<256x8xf32>
    %69 = vector.shape_cast %66 : vector<256x8xf32> to vector<1x256x8xf32>
    tpu.vector_store %arg8[%c0_84, %c0_85, %c0_86], %69 {strides = array<i32>} : memref<1x256x8xf32, #tpu.memory_space<vmem>>, vector<1x256x8xf32>,
    return
  }
  func.func @transform_0(%arg0: i32) -> (i32, i32, i32, i32) {
    %c0_i32 = arith.constant 0 : i32
    %c0_i32_0 = arith.constant 0 : i32
    %c0_i32_1 = arith.constant 0 : i32
    %c0_i32_2 = arith.constant 0 : i32
    return %arg0, %c0_i32, %c0_i32_0, %c0_i32_1 : i32, i32, i32, i32
  }
  func.func @transform_1(%arg0: i32) -> (i32, i32) {
    %c0_i32 = arith.constant 0 : i32
    %c0_i32_0 = arith.constant 0 : i32
    %c0_i32_1 = arith.constant 0 : i32
    return %c0_i32, %c0_i32_0 : i32, i32
  }
  func.func @transform_2(%arg0: i32) -> (i32, i32) {
    %c0_i32 = arith.constant 0 : i32
    %c0_i32_0 = arith.constant 0 : i32
    %c0_i32_1 = arith.constant 0 : i32
    return %c0_i32, %c0_i32_0 : i32, i32
  }
  func.func @transform_3(%arg0: i32) -> (i32, i32) {
    %c0_i32 = arith.constant 0 : i32
    %c0_i32_0 = arith.constant 0 : i32
    %c0_i32_1 = arith.constant 0 : i32
    return %c0_i32, %c0_i32_0 : i32, i32
  }
  func.func @transform_4(%arg0: i32) -> (i32, i32) {
    %c0_i32 = arith.constant 0 : i32
    %c0_i32_0 = arith.constant 0 : i32
    %c0_i32_1 = arith.constant 0 : i32
    return %c0_i32, %c0_i32_0 : i32, i32
  }
  func.func @transform_5(%arg0: i32) -> (i32, i32) {
    %c0_i32 = arith.constant 0 : i32
    %c0_i32_0 = arith.constant 0 : i32
    %c0_i32_1 = arith.constant 0 : i32
    return %c0_i32, %c0_i32_0 : i32, i32
  }
  func.func @transform_6(%arg0: i32) -> (i32, i32) {
    %c0_i32 = arith.constant 0 : i32
    %c0_i32_0 = arith.constant 0 : i32
    %c0_i32_1 = arith.constant 0 : i32
    return %c0_i32, %c0_i32_0 : i32, i32
  }
  func.func @transform_7(%arg0: i32) -> (i32, i32, i32) {
    %c0_i32 = arith.constant 0 : i32
    %c0_i32_0 = arith.constant 0 : i32
    %c0_i32_1 = arith.constant 0 : i32
    return %arg0, %c0_i32, %c0_i32_0 : i32, i32, i32
  }
}

</mosaic_0001>

<llo_original>
// kernel: tpu_custom_call.1
$region0: #{tpu_custom_call.1}
  #allocation0 [shape = 'u32[]', space=smem, size = 0x4, offset = 0x4, fixed_abs, tag = 'smem constant byte address 0x4 - core index']
  #allocation1 [shape = 'u32[72,128]{1,0:T(1,128)}', space=vmem, size = 0x9000, scoped, tag = 'internal scratch']
  #allocation2 [shape = 'f32[18,18,4]{2,1,0:T(8,128)}', space=vmem, size = 0x36000, scoped, tag = 'scratch operand']
  #allocation3 [shape = 'f32[18,18,8]{2,1,0:T(8,128)}', space=vmem, size = 0x36000, scoped, tag = 'scratch operand']
  %s0 = inlined_call_operand.vmem [shape: f32[2,16,16,4], index: 0, kind: input, shape index: {}]
  %s1 = inlined_call_operand.vmem [shape: f32[36,8], index: 1, kind: input, shape index: {}]
  %s2 = inlined_call_operand.vmem [shape: f32[1,8], index: 2, kind: input, shape index: {}]
  %s3 = inlined_call_operand.vmem [shape: f32[1,8], index: 3, kind: input, shape index: {}]
  %s4 = inlined_call_operand.vmem [shape: f32[72,8], index: 4, kind: input, shape index: {}]
  %s5 = inlined_call_operand.vmem [shape: f32[1,8], index: 5, kind: input, shape index: {}]
  %s6 = inlined_call_operand.vmem [shape: f32[1,8], index: 6, kind: input, shape index: {}]
  %s7 = inlined_call_operand.vmem [shape: f32[2,256,8], index: 7, kind: output, shape index: {}]
  %s8 = sld [smem:[#allocation0]]
  $region61: #{tpu_custom_call.1} parent=0
    _
  %s10 = ssub.s32 1, %s8
  %s11 = scalar_select 0, %s10, %s8
  loop: start=0, step=1, limit=4
  $region2: #{tpu_custom_call.1} parent=0 // loop_pre_header
    _
  $region3: #{tpu_custom_call.1} parent=0 // loop_header
    %s13 = sphi 0, %s17
    %p14 = scmp.ge.s32.totalorder %s13, 4
    %s23 = sphi 0, %s25
    %s26 = sphi 0, %s23
    %s27 = sphi 0, %s26
    %s43 = sphi 0, %s27
    %s47 = sphi 0, %s47
    %s49 = sphi 0, %s47
    %s50 = sphi 0, %s49
    %s64 = sphi 0, %s50
    %s68 = sphi 0, %s68
    %s70 = sphi 0, %s68
    %s71 = sphi 0, %s70
    %s85 = sphi 0, %s71
    %s89 = sphi 0, %s89
    %s91 = sphi 0, %s89
    %s92 = sphi 0, %s91
    %s106 = sphi 0, %s92
    %s110 = sphi 0, %s110
    %s112 = sphi 0, %s110
    %s113 = sphi 0, %s112
    %s127 = sphi 0, %s113
    %s131 = sphi 0, %s131
    %s133 = sphi 0, %s131
    %s134 = sphi 0, %s133
    %s148 = sphi 0, %s134
    %s152 = sphi 0, %s152
    %s154 = sphi 0, %s152
    %s155 = sphi 0, %s154
    %s169 = sphi 0, %s155
    %s175 = sphi 0, %s177
    %s178 = sphi 0, %s175
    %s179 = sphi 0, %s178
    %s195 = sphi 0, %s179
  $region4: #{tpu_custom_call.1} parent=0 // loop_header_branch
    %16 = sbr.rel (%p14) target = $region8
  $region5: #{tpu_custom_call.1} parent=0 // loop_body
    %s18 = ssub.s32 %s13, 1
    %s19 = ssub.s32 %s13, 2
    %s20 = sadd.s32 %s13, 1
    %s21 = ssub.s32 %s13, %s20
    %p22 = scmp.eq.s32.totalorder %s21, 0
    %s24 = sadd.s32 %s23, 1
    %s25 = scalar_select %p22, %s23, %s24
    %p28 = pneg %p22
    %p29 = scmp.eq.s32.totalorder %s13, 1
    %p30 = por %p28, %p29
    %p31 = scmp.ne.s32.totalorder %s23, %s26
    %p32 = scmp.eq.s32.totalorder %s13, 0
    %p33 = por %p31, %p32
    %p34 = scmp.ne.s32.totalorder %s23, %s26
    %p35 = scmp.eq.s32.totalorder %s18, 1
    %p36 = por %p34, %p35
    %p37 = scmp.ne.s32.totalorder %s26, %s27
    %p38 = scmp.eq.s32.totalorder %s18, 0
    %p39 = por %p37, %p38
    %p40 = scmp.ne.s32.totalorder %s26, %s27
    %p41 = scmp.eq.s32.totalorder %s19, 1
    %p42 = por %p40, %p41
    %p44 = scmp.ne.s32.totalorder %s27, %s43
    %p45 = scmp.eq.s32.totalorder %s19, 0
    %p46 = por %p44, %p45
    %s48 = sadd.s32 %s47, 1
    %p51 = scmp.eq.s32.totalorder %s13, 1
    %p52 = scmp.ne.s32.totalorder %s47, %s49
    %p53 = scmp.eq.s32.totalorder %s13, 0
    %p54 = por %p52, %p53
    %p55 = scmp.ne.s32.totalorder %s47, %s49
    %p56 = scmp.eq.s32.totalorder %s18, 1
    %p57 = por %p55, %p56
    %p58 = scmp.ne.s32.totalorder %s49, %s50
    %p59 = scmp.eq.s32.totalorder %s18, 0
    %p60 = por %p58, %p59
    %p61 = scmp.ne.s32.totalorder %s49, %s50
    %p62 = scmp.eq.s32.totalorder %s19, 1
    %p63 = por %p61, %p62
    %p65 = scmp.ne.s32.totalorder %s50, %s64
    %p66 = scmp.eq.s32.totalorder %s19, 0
    %p67 = por %p65, %p66
    %s69 = sadd.s32 %s68, 1
    %p72 = scmp.eq.s32.totalorder %s13, 1
    %p73 = scmp.ne.s32.totalorder %s68, %s70
    %p74 = scmp.eq.s32.totalorder %s13, 0
    %p75 = por %p73, %p74
    %p76 = scmp.ne.s32.totalorder %s68, %s70
    %p77 = scmp.eq.s32.totalorder %s18, 1
    %p78 = por %p76, %p77
    %p79 = scmp.ne.s32.totalorder %s70, %s71
    %p80 = scmp.eq.s32.totalorder %s18, 0
    %p81 = por %p79, %p80
    %p82 = scmp.ne.s32.totalorder %s70, %s71
    %p83 = scmp.eq.s32.totalorder %s19, 1
    %p84 = por %p82, %p83
    %p86 = scmp.ne.s32.totalorder %s71, %s85
    %p87 = scmp.eq.s32.totalorder %s19, 0
    %p88 = por %p86, %p87
    %s90 = sadd.s32 %s89, 1
    %p93 = scmp.eq.s32.totalorder %s13, 1
    %p94 = scmp.ne.s32.totalorder %s89, %s91
    %p95 = scmp.eq.s32.totalorder %s13, 0
    %p96 = por %p94, %p95
    %p97 = scmp.ne.s32.totalorder %s89, %s91
    %p98 = scmp.eq.s32.totalorder %s18, 1
    %p99 = por %p97, %p98
    %p100 = scmp.ne.s32.totalorder %s91, %s92
    %p101 = scmp.eq.s32.totalorder %s18, 0
    %p102 = por %p100, %p101
    %p103 = scmp.ne.s32.totalorder %s91, %s92
    %p104 = scmp.eq.s32.totalorder %s19, 1
    %p105 = por %p103, %p104
    %p107 = scmp.ne.s32.totalorder %s92, %s106
    %p108 = scmp.eq.s32.totalorder %s19, 0
    %p109 = por %p107, %p108
    %s111 = sadd.s32 %s110, 1
    %p114 = scmp.eq.s32.totalorder %s13, 1
    %p115 = scmp.ne.s32.totalorder %s110, %s112
    %p116 = scmp.eq.s32.totalorder %s13, 0
    %p117 = por %p115, %p116
    %p118 = scmp.ne.s32.totalorder %s110, %s112
    %p119 = scmp.eq.s32.totalorder %s18, 1
    %p120 = por %p118, %p119
    %p121 = scmp.ne.s32.totalorder %s112, %s113
    %p122 = scmp.eq.s32.totalorder %s18, 0
    %p123 = por %p121, %p122
    %p124 = scmp.ne.s32.totalorder %s112, %s113
    %p125 = scmp.eq.s32.totalorder %s19, 1
    %p126 = por %p124, %p125
    %p128 = scmp.ne.s32.totalorder %s113, %s127
    %p129 = scmp.eq.s32.totalorder %s19, 0
    %p130 = por %p128, %p129
    %s132 = sadd.s32 %s131, 1
    %p135 = scmp.eq.s32.totalorder %s13, 1
    %p136 = scmp.ne.s32.totalorder %s131, %s133
    %p137 = scmp.eq.s32.totalorder %s13, 0
    %p138 = por %p136, %p137
    %p139 = scmp.ne.s32.totalorder %s131, %s133
    %p140 = scmp.eq.s32.totalorder %s18, 1
    %p141 = por %p139, %p140
    %p142 = scmp.ne.s32.totalorder %s133, %s134
    %p143 = scmp.eq.s32.totalorder %s18, 0
    %p144 = por %p142, %p143
    %p145 = scmp.ne.s32.totalorder %s133, %s134
    %p146 = scmp.eq.s32.totalorder %s19, 1
    %p147 = por %p145, %p146
    %p149 = scmp.ne.s32.totalorder %s134, %s148
    %p150 = scmp.eq.s32.totalorder %s19, 0
    %p151 = por %p149, %p150
    %s153 = sadd.s32 %s152, 1
    %p156 = scmp.eq.s32.totalorder %s13, 1
    %p157 = scmp.ne.s32.totalorder %s152, %s154
    %p158 = scmp.eq.s32.totalorder %s13, 0
    %p159 = por %p157, %p158
    %p160 = scmp.ne.s32.totalorder %s152, %s154
    %p161 = scmp.eq.s32.totalorder %s18, 1
    %p162 = por %p160, %p161
    %p163 = scmp.ne.s32.totalorder %s154, %s155
    %p164 = scmp.eq.s32.totalorder %s18, 0
    %p165 = por %p163, %p164
    %p166 = scmp.ne.s32.totalorder %s154, %s155
    %p167 = scmp.eq.s32.totalorder %s19, 1
    %p168 = por %p166, %p167
    %p170 = scmp.ne.s32.totalorder %s155, %s169
    %p171 = scmp.eq.s32.totalorder %s19, 0
    %p172 = por %p170, %p171
    %s173 = ssub.s32 %s13, %s20
    %p174 = scmp.eq.s32.totalorder %s173, 0
    %s176 = sadd.s32 %s175, 1
    %s177 = scalar_select %p174, %s175, %s176
    %p180 = pneg %p174
    %p181 = scmp.eq.s32.totalorder %s13, 1
    %p182 = por %p180, %p181
    %p183 = scmp.ne.s32.totalorder %s175, %s178
    %p184 = scmp.eq.s32.totalorder %s13, 0
    %p185 = por %p183, %p184
    %p186 = scmp.ne.s32.totalorder %s175, %s178
    %p187 = scmp.eq.s32.totalorder %s18, 1
    %p188 = por %p186, %p187
    %p189 = scmp.ne.s32.totalorder %s178, %s179
    %p190 = scmp.eq.s32.totalorder %s18, 0
    %p191 = por %p189, %p190
    %p192 = scmp.ne.s32.totalorder %s178, %s179
    %p193 = scmp.eq.s32.totalorder %s19, 1
    %p194 = por %p192, %p193
    %p196 = scmp.ne.s32.totalorder %s179, %s195
    %p197 = scmp.eq.s32.totalorder %s19, 0
    %p198 = por %p196, %p197
    %p199 = scmp.le.s32.totalorder 1, %s13
    %p200 = scmp.lt.s32.totalorder %s13, 3
    %p201 = pnand %p199, %p200
    %p202 = pneg %p201
    // Predicated region
    $region9: #{tpu_custom_call.1} parent=5 // pred_check
      _
    $region10: #{tpu_custom_call.1} parent=5 // pred_check_branch
      %204 = sbr.rel (%p201) target = $region12
    $region11: #{tpu_custom_call.1} parent=5 // pred_region
      %s205 = ssub.s32 %s13, 1
      // Predicated region
      $region13: #{tpu_custom_call.1} parent=11 // pred_check
        %p206 = pneg %p60
      $region14: #{tpu_custom_call.1} parent=11 // pred_check_branch
        %208 = sbr.rel (%p206) target = $region16
      $region15: #{tpu_custom_call.1} parent=11 // pred_region
        _
      $region16: #{tpu_custom_call.1} parent=11 // pred_fallthru
        _
      // Predicated region
      $region17: #{tpu_custom_call.1} parent=11 // pred_check
        %p209 = pneg %p81
      $region18: #{tpu_custom_call.1} parent=11 // pred_check_branch
        %211 = sbr.rel (%p209) target = $region20
      $region19: #{tpu_custom_call.1} parent=11 // pred_region
        _
      $region20: #{tpu_custom_call.1} parent=11 // pred_fallthru
        _
      // Predicated region
      $region21: #{tpu_custom_call.1} parent=11 // pred_check
        %p212 = pneg %p102
      $region22: #{tpu_custom_call.1} parent=11 // pred_check_branch
        %214 = sbr.rel (%p212) target = $region24
      $region23: #{tpu_custom_call.1} parent=11 // pred_region
        _
      $region24: #{tpu_custom_call.1} parent=11 // pred_fallthru
        _
      // Predicated region
      $region25: #{tpu_custom_call.1} parent=11 // pred_check
        %p215 = pneg %p123
      $region26: #{tpu_custom_call.1} parent=11 // pred_check_branch
        %217 = sbr.rel (%p215) target = $region28
      $region27: #{tpu_custom_call.1} parent=11 // pred_region
        _
      $region28: #{tpu_custom_call.1} parent=11 // pred_fallthru
        _
      // Predicated region
      $region29: #{tpu_custom_call.1} parent=11 // pred_check
        %p218 = pneg %p144
      $region30: #{tpu_custom_call.1} parent=11 // pred_check_branch
        %220 = sbr.rel (%p218) target = $region32
      $region31: #{tpu_custom_call.1} parent=11 // pred_region
        _
      $region32: #{tpu_custom_call.1} parent=11 // pred_fallthru
        _
      // Predicated region
      $region33: #{tpu_custom_call.1} parent=11 // pred_check
        %p221 = pneg %p165
      $region34: #{tpu_custom_call.1} parent=11 // pred_check_branch
        %223 = sbr.rel (%p221) target = $region36
      $region35: #{tpu_custom_call.1} parent=11 // pred_region
        _
      $region36: #{tpu_custom_call.1} parent=11 // pred_fallthru
        _
    $region12: #{tpu_custom_call.1} parent=5 // pred_fallthru
      _
    %p224 = scmp.lt.s32.totalorder %s13, 2
    // Predicated region
    $region37: #{tpu_custom_call.1} parent=5 // pred_check
      %p225 = pneg %p224
    $region38: #{tpu_custom_call.1} parent=5 // pred_check_branch
      %227 = sbr.rel (%p225) target = $region40
    $region39: #{tpu_custom_call.1} parent=5 // pred_region
      // Predicated region
      $region41: #{tpu_custom_call.1} parent=39 // pred_check
        %p228 = pneg %p33
      $region42: #{tpu_custom_call.1} parent=39 // pred_check_branch
        %230 = sbr.rel (%p228) target = $region44
      $region43: #{tpu_custom_call.1} parent=39 // pred_region
        %p231 = scmp.lt.s32.totalorder %s13, 1
        %s232 = scalar_select %p231, %s13, 1
        %s233 = smul.addr %s232, 32
        %s234 = smul.addr %s233, 8
        %s235 = scalar_lea.vmem %s0, %s234
      $region44: #{tpu_custom_call.1} parent=39 // pred_fallthru
        _
    $region40: #{tpu_custom_call.1} parent=5 // pred_fallthru
      _
    %p236 = scmp.le.s32.totalorder 1, %s13
    %p237 = scmp.lt.s32.totalorder %s13, 3
    %p238 = pnand %p236, %p237
    %p239 = pneg %p238
    // Predicated region
    $region45: #{tpu_custom_call.1} parent=5 // pred_check
      _
    $region46: #{tpu_custom_call.1} parent=5 // pred_check_branch
      %241 = sbr.rel (%p238) target = $region48
    $region47: #{tpu_custom_call.1} parent=5 // pred_region
      %s242 = ssub.s32 %s13, 1
      %p243 = scmp.lt.s32.totalorder %s18, 1
      %s244 = scalar_select %p243, %s18, 1
      %s245 = smul.addr %s244, 32
      %s246 = smul.addr %s245, 8
      %s247 = scalar_lea.vmem %s0, %s246
      %p248 = pneg %p39
      %p249 = pneg %p36
      %p250 = pneg %p60
      %p251 = pneg %p57
      %p252 = pneg %p81
      %p253 = pneg %p78
      %p254 = pneg %p102
      %p255 = pneg %p99
      %p256 = pneg %p123
      %p257 = pneg %p120
      %p258 = pneg %p144
      %p259 = pneg %p141
      %p260 = pneg %p165
      %p261 = pneg %p162
      %p262 = pneg %p191
      %p263 = pneg %p188
      %p264 = scmp.lt.s32.totalorder %s18, 1
      %s265 = scalar_select %p264, %s18, 1
      %s266 = smul.addr %s265, 32
      %s267 = smul.addr %s266, 8
      %s268 = scalar_lea.vmem %s7, %s267
      %p269 = scmp.lt.s32.totalorder %s18, 1
      %s270 = scalar_select %p269, %s18, 1
      %s271 = smul.addr %s270, 32
      %s272 = smul.addr %s271, 8
      %s273 = scalar_lea.vmem %s0, %s272
      %p274 = scmp.lt.s32.totalorder %s18, 1
      %s275 = scalar_select %p274, %s18, 1
      %s276 = smul.addr %s275, 32
      %s277 = smul.addr %s276, 8
      %s278 = scalar_lea.vmem %s7, %s277
      %vm279 = vcmask 31744
      %280 = vst.msk [vmem:[#allocation2] sm:$0xff] %vm279, 0.0
      %281 = vst.msk [vmem:[#allocation2 + $0x8] sm:$0xff] %vm279, 0.0
      %vm282 = vcmask 25600
      %283 = vst.msk [vmem:[#allocation2 + $0x10] sm:$0x3] %vm282, 0.0
      %284 = vst.msk [vmem:[#allocation2 + $0x18] sm:$0xff] %vm279, 0.0
      %285 = vst.msk [vmem:[#allocation2 + $0x20] sm:$0xff] %vm279, 0.0
      %286 = vst.msk [vmem:[#allocation2 + $0x28] sm:$0x3] %vm282, 0.0
      %287 = vst.msk [vmem:[#allocation2 + $0x30] sm:$0xff] %vm279, 0.0
      %288 = vst.msk [vmem:[#allocation2 + $0x38] sm:$0xff] %vm279, 0.0
      %289 = vst.msk [vmem:[#allocation2 + $0x40] sm:$0x3] %vm282, 0.0
      %290 = vst.msk [vmem:[#allocation2 + $0x48] sm:$0xff] %vm279, 0.0
      %291 = vst.msk [vmem:[#allocation2 + $0x50] sm:$0xff] %vm279, 0.0
      %292 = vst.msk [vmem:[#allocation2 + $0x58] sm:$0x3] %vm282, 0.0
      %293 = vst.msk [vmem:[#allocation2 + $0x60] sm:$0xff] %vm279, 0.0
      %294 = vst.msk [vmem:[#allocation2 + $0x68] sm:$0xff] %vm279, 0.0
      %295 = vst.msk [vmem:[#allocation2 + $0x70] sm:$0x3] %vm282, 0.0
      %296 = vst.msk [vmem:[#allocation2 + $0x78] sm:$0xff] %vm279, 0.0
      %297 = vst.msk [vmem:[#allocation2 + $0x80] sm:$0xff] %vm279, 0.0
      %298 = vst.msk [vmem:[#allocation2 + $0x88] sm:$0x3] %vm282, 0.0
      %299 = vst.msk [vmem:[#allocation2 + $0x90] sm:$0xff] %vm279, 0.0
      %300 = vst.msk [vmem:[#allocation2 + $0x98] sm:$0xff] %vm279, 0.0
      %301 = vst.msk [vmem:[#allocation2 + $0xa0] sm:$0x3] %vm282, 0.0
      %302 = vst.msk [vmem:[#allocation2 + $0xa8] sm:$0xff] %vm279, 0.0
      %303 = vst.msk [vmem:[#allocation2 + $0xb0] sm:$0xff] %vm279, 0.0
      %304 = vst.msk [vmem:[#allocation2 + $0xb8] sm:$0x3] %vm282, 0.0
      %305 = vst.msk [vmem:[#allocation2 + $0xc0] sm:$0xff] %vm279, 0.0
      %306 = vst.msk [vmem:[#allocation2 + $0xc8] sm:$0xff] %vm279, 0.0
      %307 = vst.msk [vmem:[#allocation2 + $0xd0] sm:$0x3] %vm282, 0.0
      %308 = vst.msk [vmem:[#allocation2 + $0xd8] sm:$0xff] %vm279, 0.0
      %309 = vst.msk [vmem:[#allocation2 + $0xe0] sm:$0xff] %vm279, 0.0
      %310 = vst.msk [vmem:[#allocation2 + $0xe8] sm:$0x3] %vm282, 0.0
      %311 = vst.msk [vmem:[#allocation2 + $0xf0] sm:$0xff] %vm279, 0.0
      %312 = vst.msk [vmem:[#allocation2 + $0xf8] sm:$0xff] %vm279, 0.0
      %313 = vst.msk [vmem:[#allocation2 + $0x100] sm:$0x3] %vm282, 0.0
      %314 = vst.msk [vmem:[#allocation2 + $0x108] sm:$0xff] %vm279, 0.0
      %315 = vst.msk [vmem:[#allocation2 + $0x110] sm:$0xff] %vm279, 0.0
      %316 = vst.msk [vmem:[#allocation2 + $0x118] sm:$0x3] %vm282, 0.0
      %317 = vst.msk [vmem:[#allocation2 + $0x120] sm:$0xff] %vm279, 0.0
      %318 = vst.msk [vmem:[#allocation2 + $0x128] sm:$0xff] %vm279, 0.0
      %319 = vst.msk [vmem:[#allocation2 + $0x130] sm:$0x3] %vm282, 0.0
      %320 = vst.msk [vmem:[#allocation2 + $0x138] sm:$0xff] %vm279, 0.0
      %321 = vst.msk [vmem:[#allocation2 + $0x140] sm:$0xff] %vm279, 0.0
      %322 = vst.msk [vmem:[#allocation2 + $0x148] sm:$0x3] %vm282, 0.0
      %323 = vst.msk [vmem:[#allocation2 + $0x150] sm:$0xff] %vm279, 0.0
      %324 = vst.msk [vmem:[#allocation2 + $0x158] sm:$0xff] %vm279, 0.0
      %325 = vst.msk [vmem:[#allocation2 + $0x160] sm:$0x3] %vm282, 0.0
      %326 = vst.msk [vmem:[#allocation2 + $0x168] sm:$0xff] %vm279, 0.0
      %327 = vst.msk [vmem:[#allocation2 + $0x170] sm:$0xff] %vm279, 0.0
      %328 = vst.msk [vmem:[#allocation2 + $0x178] sm:$0x3] %vm282, 0.0
      %329 = vst.msk [vmem:[#allocation2 + $0x180] sm:$0xff] %vm279, 0.0
      %330 = vst.msk [vmem:[#allocation2 + $0x188] sm:$0xff] %vm279, 0.0
      %331 = vst.msk [vmem:[#allocation2 + $0x190] sm:$0x3] %vm282, 0.0
      %332 = vst.msk [vmem:[#allocation2 + $0x198] sm:$0xff] %vm279, 0.0
      %333 = vst.msk [vmem:[#allocation2 + $0x1a0] sm:$0xff] %vm279, 0.0
      %334 = vst.msk [vmem:[#allocation2 + $0x1a8] sm:$0x3] %vm282, 0.0
      %v335 = vld [vmem:[%s273] sm:$0xff]
      %v336 = vld [vmem:[%s273 + $0x8] sm:$0xff]
      %v337 = vld [vmem:[%s273 + $0x10] sm:$0xff]
      %v338 = vld [vmem:[%s273 + $0x18] sm:$0xff]
      %v339 = vld [vmem:[%s273 + $0x20] sm:$0xff]
      %v340 = vld [vmem:[%s273 + $0x28] sm:$0xff]
      %v341 = vld [vmem:[%s273 + $0x30] sm:$0xff]
      %v342 = vld [vmem:[%s273 + $0x38] sm:$0xff]
      %v343 = vld [vmem:[%s273 + $0x40] sm:$0xff]
      %v344 = vld [vmem:[%s273 + $0x48] sm:$0xff]
      %v345 = vld [vmem:[%s273 + $0x50] sm:$0xff]
      %v346 = vld [vmem:[%s273 + $0x58] sm:$0xff]
      %v347 = vld [vmem:[%s273 + $0x60] sm:$0xff]
      %v348 = vld [vmem:[%s273 + $0x68] sm:$0xff]
      %v349 = vld [vmem:[%s273 + $0x70] sm:$0xff]
      %v350 = vld [vmem:[%s273 + $0x78] sm:$0xff]
      %v351 = vld [vmem:[%s273 + $0x80] sm:$0xff]
      %v352 = vld [vmem:[%s273 + $0x88] sm:$0xff]
      %v353 = vld [vmem:[%s273 + $0x90] sm:$0xff]
      %v354 = vld [vmem:[%s273 + $0x98] sm:$0xff]
      %v355 = vld [vmem:[%s273 + $0xa0] sm:$0xff]
      %v356 = vld [vmem:[%s273 + $0xa8] sm:$0xff]
      %v357 = vld [vmem:[%s273 + $0xb0] sm:$0xff]
      %v358 = vld [vmem:[%s273 + $0xb8] sm:$0xff]
      %v359 = vld [vmem:[%s273 + $0xc0] sm:$0xff]
      %v360 = vld [vmem:[%s273 + $0xc8] sm:$0xff]
      %v361 = vld [vmem:[%s273 + $0xd0] sm:$0xff]
      %v362 = vld [vmem:[%s273 + $0xd8] sm:$0xff]
      %v363 = vld [vmem:[%s273 + $0xe0] sm:$0xff]
      %v364 = vld [vmem:[%s273 + $0xe8] sm:$0xff]
      %v365 = vld [vmem:[%s273 + $0xf0] sm:$0xff]
      %v366 = vld [vmem:[%s273 + $0xf8] sm:$0xff]
      %s367 = scalar_lea.vmem [#allocation2], 24
      %368 = vst.msk [vmem:[%s367 + $0x1] sm:$0xff] %vm279, %v335
      %369 = vst.msk [vmem:[%s367 + $0x9] sm:$0xff] %vm279, %v336
      %370 = vst.msk [vmem:[%s367 + $0x19] sm:$0xff] %vm279, %v337
      %371 = vst.msk [vmem:[%s367 + $0x21] sm:$0xff] %vm279, %v338
      %372 = vst.msk [vmem:[%s367 + $0x31] sm:$0xff] %vm279, %v339
      %373 = vst.msk [vmem:[%s367 + $0x39] sm:$0xff] %vm279, %v340
      %374 = vst.msk [vmem:[%s367 + $0x49] sm:$0xff] %vm279, %v341
      %375 = vst.msk [vmem:[%s367 + $0x51] sm:$0xff] %vm279, %v342
      %376 = vst.msk [vmem:[%s367 + $0x61] sm:$0xff] %vm279, %v343
      %377 = vst.msk [vmem:[%s367 + $0x69] sm:$0xff] %vm279, %v344
      %378 = vst.msk [vmem:[%s367 + $0x79] sm:$0xff] %vm279, %v345
      %379 = vst.msk [vmem:[%s367 + $0x81] sm:$0xff] %vm279, %v346
      %380 = vst.msk [vmem:[%s367 + $0x91] sm:$0xff] %vm279, %v347
      %381 = vst.msk [vmem:[%s367 + $0x99] sm:$0xff] %vm279, %v348
      %382 = vst.msk [vmem:[%s367 + $0xa9] sm:$0xff] %vm279, %v349
      %383 = vst.msk [vmem:[%s367 + $0xb1] sm:$0xff] %vm279, %v350
      %384 = vst.msk [vmem:[%s367 + $0xc1] sm:$0xff] %vm279, %v351
      %385 = vst.msk [vmem:[%s367 + $0xc9] sm:$0xff] %vm279, %v352
      %386 = vst.msk [vmem:[%s367 + $0xd9] sm:$0xff] %vm279, %v353
      %387 = vst.msk [vmem:[%s367 + $0xe1] sm:$0xff] %vm279, %v354
      %388 = vst.msk [vmem:[%s367 + $0xf1] sm:$0xff] %vm279, %v355
      %389 = vst.msk [vmem:[%s367 + $0xf9] sm:$0xff] %vm279, %v356
      %390 = vst.msk [vmem:[%s367 + $0x109] sm:$0xff] %vm279, %v357
      %391 = vst.msk [vmem:[%s367 + $0x111] sm:$0xff] %vm279, %v358
      %392 = vst.msk [vmem:[%s367 + $0x121] sm:$0xff] %vm279, %v359
      %393 = vst.msk [vmem:[%s367 + $0x129] sm:$0xff] %vm279, %v360
      %394 = vst.msk [vmem:[%s367 + $0x139] sm:$0xff] %vm279, %v361
      %395 = vst.msk [vmem:[%s367 + $0x141] sm:$0xff] %vm279, %v362
      %396 = vst.msk [vmem:[%s367 + $0x151] sm:$0xff] %vm279, %v363
      %397 = vst.msk [vmem:[%s367 + $0x159] sm:$0xff] %vm279, %v364
      %398 = vst.msk [vmem:[%s367 + $0x169] sm:$0xff] %vm279, %v365
      %399 = vst.msk [vmem:[%s367 + $0x171] sm:$0xff] %vm279, %v366
      %v400 = vld [vmem:[#allocation2] sm:$0xff]
      %v401 = vld [vmem:[#allocation2 + $0x8] sm:$0xff]
      %v402 = vld [vmem:[#allocation2 + $0x18] sm:$0xff]
      %v403 = vld [vmem:[#allocation2 + $0x20] sm:$0xff]
      %v404 = vld [vmem:[#allocation2 + $0x30] sm:$0xff]
      %v405 = vld [vmem:[#allocation2 + $0x38] sm:$0xff]
      %v406 = vld [vmem:[#allocation2 + $0x48] sm:$0xff]
      %v407 = vld [vmem:[#allocation2 + $0x50] sm:$0xff]
      %v408 = vld [vmem:[#allocation2 + $0x60] sm:$0xff]
      %v409 = vld [vmem:[#allocation2 + $0x68] sm:$0xff]
      %v410 = vld [vmem:[#allocation2 + $0x78] sm:$0xff]
      %v411 = vld [vmem:[#allocation2 + $0x80] sm:$0xff]
      %v412 = vld [vmem:[#allocation2 + $0x90] sm:$0xff]
      %v413 = vld [vmem:[#allocation2 + $0x98] sm:$0xff]
      %v414 = vld [vmem:[#allocation2 + $0xa8] sm:$0xff]
      %v415 = vld [vmem:[#allocation2 + $0xb0] sm:$0xff]
      %v416 = vld [vmem:[#allocation2 + $0xc0] sm:$0xff]
      %v417 = vld [vmem:[#allocation2 + $0xc8] sm:$0xff]
      %v418 = vld [vmem:[#allocation2 + $0xd8] sm:$0xff]
      %v419 = vld [vmem:[#allocation2 + $0xe0] sm:$0xff]
      %v420 = vld [vmem:[#allocation2 + $0xf0] sm:$0xff]
      %v421 = vld [vmem:[#allocation2 + $0xf8] sm:$0xff]
      %v422 = vld [vmem:[#allocation2 + $0x108] sm:$0xff]
      %v423 = vld [vmem:[#allocation2 + $0x110] sm:$0xff]
      %v424 = vld [vmem:[#allocation2 + $0x120] sm:$0xff]
      %v425 = vld [vmem:[#allocation2 + $0x128] sm:$0xff]
      %v426 = vld [vmem:[#allocation2 + $0x138] sm:$0xff]
      %v427 = vld [vmem:[#allocation2 + $0x140] sm:$0xff]
      %v428 = vld [vmem:[#allocation2 + $0x150] sm:$0xff]
      %v429 = vld [vmem:[#allocation2 + $0x158] sm:$0xff]
      %v430 = vld [vmem:[#allocation2 + $0x168] sm:$0xff]
      %v431 = vld [vmem:[#allocation2 + $0x170] sm:$0xff]
      %v432 = vld [vmem:[#allocation2 + $0x1] sm:$0xff]
      %v433 = vld [vmem:[#allocation2 + $0x9] sm:$0xff]
      %v434 = vld [vmem:[#allocation2 + $0x19] sm:$0xff]
      %v435 = vld [vmem:[#allocation2 + $0x21] sm:$0xff]
      %v436 = vld [vmem:[#allocation2 + $0x31] sm:$0xff]
      %v437 = vld [vmem:[#allocation2 + $0x39] sm:$0xff]
      %v438 = vld [vmem:[#allocation2 + $0x49] sm:$0xff]
      %v439 = vld [vmem:[#allocation2 + $0x51] sm:$0xff]
      %v440 = vld [vmem:[#allocation2 + $0x61] sm:$0xff]
      %v441 = vld [vmem:[#allocation2 + $0x69] sm:$0xff]
      %v442 = vld [vmem:[#allocation2 + $0x79] sm:$0xff]
      %v443 = vld [vmem:[#allocation2 + $0x81] sm:$0xff]
      %v444 = vld [vmem:[#allocation2 + $0x91] sm:$0xff]
      %v445 = vld [vmem:[#allocation2 + $0x99] sm:$0xff]
      %v446 = vld [vmem:[#allocation2 + $0xa9] sm:$0xff]
      %v447 = vld [vmem:[#allocation2 + $0xb1] sm:$0xff]
      %v448 = vld [vmem:[#allocation2 + $0xc1] sm:$0xff]
      %v449 = vld [vmem:[#allocation2 + $0xc9] sm:$0xff]
      %v450 = vld [vmem:[#allocation2 + $0xd9] sm:$0xff]
      %v451 = vld [vmem:[#allocation2 + $0xe1] sm:$0xff]
      %v452 = vld [vmem:[#allocation2 + $0xf1] sm:$0xff]
      %v453 = vld [vmem:[#allocation2 + $0xf9] sm:$0xff]
      %v454 = vld [vmem:[#allocation2 + $0x109] sm:$0xff]
      %v455 = vld [vmem:[#allocation2 + $0x111] sm:$0xff]
      %v456 = vld [vmem:[#allocation2 + $0x121] sm:$0xff]
      %v457 = vld [vmem:[#allocation2 + $0x129] sm:$0xff]
      %v458 = vld [vmem:[#allocation2 + $0x139] sm:$0xff]
      %v459 = vld [vmem:[#allocation2 + $0x141] sm:$0xff]
      %v460 = vld [vmem:[#allocation2 + $0x151] sm:$0xff]
      %v461 = vld [vmem:[#allocation2 + $0x159] sm:$0xff]
      %v462 = vld [vmem:[#allocation2 + $0x169] sm:$0xff]
      %v463 = vld [vmem:[#allocation2 + $0x171] sm:$0xff]
      %v464 = vld [vmem:[#allocation2 + $0x2] sm:$0xff]
      %v465 = vld [vmem:[#allocation2 + $0xa] sm:$0xff]
      %v466 = vld [vmem:[#allocation2 + $0x1a] sm:$0xff]
      %v467 = vld [vmem:[#allocation2 + $0x22] sm:$0xff]
      %v468 = vld [vmem:[#allocation2 + $0x32] sm:$0xff]
      %v469 = vld [vmem:[#allocation2 + $0x3a] sm:$0xff]
      %v470 = vld [vmem:[#allocation2 + $0x4a] sm:$0xff]
      %v471 = vld [vmem:[#allocation2 + $0x52] sm:$0xff]
      %v472 = vld [vmem:[#allocation2 + $0x62] sm:$0xff]
      %v473 = vld [vmem:[#allocation2 + $0x6a] sm:$0xff]
      %v474 = vld [vmem:[#allocation2 + $0x7a] sm:$0xff]
      %v475 = vld [vmem:[#allocation2 + $0x82] sm:$0xff]
      %v476 = vld [vmem:[#allocation2 + $0x92] sm:$0xff]
      %v477 = vld [vmem:[#allocation2 + $0x9a] sm:$0xff]
      %v478 = vld [vmem:[#allocation2 + $0xaa] sm:$0xff]
      %v479 = vld [vmem:[#allocation2 + $0xb2] sm:$0xff]
      %v480 = vld [vmem:[#allocation2 + $0xc2] sm:$0xff]
      %v481 = vld [vmem:[#allocation2 + $0xca] sm:$0xff]
      %v482 = vld [vmem:[#allocation2 + $0xda] sm:$0xff]
      %v483 = vld [vmem:[#allocation2 + $0xe2] sm:$0xff]
      %v484 = vld [vmem:[#allocation2 + $0xf2] sm:$0xff]
      %v485 = vld [vmem:[#allocation2 + $0xfa] sm:$0xff]
      %v486 = vld [vmem:[#allocation2 + $0x10a] sm:$0xff]
      %v487 = vld [vmem:[#allocation2 + $0x112] sm:$0xff]
      %v488 = vld [vmem:[#allocation2 + $0x122] sm:$0xff]
      %v489 = vld [vmem:[#allocation2 + $0x12a] sm:$0xff]
      %v490 = vld [vmem:[#allocation2 + $0x13a] sm:$0xff]
      %v491 = vld [vmem:[#allocation2 + $0x142] sm:$0xff]
      %v492 = vld [vmem:[#allocation2 + $0x152] sm:$0xff]
      %v493 = vld [vmem:[#allocation2 + $0x15a] sm:$0xff]
      %v494 = vld [vmem:[#allocation2 + $0x16a] sm:$0xff]
      %v495 = vld [vmem:[#allocation2 + $0x172] sm:$0xff]
      %v496 = vld [vmem:[%s367] sm:$0xff]
      %v497 = vld [vmem:[%s367 + $0x8] sm:$0xff]
      %v498 = vld [vmem:[%s367 + $0x18] sm:$0xff]
      %v499 = vld [vmem:[%s367 + $0x20] sm:$0xff]
      %v500 = vld [vmem:[%s367 + $0x30] sm:$0xff]
      %v501 = vld [vmem:[%s367 + $0x38] sm:$0xff]
      %v502 = vld [vmem:[%s367 + $0x48] sm:$0xff]
      %v503 = vld [vmem:[%s367 + $0x50] sm:$0xff]
      %v504 = vld [vmem:[%s367 + $0x60] sm:$0xff]
      %v505 = vld [vmem:[%s367 + $0x68] sm:$0xff]
      %v506 = vld [vmem:[%s367 + $0x78] sm:$0xff]
      %v507 = vld [vmem:[%s367 + $0x80] sm:$0xff]
      %v508 = vld [vmem:[%s367 + $0x90] sm:$0xff]
      %v509 = vld [vmem:[%s367 + $0x98] sm:$0xff]
      %v510 = vld [vmem:[%s367 + $0xa8] sm:$0xff]
      %v511 = vld [vmem:[%s367 + $0xb0] sm:$0xff]
      %v512 = vld [vmem:[%s367 + $0xc0] sm:$0xff]
      %v513 = vld [vmem:[%s367 + $0xc8] sm:$0xff]
      %v514 = vld [vmem:[%s367 + $0xd8] sm:$0xff]
      %v515 = vld [vmem:[%s367 + $0xe0] sm:$0xff]
      %v516 = vld [vmem:[%s367 + $0xf0] sm:$0xff]
      %v517 = vld [vmem:[%s367 + $0xf8] sm:$0xff]
      %v518 = vld [vmem:[%s367 + $0x108] sm:$0xff]
      %v519 = vld [vmem:[%s367 + $0x110] sm:$0xff]
      %v520 = vld [vmem:[%s367 + $0x120] sm:$0xff]
      %v521 = vld [vmem:[%s367 + $0x128] sm:$0xff]
      %v522 = vld [vmem:[%s367 + $0x138] sm:$0xff]
      %v523 = vld [vmem:[%s367 + $0x140] sm:$0xff]
      %v524 = vld [vmem:[%s367 + $0x150] sm:$0xff]
      %v525 = vld [vmem:[%s367 + $0x158] sm:$0xff]
      %v526 = vld [vmem:[%s367 + $0x168] sm:$0xff]
      %v527 = vld [vmem:[%s367 + $0x170] sm:$0xff]
      %v528 = vld [vmem:[%s367 + $0x1] sm:$0xff]
      %v529 = vld [vmem:[%s367 + $0x9] sm:$0xff]
      %v530 = vld [vmem:[%s367 + $0x19] sm:$0xff]
      %v531 = vld [vmem:[%s367 + $0x21] sm:$0xff]
      %v532 = vld [vmem:[%s367 + $0x31] sm:$0xff]
      %v533 = vld [vmem:[%s367 + $0x39] sm:$0xff]
      %v534 = vld [vmem:[%s367 + $0x49] sm:$0xff]
      %v535 = vld [vmem:[%s367 + $0x51] sm:$0xff]
      %v536 = vld [vmem:[%s367 + $0x61] sm:$0xff]
      %v537 = vld [vmem:[%s367 + $0x69] sm:$0xff]
      %v538 = vld [vmem:[%s367 + $0x79] sm:$0xff]
      %v539 = vld [vmem:[%s367 + $0x81] sm:$0xff]
      %v540 = vld [vmem:[%s367 + $0x91] sm:$0xff]
      %v541 = vld [vmem:[%s367 + $0x99] sm:$0xff]
      %v542 = vld [vmem:[%s367 + $0xa9] sm:$0xff]
      %v543 = vld [vmem:[%s367 + $0xb1] sm:$0xff]
      %v544 = vld [vmem:[%s367 + $0xc1] sm:$0xff]
      %v545 = vld [vmem:[%s367 + $0xc9] sm:$0xff]
      %v546 = vld [vmem:[%s367 + $0xd9] sm:$0xff]
      %v547 = vld [vmem:[%s367 + $0xe1] sm:$0xff]
      %v548 = vld [vmem:[%s367 + $0xf1] sm:$0xff]
      %v549 = vld [vmem:[%s367 + $0xf9] sm:$0xff]
      %v550 = vld [vmem:[%s367 + $0x109] sm:$0xff]
      %v551 = vld [vmem:[%s367 + $0x111] sm:$0xff]
      %v552 = vld [vmem:[%s367 + $0x121] sm:$0xff]
      %v553 = vld [vmem:[%s367 + $0x129] sm:$0xff]
      %v554 = vld [vmem:[%s367 + $0x139] sm:$0xff]
      %v555 = vld [vmem:[%s367 + $0x141] sm:$0xff]
      %v556 = vld [vmem:[%s367 + $0x151] sm:$0xff]
      %v557 = vld [vmem:[%s367 + $0x159] sm:$0xff]
      %v558 = vld [vmem:[%s367 + $0x169] sm:$0xff]
      %v559 = vld [vmem:[%s367 + $0x171] sm:$0xff]
      %v560 = vld [vmem:[%s367 + $0x2] sm:$0xff]
      %v561 = vld [vmem:[%s367 + $0xa] sm:$0xff]
      %v562 = vld [vmem:[%s367 + $0x1a] sm:$0xff]
      %v563 = vld [vmem:[%s367 + $0x22] sm:$0xff]
      %v564 = vld [vmem:[%s367 + $0x32] sm:$0xff]
      %v565 = vld [vmem:[%s367 + $0x3a] sm:$0xff]
      %v566 = vld [vmem:[%s367 + $0x4a] sm:$0xff]
      %v567 = vld [vmem:[%s367 + $0x52] sm:$0xff]
      %v568 = vld [vmem:[%s367 + $0x62] sm:$0xff]
      %v569 = vld [vmem:[%s367 + $0x6a] sm:$0xff]
      %v570 = vld [vmem:[%s367 + $0x7a] sm:$0xff]
      %v571 = vld [vmem:[%s367 + $0x82] sm:$0xff]
      %v572 = vld [vmem:[%s367 + $0x92] sm:$0xff]
      %v573 = vld [vmem:[%s367 + $0x9a] sm:$0xff]
      %v574 = vld [vmem:[%s367 + $0xaa] sm:$0xff]
      %v575 = vld [vmem:[%s367 + $0xb2] sm:$0xff]
      %v576 = vld [vmem:[%s367 + $0xc2] sm:$0xff]
      %v577 = vld [vmem:[%s367 + $0xca] sm:$0xff]
      %v578 = vld [vmem:[%s367 + $0xda] sm:$0xff]
      %v579 = vld [vmem:[%s367 + $0xe2] sm:$0xff]
      %v580 = vld [vmem:[%s367 + $0xf2] sm:$0xff]
      %v581 = vld [vmem:[%s367 + $0xfa] sm:$0xff]
      %v582 = vld [vmem:[%s367 + $0x10a] sm:$0xff]
      %v583 = vld [vmem:[%s367 + $0x112] sm:$0xff]
      %v584 = vld [vmem:[%s367 + $0x122] sm:$0xff]
      %v585 = vld [vmem:[%s367 + $0x12a] sm:$0xff]
      %v586 = vld [vmem:[%s367 + $0x13a] sm:$0xff]
      %v587 = vld [vmem:[%s367 + $0x142] sm:$0xff]
      %v588 = vld [vmem:[%s367 + $0x152] sm:$0xff]
      %v589 = vld [vmem:[%s367 + $0x15a] sm:$0xff]
      %v590 = vld [vmem:[%s367 + $0x16a] sm:$0xff]
      %v591 = vld [vmem:[%s367 + $0x172] sm:$0xff]
      %s592 = scalar_lea.vmem [#allocation2], 48
      %v593 = vld [vmem:[%s592] sm:$0xff]
      %v594 = vld [vmem:[%s592 + $0x8] sm:$0xff]
      %v595 = vld [vmem:[%s592 + $0x18] sm:$0xff]
      %v596 = vld [vmem:[%s592 + $0x20] sm:$0xff]
      %v597 = vld [vmem:[%s592 + $0x30] sm:$0xff]
      %v598 = vld [vmem:[%s592 + $0x38] sm:$0xff]
      %v599 = vld [vmem:[%s592 + $0x48] sm:$0xff]
      %v600 = vld [vmem:[%s592 + $0x50] sm:$0xff]
      %v601 = vld [vmem:[%s592 + $0x60] sm:$0xff]
      %v602 = vld [vmem:[%s592 + $0x68] sm:$0xff]
      %v603 = vld [vmem:[%s592 + $0x78] sm:$0xff]
      %v604 = vld [vmem:[%s592 + $0x80] sm:$0xff]
      %v605 = vld [vmem:[%s592 + $0x90] sm:$0xff]
      %v606 = vld [vmem:[%s592 + $0x98] sm:$0xff]
      %v607 = vld [vmem:[%s592 + $0xa8] sm:$0xff]
      %v608 = vld [vmem:[%s592 + $0xb0] sm:$0xff]
      %v609 = vld [vmem:[%s592 + $0xc0] sm:$0xff]
      %v610 = vld [vmem:[%s592 + $0xc8] sm:$0xff]
      %v611 = vld [vmem:[%s592 + $0xd8] sm:$0xff]
      %v612 = vld [vmem:[%s592 + $0xe0] sm:$0xff]
      %v613 = vld [vmem:[%s592 + $0xf0] sm:$0xff]
      %v614 = vld [vmem:[%s592 + $0xf8] sm:$0xff]
      %v615 = vld [vmem:[%s592 + $0x108] sm:$0xff]
      %v616 = vld [vmem:[%s592 + $0x110] sm:$0xff]
      %v617 = vld [vmem:[%s592 + $0x120] sm:$0xff]
      %v618 = vld [vmem:[%s592 + $0x128] sm:$0xff]
      %v619 = vld [vmem:[%s592 + $0x138] sm:$0xff]
      %v620 = vld [vmem:[%s592 + $0x140] sm:$0xff]
      %v621 = vld [vmem:[%s592 + $0x150] sm:$0xff]
      %v622 = vld [vmem:[%s592 + $0x158] sm:$0xff]
      %v623 = vld [vmem:[%s592 + $0x168] sm:$0xff]
      %v624 = vld [vmem:[%s592 + $0x170] sm:$0xff]
      %v625 = vld [vmem:[%s592 + $0x1] sm:$0xff]
      %v626 = vld [vmem:[%s592 + $0x9] sm:$0xff]
      %v627 = vld [vmem:[%s592 + $0x19] sm:$0xff]
      %v628 = vld [vmem:[%s592 + $0x21] sm:$0xff]
      %v629 = vld [vmem:[%s592 + $0x31] sm:$0xff]
      %v630 = vld [vmem:[%s592 + $0x39] sm:$0xff]
      %v631 = vld [vmem:[%s592 + $0x49] sm:$0xff]
      %v632 = vld [vmem:[%s592 + $0x51] sm:$0xff]
      %v633 = vld [vmem:[%s592 + $0x61] sm:$0xff]
      %v634 = vld [vmem:[%s592 + $0x69] sm:$0xff]
      %v635 = vld [vmem:[%s592 + $0x79] sm:$0xff]
      %v636 = vld [vmem:[%s592 + $0x81] sm:$0xff]
      %v637 = vld [vmem:[%s592 + $0x91] sm:$0xff]
      %v638 = vld [vmem:[%s592 + $0x99] sm:$0xff]
      %v639 = vld [vmem:[%s592 + $0xa9] sm:$0xff]
      %v640 = vld [vmem:[%s592 + $0xb1] sm:$0xff]
      %v641 = vld [vmem:[%s592 + $0xc1] sm:$0xff]
      %v642 = vld [vmem:[%s592 + $0xc9] sm:$0xff]
      %v643 = vld [vmem:[%s592 + $0xd9] sm:$0xff]
      %v644 = vld [vmem:[%s592 + $0xe1] sm:$0xff]
      %v645 = vld [vmem:[%s592 + $0xf1] sm:$0xff]
      %v646 = vld [vmem:[%s592 + $0xf9] sm:$0xff]
      %v647 = vld [vmem:[%s592 + $0x109] sm:$0xff]
      %v648 = vld [vmem:[%s592 + $0x111] sm:$0xff]
      %v649 = vld [vmem:[%s592 + $0x121] sm:$0xff]
      %v650 = vld [vmem:[%s592 + $0x129] sm:$0xff]
      %v651 = vld [vmem:[%s592 + $0x139] sm:$0xff]
      %v652 = vld [vmem:[%s592 + $0x141] sm:$0xff]
      %v653 = vld [vmem:[%s592 + $0x151] sm:$0xff]
      %v654 = vld [vmem:[%s592 + $0x159] sm:$0xff]
      %v655 = vld [vmem:[%s592 + $0x169] sm:$0xff]
      %v656 = vld [vmem:[%s592 + $0x171] sm:$0xff]
      %v657 = vld [vmem:[%s592 + $0x2] sm:$0xff]
      %v658 = vld [vmem:[%s592 + $0xa] sm:$0xff]
      %v659 = vld [vmem:[%s592 + $0x1a] sm:$0xff]
      %v660 = vld [vmem:[%s592 + $0x22] sm:$0xff]
      %v661 = vld [vmem:[%s592 + $0x32] sm:$0xff]
      %v662 = vld [vmem:[%s592 + $0x3a] sm:$0xff]
      %v663 = vld [vmem:[%s592 + $0x4a] sm:$0xff]
      %v664 = vld [vmem:[%s592 + $0x52] sm:$0xff]
      %v665 = vld [vmem:[%s592 + $0x62] sm:$0xff]
      %v666 = vld [vmem:[%s592 + $0x6a] sm:$0xff]
      %v667 = vld [vmem:[%s592 + $0x7a] sm:$0xff]
      %v668 = vld [vmem:[%s592 + $0x82] sm:$0xff]
      %v669 = vld [vmem:[%s592 + $0x92] sm:$0xff]
      %v670 = vld [vmem:[%s592 + $0x9a] sm:$0xff]
      %v671 = vld [vmem:[%s592 + $0xaa] sm:$0xff]
      %v672 = vld [vmem:[%s592 + $0xb2] sm:$0xff]
      %v673 = vld [vmem:[%s592 + $0xc2] sm:$0xff]
      %v674 = vld [vmem:[%s592 + $0xca] sm:$0xff]
      %v675 = vld [vmem:[%s592 + $0xda] sm:$0xff]
      %v676 = vld [vmem:[%s592 + $0xe2] sm:$0xff]
      %v677 = vld [vmem:[%s592 + $0xf2] sm:$0xff]
      %v678 = vld [vmem:[%s592 + $0xfa] sm:$0xff]
      %v679 = vld [vmem:[%s592 + $0x10a] sm:$0xff]
      %v680 = vld [vmem:[%s592 + $0x112] sm:$0xff]
      %v681 = vld [vmem:[%s592 + $0x122] sm:$0xff]
      %v682 = vld [vmem:[%s592 + $0x12a] sm:$0xff]
      %v683 = vld [vmem:[%s592 + $0x13a] sm:$0xff]
      %v684 = vld [vmem:[%s592 + $0x142] sm:$0xff]
      %v685 = vld [vmem:[%s592 + $0x152] sm:$0xff]
      %v686 = vld [vmem:[%s592 + $0x15a] sm:$0xff]
      %v687 = vld [vmem:[%s592 + $0x16a] sm:$0xff]
      %v688 = vld [vmem:[%s592 + $0x172] sm:$0xff]
      %721 = vrot.lane.b32.xlu0 %v432, 4
      %v722 = vpop.permute.xlu0 %721
      %723 = vrot.lane.b32.xlu0 %v433, 4
      %v724 = vpop.permute.xlu0 %723
      %725 = vrot.lane.b32.xlu0 %v434, 4
      %v726 = vpop.permute.xlu0 %725
      %727 = vrot.lane.b32.xlu0 %v435, 4
      %v728 = vpop.permute.xlu0 %727
      %729 = vrot.lane.b32.xlu0 %v436, 4
      %v730 = vpop.permute.xlu0 %729
      %731 = vrot.lane.b32.xlu0 %v437, 4
      %v732 = vpop.permute.xlu0 %731
      %733 = vrot.lane.b32.xlu0 %v438, 4
      %v734 = vpop.permute.xlu0 %733
      %735 = vrot.lane.b32.xlu0 %v439, 4
      %v736 = vpop.permute.xlu0 %735
      %737 = vrot.lane.b32.xlu0 %v440, 4
      %v738 = vpop.permute.xlu0 %737
      %739 = vrot.lane.b32.xlu0 %v441, 4
      %v740 = vpop.permute.xlu0 %739
      %741 = vrot.lane.b32.xlu0 %v442, 4
      %v742 = vpop.permute.xlu0 %741
      %743 = vrot.lane.b32.xlu0 %v443, 4
      %v744 = vpop.permute.xlu0 %743
      %745 = vrot.lane.b32.xlu0 %v444, 4
      %v746 = vpop.permute.xlu0 %745
      %747 = vrot.lane.b32.xlu0 %v445, 4
      %v748 = vpop.permute.xlu0 %747
      %749 = vrot.lane.b32.xlu0 %v446, 4
      %v750 = vpop.permute.xlu0 %749
      %751 = vrot.lane.b32.xlu0 %v447, 4
      %v752 = vpop.permute.xlu0 %751
      %753 = vrot.lane.b32.xlu0 %v448, 4
      %v754 = vpop.permute.xlu0 %753
      %755 = vrot.lane.b32.xlu0 %v449, 4
      %v756 = vpop.permute.xlu0 %755
      %757 = vrot.lane.b32.xlu0 %v450, 4
      %v758 = vpop.permute.xlu0 %757
      %759 = vrot.lane.b32.xlu0 %v451, 4
      %v760 = vpop.permute.xlu0 %759
      %761 = vrot.lane.b32.xlu0 %v452, 4
      %v762 = vpop.permute.xlu0 %761
      %763 = vrot.lane.b32.xlu0 %v453, 4
      %v764 = vpop.permute.xlu0 %763
      %765 = vrot.lane.b32.xlu0 %v454, 4
      %v766 = vpop.permute.xlu0 %765
      %767 = vrot.lane.b32.xlu0 %v455, 4
      %v768 = vpop.permute.xlu0 %767
      %769 = vrot.lane.b32.xlu0 %v456, 4
      %v770 = vpop.permute.xlu0 %769
      %771 = vrot.lane.b32.xlu0 %v457, 4
      %v772 = vpop.permute.xlu0 %771
      %773 = vrot.lane.b32.xlu0 %v458, 4
      %v774 = vpop.permute.xlu0 %773
      %775 = vrot.lane.b32.xlu0 %v459, 4
      %v776 = vpop.permute.xlu0 %775
      %777 = vrot.lane.b32.xlu0 %v460, 4
      %v778 = vpop.permute.xlu0 %777
      %779 = vrot.lane.b32.xlu0 %v461, 4
      %v780 = vpop.permute.xlu0 %779
      %781 = vrot.lane.b32.xlu0 %v462, 4
      %v782 = vpop.permute.xlu0 %781
      %783 = vrot.lane.b32.xlu0 %v463, 4
      %v784 = vpop.permute.xlu0 %783
      %849 = vrot.lane.b32.xlu0 %v464, 8
      %v850 = vpop.permute.xlu0 %849
      %851 = vrot.lane.b32.xlu0 %v465, 8
      %v852 = vpop.permute.xlu0 %851
      %853 = vrot.lane.b32.xlu0 %v466, 8
      %v854 = vpop.permute.xlu0 %853
      %855 = vrot.lane.b32.xlu0 %v467, 8
      %v856 = vpop.permute.xlu0 %855
      %857 = vrot.lane.b32.xlu0 %v468, 8
      %v858 = vpop.permute.xlu0 %857
      %859 = vrot.lane.b32.xlu0 %v469, 8
      %v860 = vpop.permute.xlu0 %859
      %861 = vrot.lane.b32.xlu0 %v470, 8
      %v862 = vpop.permute.xlu0 %861
      %863 = vrot.lane.b32.xlu0 %v471, 8
      %v864 = vpop.permute.xlu0 %863
      %865 = vrot.lane.b32.xlu0 %v472, 8
      %v866 = vpop.permute.xlu0 %865
      %867 = vrot.lane.b32.xlu0 %v473, 8
      %v868 = vpop.permute.xlu0 %867
      %869 = vrot.lane.b32.xlu0 %v474, 8
      %v870 = vpop.permute.xlu0 %869
      %871 = vrot.lane.b32.xlu0 %v475, 8
      %v872 = vpop.permute.xlu0 %871
      %873 = vrot.lane.b32.xlu0 %v476, 8
      %v874 = vpop.permute.xlu0 %873
      %875 = vrot.lane.b32.xlu0 %v477, 8
      %v876 = vpop.permute.xlu0 %875
      %877 = vrot.lane.b32.xlu0 %v478, 8
      %v878 = vpop.permute.xlu0 %877
      %879 = vrot.lane.b32.xlu0 %v479, 8
      %v880 = vpop.permute.xlu0 %879
      %881 = vrot.lane.b32.xlu0 %v480, 8
      %v882 = vpop.permute.xlu0 %881
      %883 = vrot.lane.b32.xlu0 %v481, 8
      %v884 = vpop.permute.xlu0 %883
      %885 = vrot.lane.b32.xlu0 %v482, 8
      %v886 = vpop.permute.xlu0 %885
      %887 = vrot.lane.b32.xlu0 %v483, 8
      %v888 = vpop.permute.xlu0 %887
      %889 = vrot.lane.b32.xlu0 %v484, 8
      %v890 = vpop.permute.xlu0 %889
      %891 = vrot.lane.b32.xlu0 %v485, 8
      %v892 = vpop.permute.xlu0 %891
      %893 = vrot.lane.b32.xlu0 %v486, 8
      %v894 = vpop.permute.xlu0 %893
      %895 = vrot.lane.b32.xlu0 %v487, 8
      %v896 = vpop.permute.xlu0 %895
      %897 = vrot.lane.b32.xlu0 %v488, 8
      %v898 = vpop.permute.xlu0 %897
      %899 = vrot.lane.b32.xlu0 %v489, 8
      %v900 = vpop.permute.xlu0 %899
      %901 = vrot.lane.b32.xlu0 %v490, 8
      %v902 = vpop.permute.xlu0 %901
      %903 = vrot.lane.b32.xlu0 %v491, 8
      %v904 = vpop.permute.xlu0 %903
      %905 = vrot.lane.b32.xlu0 %v492, 8
      %v906 = vpop.permute.xlu0 %905
      %907 = vrot.lane.b32.xlu0 %v493, 8
      %v908 = vpop.permute.xlu0 %907
      %909 = vrot.lane.b32.xlu0 %v494, 8
      %v910 = vpop.permute.xlu0 %909
      %911 = vrot.lane.b32.xlu0 %v495, 8
      %v912 = vpop.permute.xlu0 %911
      %977 = vrot.lane.b32.xlu0 %v496, 12
      %v978 = vpop.permute.xlu0 %977
      %979 = vrot.lane.b32.xlu0 %v497, 12
      %v980 = vpop.permute.xlu0 %979
      %981 = vrot.lane.b32.xlu0 %v498, 12
      %v982 = vpop.permute.xlu0 %981
      %983 = vrot.lane.b32.xlu0 %v499, 12
      %v984 = vpop.permute.xlu0 %983
      %985 = vrot.lane.b32.xlu0 %v500, 12
      %v986 = vpop.permute.xlu0 %985
      %987 = vrot.lane.b32.xlu0 %v501, 12
      %v988 = vpop.permute.xlu0 %987
      %989 = vrot.lane.b32.xlu0 %v502, 12
      %v990 = vpop.permute.xlu0 %989
      %991 = vrot.lane.b32.xlu0 %v503, 12
      %v992 = vpop.permute.xlu0 %991
      %993 = vrot.lane.b32.xlu0 %v504, 12
      %v994 = vpop.permute.xlu0 %993
      %995 = vrot.lane.b32.xlu0 %v505, 12
      %v996 = vpop.permute.xlu0 %995
      %997 = vrot.lane.b32.xlu0 %v506, 12
      %v998 = vpop.permute.xlu0 %997
      %999 = vrot.lane.b32.xlu0 %v507, 12
      %v1000 = vpop.permute.xlu0 %999
      %1001 = vrot.lane.b32.xlu0 %v508, 12
      %v1002 = vpop.permute.xlu0 %1001
      %1003 = vrot.lane.b32.xlu0 %v509, 12
      %v1004 = vpop.permute.xlu0 %1003
      %1005 = vrot.lane.b32.xlu0 %v510, 12
      %v1006 = vpop.permute.xlu0 %1005
      %1007 = vrot.lane.b32.xlu0 %v511, 12
      %v1008 = vpop.permute.xlu0 %1007
      %1009 = vrot.lane.b32.xlu0 %v512, 12
      %v1010 = vpop.permute.xlu0 %1009
      %1011 = vrot.lane.b32.xlu0 %v513, 12
      %v1012 = vpop.permute.xlu0 %1011
      %1013 = vrot.lane.b32.xlu0 %v514, 12
      %v1014 = vpop.permute.xlu0 %1013
      %1015 = vrot.lane.b32.xlu0 %v515, 12
      %v1016 = vpop.permute.xlu0 %1015
      %1017 = vrot.lane.b32.xlu0 %v516, 12
      %v1018 = vpop.permute.xlu0 %1017
      %1019 = vrot.lane.b32.xlu0 %v517, 12
      %v1020 = vpop.permute.xlu0 %1019
      %1021 = vrot.lane.b32.xlu0 %v518, 12
      %v1022 = vpop.permute.xlu0 %1021
      %1023 = vrot.lane.b32.xlu0 %v519, 12
      %v1024 = vpop.permute.xlu0 %1023
      %1025 = vrot.lane.b32.xlu0 %v520, 12
      %v1026 = vpop.permute.xlu0 %1025
      %1027 = vrot.lane.b32.xlu0 %v521, 12
      %v1028 = vpop.permute.xlu0 %1027
      %1029 = vrot.lane.b32.xlu0 %v522, 12
      %v1030 = vpop.permute.xlu0 %1029
      %1031 = vrot.lane.b32.xlu0 %v523, 12
      %v1032 = vpop.permute.xlu0 %1031
      %1033 = vrot.lane.b32.xlu0 %v524, 12
      %v1034 = vpop.permute.xlu0 %1033
      %1035 = vrot.lane.b32.xlu0 %v525, 12
      %v1036 = vpop.permute.xlu0 %1035
      %1037 = vrot.lane.b32.xlu0 %v526, 12
      %v1038 = vpop.permute.xlu0 %1037
      %1039 = vrot.lane.b32.xlu0 %v527, 12
      %v1040 = vpop.permute.xlu0 %1039
      %1105 = vrot.lane.b32.xlu0 %v528, 16
      %v1106 = vpop.permute.xlu0 %1105
      %1107 = vrot.lane.b32.xlu0 %v529, 16
      %v1108 = vpop.permute.xlu0 %1107
      %1109 = vrot.lane.b32.xlu0 %v530, 16
      %v1110 = vpop.permute.xlu0 %1109
      %1111 = vrot.lane.b32.xlu0 %v531, 16
      %v1112 = vpop.permute.xlu0 %1111
      %1113 = vrot.lane.b32.xlu0 %v532, 16
      %v1114 = vpop.permute.xlu0 %1113
      %1115 = vrot.lane.b32.xlu0 %v533, 16
      %v1116 = vpop.permute.xlu0 %1115
      %1117 = vrot.lane.b32.xlu0 %v534, 16
      %v1118 = vpop.permute.xlu0 %1117
      %1119 = vrot.lane.b32.xlu0 %v535, 16
      %v1120 = vpop.permute.xlu0 %1119
      %1121 = vrot.lane.b32.xlu0 %v536, 16
      %v1122 = vpop.permute.xlu0 %1121
      %1123 = vrot.lane.b32.xlu0 %v537, 16
      %v1124 = vpop.permute.xlu0 %1123
      %1125 = vrot.lane.b32.xlu0 %v538, 16
      %v1126 = vpop.permute.xlu0 %1125
      %1127 = vrot.lane.b32.xlu0 %v539, 16
      %v1128 = vpop.permute.xlu0 %1127
      %1129 = vrot.lane.b32.xlu0 %v540, 16
      %v1130 = vpop.permute.xlu0 %1129
      %1131 = vrot.lane.b32.xlu0 %v541, 16
      %v1132 = vpop.permute.xlu0 %1131
      %1133 = vrot.lane.b32.xlu0 %v542, 16
      %v1134 = vpop.permute.xlu0 %1133
      %1135 = vrot.lane.b32.xlu0 %v543, 16
      %v1136 = vpop.permute.xlu0 %1135
      %1137 = vrot.lane.b32.xlu0 %v544, 16
      %v1138 = vpop.permute.xlu0 %1137
      %1139 = vrot.lane.b32.xlu0 %v545, 16
      %v1140 = vpop.permute.xlu0 %1139
      %1141 = vrot.lane.b32.xlu0 %v546, 16
      %v1142 = vpop.permute.xlu0 %1141
      %1143 = vrot.lane.b32.xlu0 %v547, 16
      %v1144 = vpop.permute.xlu0 %1143
      %1145 = vrot.lane.b32.xlu0 %v548, 16
      %v1146 = vpop.permute.xlu0 %1145
      %1147 = vrot.lane.b32.xlu0 %v549, 16
      %v1148 = vpop.permute.xlu0 %1147
      %1149 = vrot.lane.b32.xlu0 %v550, 16
      %v1150 = vpop.permute.xlu0 %1149
      %1151 = vrot.lane.b32.xlu0 %v551, 16
      %v1152 = vpop.permute.xlu0 %1151
      %1153 = vrot.lane.b32.xlu0 %v552, 16
      %v1154 = vpop.permute.xlu0 %1153
      %1155 = vrot.lane.b32.xlu0 %v553, 16
      %v1156 = vpop.permute.xlu0 %1155
      %1157 = vrot.lane.b32.xlu0 %v554, 16
      %v1158 = vpop.permute.xlu0 %1157
      %1159 = vrot.lane.b32.xlu0 %v555, 16
      %v1160 = vpop.permute.xlu0 %1159
      %1161 = vrot.lane.b32.xlu0 %v556, 16
      %v1162 = vpop.permute.xlu0 %1161
      %1163 = vrot.lane.b32.xlu0 %v557, 16
      %v1164 = vpop.permute.xlu0 %1163
      %1165 = vrot.lane.b32.xlu0 %v558, 16
      %v1166 = vpop.permute.xlu0 %1165
      %1167 = vrot.lane.b32.xlu0 %v559, 16
      %v1168 = vpop.permute.xlu0 %1167
      %1233 = vrot.lane.b32.xlu0 %v560, 20
      %v1234 = vpop.permute.xlu0 %1233
      %1235 = vrot.lane.b32.xlu0 %v561, 20
      %v1236 = vpop.permute.xlu0 %1235
      %1237 = vrot.lane.b32.xlu0 %v562, 20
      %v1238 = vpop.permute.xlu0 %1237
      %1239 = vrot.lane.b32.xlu0 %v563, 20
      %v1240 = vpop.permute.xlu0 %1239
      %1241 = vrot.lane.b32.xlu0 %v564, 20
      %v1242 = vpop.permute.xlu0 %1241
      %1243 = vrot.lane.b32.xlu0 %v565, 20
      %v1244 = vpop.permute.xlu0 %1243
      %1245 = vrot.lane.b32.xlu0 %v566, 20
      %v1246 = vpop.permute.xlu0 %1245
      %1247 = vrot.lane.b32.xlu0 %v567, 20
      %v1248 = vpop.permute.xlu0 %1247
      %1249 = vrot.lane.b32.xlu0 %v568, 20
      %v1250 = vpop.permute.xlu0 %1249
      %1251 = vrot.lane.b32.xlu0 %v569, 20
      %v1252 = vpop.permute.xlu0 %1251
      %1253 = vrot.lane.b32.xlu0 %v570, 20
      %v1254 = vpop.permute.xlu0 %1253
      %1255 = vrot.lane.b32.xlu0 %v571, 20
      %v1256 = vpop.permute.xlu0 %1255
      %1257 = vrot.lane.b32.xlu0 %v572, 20
      %v1258 = vpop.permute.xlu0 %1257
      %1259 = vrot.lane.b32.xlu0 %v573, 20
      %v1260 = vpop.permute.xlu0 %1259
      %1261 = vrot.lane.b32.xlu0 %v574, 20
      %v1262 = vpop.permute.xlu0 %1261
      %1263 = vrot.lane.b32.xlu0 %v575, 20
      %v1264 = vpop.permute.xlu0 %1263
      %1265 = vrot.lane.b32.xlu0 %v576, 20
      %v1266 = vpop.permute.xlu0 %1265
      %1267 = vrot.lane.b32.xlu0 %v577, 20
      %v1268 = vpop.permute.xlu0 %1267
      %1269 = vrot.lane.b32.xlu0 %v578, 20
      %v1270 = vpop.permute.xlu0 %1269
      %1271 = vrot.lane.b32.xlu0 %v579, 20
      %v1272 = vpop.permute.xlu0 %1271
      %1273 = vrot.lane.b32.xlu0 %v580, 20
      %v1274 = vpop.permute.xlu0 %1273
      %1275 = vrot.lane.b32.xlu0 %v581, 20
      %v1276 = vpop.permute.xlu0 %1275
      %1277 = vrot.lane.b32.xlu0 %v582, 20
      %v1278 = vpop.permute.xlu0 %1277
      %1279 = vrot.lane.b32.xlu0 %v583, 20
      %v1280 = vpop.permute.xlu0 %1279
      %1281 = vrot.lane.b32.xlu0 %v584, 20
      %v1282 = vpop.permute.xlu0 %1281
      %1283 = vrot.lane.b32.xlu0 %v585, 20
      %v1284 = vpop.permute.xlu0 %1283
      %1285 = vrot.lane.b32.xlu0 %v586, 20
      %v1286 = vpop.permute.xlu0 %1285
      %1287 = vrot.lane.b32.xlu0 %v587, 20
      %v1288 = vpop.permute.xlu0 %1287
      %1289 = vrot.lane.b32.xlu0 %v588, 20
      %v1290 = vpop.permute.xlu0 %1289
      %1291 = vrot.lane.b32.xlu0 %v589, 20
      %v1292 = vpop.permute.xlu0 %1291
      %1293 = vrot.lane.b32.xlu0 %v590, 20
      %v1294 = vpop.permute.xlu0 %1293
      %1295 = vrot.lane.b32.xlu0 %v591, 20
      %v1296 = vpop.permute.xlu0 %1295
      %1361 = vrot.lane.b32.xlu0 %v593, 24
      %v1362 = vpop.permute.xlu0 %1361
      %1363 = vrot.lane.b32.xlu0 %v594, 24
      %v1364 = vpop.permute.xlu0 %1363
      %1365 = vrot.lane.b32.xlu0 %v595, 24
      %v1366 = vpop.permute.xlu0 %1365
      %1367 = vrot.lane.b32.xlu0 %v596, 24
      %v1368 = vpop.permute.xlu0 %1367
      %1369 = vrot.lane.b32.xlu0 %v597, 24
      %v1370 = vpop.permute.xlu0 %1369
      %1371 = vrot.lane.b32.xlu0 %v598, 24
      %v1372 = vpop.permute.xlu0 %1371
      %1373 = vrot.lane.b32.xlu0 %v599, 24
      %v1374 = vpop.permute.xlu0 %1373
      %1375 = vrot.lane.b32.xlu0 %v600, 24
      %v1376 = vpop.permute.xlu0 %1375
      %1377 = vrot.lane.b32.xlu0 %v601, 24
      %v1378 = vpop.permute.xlu0 %1377
      %1379 = vrot.lane.b32.xlu0 %v602, 24
      %v1380 = vpop.permute.xlu0 %1379
      %1381 = vrot.lane.b32.xlu0 %v603, 24
      %v1382 = vpop.permute.xlu0 %1381
      %1383 = vrot.lane.b32.xlu0 %v604, 24
      %v1384 = vpop.permute.xlu0 %1383
      %1385 = vrot.lane.b32.xlu0 %v605, 24
      %v1386 = vpop.permute.xlu0 %1385
      %1387 = vrot.lane.b32.xlu0 %v606, 24
      %v1388 = vpop.permute.xlu0 %1387
      %1389 = vrot.lane.b32.xlu0 %v607, 24
      %v1390 = vpop.permute.xlu0 %1389
      %1391 = vrot.lane.b32.xlu0 %v608, 24
      %v1392 = vpop.permute.xlu0 %1391
      %1393 = vrot.lane.b32.xlu0 %v609, 24
      %v1394 = vpop.permute.xlu0 %1393
      %1395 = vrot.lane.b32.xlu0 %v610, 24
      %v1396 = vpop.permute.xlu0 %1395
      %1397 = vrot.lane.b32.xlu0 %v611, 24
      %v1398 = vpop.permute.xlu0 %1397
      %1399 = vrot.lane.b32.xlu0 %v612, 24
      %v1400 = vpop.permute.xlu0 %1399
      %1401 = vrot.lane.b32.xlu0 %v613, 24
      %v1402 = vpop.permute.xlu0 %1401
      %1403 = vrot.lane.b32.xlu0 %v614, 24
      %v1404 = vpop.permute.xlu0 %1403
      %1405 = vrot.lane.b32.xlu0 %v615, 24
      %v1406 = vpop.permute.xlu0 %1405
      %1407 = vrot.lane.b32.xlu0 %v616, 24
      %v1408 = vpop.permute.xlu0 %1407
      %1409 = vrot.lane.b32.xlu0 %v617, 24
      %v1410 = vpop.permute.xlu0 %1409
      %1411 = vrot.lane.b32.xlu0 %v618, 24
      %v1412 = vpop.permute.xlu0 %1411
      %1413 = vrot.lane.b32.xlu0 %v619, 24
      %v1414 = vpop.permute.xlu0 %1413
      %1415 = vrot.lane.b32.xlu0 %v620, 24
      %v1416 = vpop.permute.xlu0 %1415
      %1417 = vrot.lane.b32.xlu0 %v621, 24
      %v1418 = vpop.permute.xlu0 %1417
      %1419 = vrot.lane.b32.xlu0 %v622, 24
      %v1420 = vpop.permute.xlu0 %1419
      %1421 = vrot.lane.b32.xlu0 %v623, 24
      %v1422 = vpop.permute.xlu0 %1421
      %1423 = vrot.lane.b32.xlu0 %v624, 24
      %v1424 = vpop.permute.xlu0 %1423
      %1489 = vrot.lane.b32.xlu0 %v625, 28
      %v1490 = vpop.permute.xlu0 %1489
      %1491 = vrot.lane.b32.xlu0 %v626, 28
      %v1492 = vpop.permute.xlu0 %1491
      %1493 = vrot.lane.b32.xlu0 %v627, 28
      %v1494 = vpop.permute.xlu0 %1493
      %1495 = vrot.lane.b32.xlu0 %v628, 28
      %v1496 = vpop.permute.xlu0 %1495
      %1497 = vrot.lane.b32.xlu0 %v629, 28
      %v1498 = vpop.permute.xlu0 %1497
      %1499 = vrot.lane.b32.xlu0 %v630, 28
      %v1500 = vpop.permute.xlu0 %1499
      %1501 = vrot.lane.b32.xlu0 %v631, 28
      %v1502 = vpop.permute.xlu0 %1501
      %1503 = vrot.lane.b32.xlu0 %v632, 28
      %v1504 = vpop.permute.xlu0 %1503
      %1505 = vrot.lane.b32.xlu0 %v633, 28
      %v1506 = vpop.permute.xlu0 %1505
      %1507 = vrot.lane.b32.xlu0 %v634, 28
      %v1508 = vpop.permute.xlu0 %1507
      %1509 = vrot.lane.b32.xlu0 %v635, 28
      %v1510 = vpop.permute.xlu0 %1509
      %1511 = vrot.lane.b32.xlu0 %v636, 28
      %v1512 = vpop.permute.xlu0 %1511
      %1513 = vrot.lane.b32.xlu0 %v637, 28
      %v1514 = vpop.permute.xlu0 %1513
      %1515 = vrot.lane.b32.xlu0 %v638, 28
      %v1516 = vpop.permute.xlu0 %1515
      %1517 = vrot.lane.b32.xlu0 %v639, 28
      %v1518 = vpop.permute.xlu0 %1517
      %1519 = vrot.lane.b32.xlu0 %v640, 28
      %v1520 = vpop.permute.xlu0 %1519
      %1521 = vrot.lane.b32.xlu0 %v641, 28
      %v1522 = vpop.permute.xlu0 %1521
      %1523 = vrot.lane.b32.xlu0 %v642, 28
      %v1524 = vpop.permute.xlu0 %1523
      %1525 = vrot.lane.b32.xlu0 %v643, 28
      %v1526 = vpop.permute.xlu0 %1525
      %1527 = vrot.lane.b32.xlu0 %v644, 28
      %v1528 = vpop.permute.xlu0 %1527
      %1529 = vrot.lane.b32.xlu0 %v645, 28
      %v1530 = vpop.permute.xlu0 %1529
      %1531 = vrot.lane.b32.xlu0 %v646, 28
      %v1532 = vpop.permute.xlu0 %1531
      %1533 = vrot.lane.b32.xlu0 %v647, 28
      %v1534 = vpop.permute.xlu0 %1533
      %1535 = vrot.lane.b32.xlu0 %v648, 28
      %v1536 = vpop.permute.xlu0 %1535
      %1537 = vrot.lane.b32.xlu0 %v649, 28
      %v1538 = vpop.permute.xlu0 %1537
      %1539 = vrot.lane.b32.xlu0 %v650, 28
      %v1540 = vpop.permute.xlu0 %1539
      %1541 = vrot.lane.b32.xlu0 %v651, 28
      %v1542 = vpop.permute.xlu0 %1541
      %1543 = vrot.lane.b32.xlu0 %v652, 28
      %v1544 = vpop.permute.xlu0 %1543
      %1545 = vrot.lane.b32.xlu0 %v653, 28
      %v1546 = vpop.permute.xlu0 %1545
      %1547 = vrot.lane.b32.xlu0 %v654, 28
      %v1548 = vpop.permute.xlu0 %1547
      %1549 = vrot.lane.b32.xlu0 %v655, 28
      %v1550 = vpop.permute.xlu0 %1549
      %1551 = vrot.lane.b32.xlu0 %v656, 28
      %v1552 = vpop.permute.xlu0 %1551
      %1617 = vrot.lane.b32.xlu0 %v657, 32
      %v1618 = vpop.permute.xlu0 %1617
      %1619 = vrot.lane.b32.xlu0 %v658, 32
      %v1620 = vpop.permute.xlu0 %1619
      %1621 = vrot.lane.b32.xlu0 %v659, 32
      %v1622 = vpop.permute.xlu0 %1621
      %1623 = vrot.lane.b32.xlu0 %v660, 32
      %v1624 = vpop.permute.xlu0 %1623
      %1625 = vrot.lane.b32.xlu0 %v661, 32
      %v1626 = vpop.permute.xlu0 %1625
      %1627 = vrot.lane.b32.xlu0 %v662, 32
      %v1628 = vpop.permute.xlu0 %1627
      %1629 = vrot.lane.b32.xlu0 %v663, 32
      %v1630 = vpop.permute.xlu0 %1629
      %1631 = vrot.lane.b32.xlu0 %v664, 32
      %v1632 = vpop.permute.xlu0 %1631
      %1633 = vrot.lane.b32.xlu0 %v665, 32
      %v1634 = vpop.permute.xlu0 %1633
      %1635 = vrot.lane.b32.xlu0 %v666, 32
      %v1636 = vpop.permute.xlu0 %1635
      %1637 = vrot.lane.b32.xlu0 %v667, 32
      %v1638 = vpop.permute.xlu0 %1637
      %1639 = vrot.lane.b32.xlu0 %v668, 32
      %v1640 = vpop.permute.xlu0 %1639
      %1641 = vrot.lane.b32.xlu0 %v669, 32
      %v1642 = vpop.permute.xlu0 %1641
      %1643 = vrot.lane.b32.xlu0 %v670, 32
      %v1644 = vpop.permute.xlu0 %1643
      %1645 = vrot.lane.b32.xlu0 %v671, 32
      %v1646 = vpop.permute.xlu0 %1645
      %1647 = vrot.lane.b32.xlu0 %v672, 32
      %v1648 = vpop.permute.xlu0 %1647
      %1649 = vrot.lane.b32.xlu0 %v673, 32
      %v1650 = vpop.permute.xlu0 %1649
      %1651 = vrot.lane.b32.xlu0 %v674, 32
      %v1652 = vpop.permute.xlu0 %1651
      %1653 = vrot.lane.b32.xlu0 %v675, 32
      %v1654 = vpop.permute.xlu0 %1653
      %1655 = vrot.lane.b32.xlu0 %v676, 32
      %v1656 = vpop.permute.xlu0 %1655
      %1657 = vrot.lane.b32.xlu0 %v677, 32
      %v1658 = vpop.permute.xlu0 %1657
      %1659 = vrot.lane.b32.xlu0 %v678, 32
      %v1660 = vpop.permute.xlu0 %1659
      %1661 = vrot.lane.b32.xlu0 %v679, 32
      %v1662 = vpop.permute.xlu0 %1661
      %1663 = vrot.lane.b32.xlu0 %v680, 32
      %v1664 = vpop.permute.xlu0 %1663
      %1665 = vrot.lane.b32.xlu0 %v681, 32
      %v1666 = vpop.permute.xlu0 %1665
      %1667 = vrot.lane.b32.xlu0 %v682, 32
      %v1668 = vpop.permute.xlu0 %1667
      %1669 = vrot.lane.b32.xlu0 %v683, 32
      %v1670 = vpop.permute.xlu0 %1669
      %1671 = vrot.lane.b32.xlu0 %v684, 32
      %v1672 = vpop.permute.xlu0 %1671
      %1673 = vrot.lane.b32.xlu0 %v685, 32
      %v1674 = vpop.permute.xlu0 %1673
      %1675 = vrot.lane.b32.xlu0 %v686, 32
      %v1676 = vpop.permute.xlu0 %1675
      %1677 = vrot.lane.b32.xlu0 %v687, 32
      %v1678 = vpop.permute.xlu0 %1677
      %1679 = vrot.lane.b32.xlu0 %v688, 32
      %v1680 = vpop.permute.xlu0 %1679
      %v1713 = vsel %vm279, %v400, %v722
      %v1714 = vsel %vm279, %v401, %v724
      %v1715 = vsel %vm279, %v402, %v726
      %v1716 = vsel %vm279, %v403, %v728
      %v1717 = vsel %vm279, %v404, %v730
      %v1718 = vsel %vm279, %v405, %v732
      %v1719 = vsel %vm279, %v406, %v734
      %v1720 = vsel %vm279, %v407, %v736
      %v1721 = vsel %vm279, %v408, %v738
      %v1722 = vsel %vm279, %v409, %v740
      %v1723 = vsel %vm279, %v410, %v742
      %v1724 = vsel %vm279, %v411, %v744
      %v1725 = vsel %vm279, %v412, %v746
      %v1726 = vsel %vm279, %v413, %v748
      %v1727 = vsel %vm279, %v414, %v750
      %v1728 = vsel %vm279, %v415, %v752
      %v1729 = vsel %vm279, %v416, %v754
      %v1730 = vsel %vm279, %v417, %v756
      %v1731 = vsel %vm279, %v418, %v758
      %v1732 = vsel %vm279, %v419, %v760
      %v1733 = vsel %vm279, %v420, %v762
      %v1734 = vsel %vm279, %v421, %v764
      %v1735 = vsel %vm279, %v422, %v766
      %v1736 = vsel %vm279, %v423, %v768
      %v1737 = vsel %vm279, %v424, %v770
      %v1738 = vsel %vm279, %v425, %v772
      %v1739 = vsel %vm279, %v426, %v774
      %v1740 = vsel %vm279, %v427, %v776
      %v1741 = vsel %vm279, %v428, %v778
      %v1742 = vsel %vm279, %v429, %v780
      %v1743 = vsel %vm279, %v430, %v782
      %v1744 = vsel %vm279, %v431, %v784
      %vm1745 = vcmask 64512
      %v1746 = vsel %vm1745, %v1713, %v850
      %v1747 = vsel %vm1745, %v1714, %v852
      %v1748 = vsel %vm1745, %v1715, %v854
      %v1749 = vsel %vm1745, %v1716, %v856
      %v1750 = vsel %vm1745, %v1717, %v858
      %v1751 = vsel %vm1745, %v1718, %v860
      %v1752 = vsel %vm1745, %v1719, %v862
      %v1753 = vsel %vm1745, %v1720, %v864
      %v1754 = vsel %vm1745, %v1721, %v866
      %v1755 = vsel %vm1745, %v1722, %v868
      %v1756 = vsel %vm1745, %v1723, %v870
      %v1757 = vsel %vm1745, %v1724, %v872
      %v1758 = vsel %vm1745, %v1725, %v874
      %v1759 = vsel %vm1745, %v1726, %v876
      %v1760 = vsel %vm1745, %v1727, %v878
      %v1761 = vsel %vm1745, %v1728, %v880
      %v1762 = vsel %vm1745, %v1729, %v882
      %v1763 = vsel %vm1745, %v1730, %v884
      %v1764 = vsel %vm1745, %v1731, %v886
      %v1765 = vsel %vm1745, %v1732, %v888
      %v1766 = vsel %vm1745, %v1733, %v890
      %v1767 = vsel %vm1745, %v1734, %v892
      %v1768 = vsel %vm1745, %v1735, %v894
      %v1769 = vsel %vm1745, %v1736, %v896
      %v1770 = vsel %vm1745, %v1737, %v898
      %v1771 = vsel %vm1745, %v1738, %v900
      %v1772 = vsel %vm1745, %v1739, %v902
      %v1773 = vsel %vm1745, %v1740, %v904
      %v1774 = vsel %vm1745, %v1741, %v906
      %v1775 = vsel %vm1745, %v1742, %v908
      %v1776 = vsel %vm1745, %v1743, %v910
      %v1777 = vsel %vm1745, %v1744, %v912
      %vm1778 = vcmask 97280
      %v1779 = vsel %vm1778, %v1746, %v978
      %v1780 = vsel %vm1778, %v1747, %v980
      %v1781 = vsel %vm1778, %v1748, %v982
      %v1782 = vsel %vm1778, %v1749, %v984
      %v1783 = vsel %vm1778, %v1750, %v986
      %v1784 = vsel %vm1778, %v1751, %v988
      %v1785 = vsel %vm1778, %v1752, %v990
      %v1786 = vsel %vm1778, %v1753, %v992
      %v1787 = vsel %vm1778, %v1754, %v994
      %v1788 = vsel %vm1778, %v1755, %v996
      %v1789 = vsel %vm1778, %v1756, %v998
      %v1790 = vsel %vm1778, %v1757, %v1000
      %v1791 = vsel %vm1778, %v1758, %v1002
      %v1792 = vsel %vm1778, %v1759, %v1004
      %v1793 = vsel %vm1778, %v1760, %v1006
      %v1794 = vsel %vm1778, %v1761, %v1008
      %v1795 = vsel %vm1778, %v1762, %v1010
      %v1796 = vsel %vm1778, %v1763, %v1012
      %v1797 = vsel %vm1778, %v1764, %v1014
      %v1798 = vsel %vm1778, %v1765, %v1016
      %v1799 = vsel %vm1778, %v1766, %v1018
      %v1800 = vsel %vm1778, %v1767, %v1020
      %v1801 = vsel %vm1778, %v1768, %v1022
      %v1802 = vsel %vm1778, %v1769, %v1024
      %v1803 = vsel %vm1778, %v1770, %v1026
      %v1804 = vsel %vm1778, %v1771, %v1028
      %v1805 = vsel %vm1778, %v1772, %v1030
      %v1806 = vsel %vm1778, %v1773, %v1032
      %v1807 = vsel %vm1778, %v1774, %v1034
      %v1808 = vsel %vm1778, %v1775, %v1036
      %v1809 = vsel %vm1778, %v1776, %v1038
      %v1810 = vsel %vm1778, %v1777, %v1040
      %vm1811 = vcmask 130048
      %v1812 = vsel %vm1811, %v1779, %v1106
      %v1813 = vsel %vm1811, %v1780, %v1108
      %v1814 = vsel %vm1811, %v1781, %v1110
      %v1815 = vsel %vm1811, %v1782, %v1112
      %v1816 = vsel %vm1811, %v1783, %v1114
      %v1817 = vsel %vm1811, %v1784, %v1116
      %v1818 = vsel %vm1811, %v1785, %v1118
      %v1819 = vsel %vm1811, %v1786, %v1120
      %v1820 = vsel %vm1811, %v1787, %v1122
      %v1821 = vsel %vm1811, %v1788, %v1124
      %v1822 = vsel %vm1811, %v1789, %v1126
      %v1823 = vsel %vm1811, %v1790, %v1128
      %v1824 = vsel %vm1811, %v1791, %v1130
      %v1825 = vsel %vm1811, %v1792, %v1132
      %v1826 = vsel %vm1811, %v1793, %v1134
      %v1827 = vsel %vm1811, %v1794, %v1136
      %v1828 = vsel %vm1811, %v1795, %v1138
      %v1829 = vsel %vm1811, %v1796, %v1140
      %v1830 = vsel %vm1811, %v1797, %v1142
      %v1831 = vsel %vm1811, %v1798, %v1144
      %v1832 = vsel %vm1811, %v1799, %v1146
      %v1833 = vsel %vm1811, %v1800, %v1148
      %v1834 = vsel %vm1811, %v1801, %v1150
      %v1835 = vsel %vm1811, %v1802, %v1152
      %v1836 = vsel %vm1811, %v1803, %v1154
      %v1837 = vsel %vm1811, %v1804, %v1156
      %v1838 = vsel %vm1811, %v1805, %v1158
      %v1839 = vsel %vm1811, %v1806, %v1160
      %v1840 = vsel %vm1811, %v1807, %v1162
      %v1841 = vsel %vm1811, %v1808, %v1164
      %v1842 = vsel %vm1811, %v1809, %v1166
      %v1843 = vsel %vm1811, %v1810, %v1168
      %vm1844 = vcmask 162816
      %v1845 = vsel %vm1844, %v1812, %v1234
      %v1846 = vsel %vm1844, %v1813, %v1236
      %v1847 = vsel %vm1844, %v1814, %v1238
      %v1848 = vsel %vm1844, %v1815, %v1240
      %v1849 = vsel %vm1844, %v1816, %v1242
      %v1850 = vsel %vm1844, %v1817, %v1244
      %v1851 = vsel %vm1844, %v1818, %v1246
      %v1852 = vsel %vm1844, %v1819, %v1248
      %v1853 = vsel %vm1844, %v1820, %v1250
      %v1854 = vsel %vm1844, %v1821, %v1252
      %v1855 = vsel %vm1844, %v1822, %v1254
      %v1856 = vsel %vm1844, %v1823, %v1256
      %v1857 = vsel %vm1844, %v1824, %v1258
      %v1858 = vsel %vm1844, %v1825, %v1260
      %v1859 = vsel %vm1844, %v1826, %v1262
      %v1860 = vsel %vm1844, %v1827, %v1264
      %v1861 = vsel %vm1844, %v1828, %v1266
      %v1862 = vsel %vm1844, %v1829, %v1268
      %v1863 = vsel %vm1844, %v1830, %v1270
      %v1864 = vsel %vm1844, %v1831, %v1272
      %v1865 = vsel %vm1844, %v1832, %v1274
      %v1866 = vsel %vm1844, %v1833, %v1276
      %v1867 = vsel %vm1844, %v1834, %v1278
      %v1868 = vsel %vm1844, %v1835, %v1280
      %v1869 = vsel %vm1844, %v1836, %v1282
      %v1870 = vsel %vm1844, %v1837, %v1284
      %v1871 = vsel %vm1844, %v1838, %v1286
      %v1872 = vsel %vm1844, %v1839, %v1288
      %v1873 = vsel %vm1844, %v1840, %v1290
      %v1874 = vsel %vm1844, %v1841, %v1292
      %v1875 = vsel %vm1844, %v1842, %v1294
      %v1876 = vsel %vm1844, %v1843, %v1296
      %vm1877 = vcmask 195584
      %v1878 = vsel %vm1877, %v1845, %v1362
      %v1879 = vsel %vm1877, %v1846, %v1364
      %v1880 = vsel %vm1877, %v1847, %v1366
      %v1881 = vsel %vm1877, %v1848, %v1368
      %v1882 = vsel %vm1877, %v1849, %v1370
      %v1883 = vsel %vm1877, %v1850, %v1372
      %v1884 = vsel %vm1877, %v1851, %v1374
      %v1885 = vsel %vm1877, %v1852, %v1376
      %v1886 = vsel %vm1877, %v1853, %v1378
      %v1887 = vsel %vm1877, %v1854, %v1380
      %v1888 = vsel %vm1877, %v1855, %v1382
      %v1889 = vsel %vm1877, %v1856, %v1384
      %v1890 = vsel %vm1877, %v1857, %v1386
      %v1891 = vsel %vm1877, %v1858, %v1388
      %v1892 = vsel %vm1877, %v1859, %v1390
      %v1893 = vsel %vm1877, %v1860, %v1392
      %v1894 = vsel %vm1877, %v1861, %v1394
      %v1895 = vsel %vm1877, %v1862, %v1396
      %v1896 = vsel %vm1877, %v1863, %v1398
      %v1897 = vsel %vm1877, %v1864, %v1400
      %v1898 = vsel %vm1877, %v1865, %v1402
      %v1899 = vsel %vm1877, %v1866, %v1404
      %v1900 = vsel %vm1877, %v1867, %v1406
      %v1901 = vsel %vm1877, %v1868, %v1408
      %v1902 = vsel %vm1877, %v1869, %v1410
      %v1903 = vsel %vm1877, %v1870, %v1412
      %v1904 = vsel %vm1877, %v1871, %v1414
      %v1905 = vsel %vm1877, %v1872, %v1416
      %v1906 = vsel %vm1877, %v1873, %v1418
      %v1907 = vsel %vm1877, %v1874, %v1420
      %v1908 = vsel %vm1877, %v1875, %v1422
      %v1909 = vsel %vm1877, %v1876, %v1424
      %vm1910 = vcmask 228352
      %v1911 = vsel %vm1910, %v1878, %v1490
      %v1912 = vsel %vm1910, %v1879, %v1492
      %v1913 = vsel %vm1910, %v1880, %v1494
      %v1914 = vsel %vm1910, %v1881, %v1496
      %v1915 = vsel %vm1910, %v1882, %v1498
      %v1916 = vsel %vm1910, %v1883, %v1500
      %v1917 = vsel %vm1910, %v1884, %v1502
      %v1918 = vsel %vm1910, %v1885, %v1504
      %v1919 = vsel %vm1910, %v1886, %v1506
      %v1920 = vsel %vm1910, %v1887, %v1508
      %v1921 = vsel %vm1910, %v1888, %v1510
      %v1922 = vsel %vm1910, %v1889, %v1512
      %v1923 = vsel %vm1910, %v1890, %v1514
      %v1924 = vsel %vm1910, %v1891, %v1516
      %v1925 = vsel %vm1910, %v1892, %v1518
      %v1926 = vsel %vm1910, %v1893, %v1520
      %v1927 = vsel %vm1910, %v1894, %v1522
      %v1928 = vsel %vm1910, %v1895, %v1524
      %v1929 = vsel %vm1910, %v1896, %v1526
      %v1930 = vsel %vm1910, %v1897, %v1528
      %v1931 = vsel %vm1910, %v1898, %v1530
      %v1932 = vsel %vm1910, %v1899, %v1532
      %v1933 = vsel %vm1910, %v1900, %v1534
      %v1934 = vsel %vm1910, %v1901, %v1536
      %v1935 = vsel %vm1910, %v1902, %v1538
      %v1936 = vsel %vm1910, %v1903, %v1540
      %v1937 = vsel %vm1910, %v1904, %v1542
      %v1938 = vsel %vm1910, %v1905, %v1544
      %v1939 = vsel %vm1910, %v1906, %v1546
      %v1940 = vsel %vm1910, %v1907, %v1548
      %v1941 = vsel %vm1910, %v1908, %v1550
      %v1942 = vsel %vm1910, %v1909, %v1552
      %vm1943 = vcmask 261120
      %v1944 = vsel %vm1943, %v1911, %v1618
      %v1945 = vsel %vm1943, %v1912, %v1620
      %v1946 = vsel %vm1943, %v1913, %v1622
      %v1947 = vsel %vm1943, %v1914, %v1624
      %v1948 = vsel %vm1943, %v1915, %v1626
      %v1949 = vsel %vm1943, %v1916, %v1628
      %v1950 = vsel %vm1943, %v1917, %v1630
      %v1951 = vsel %vm1943, %v1918, %v1632
      %v1952 = vsel %vm1943, %v1919, %v1634
      %v1953 = vsel %vm1943, %v1920, %v1636
      %v1954 = vsel %vm1943, %v1921, %v1638
      %v1955 = vsel %vm1943, %v1922, %v1640
      %v1956 = vsel %vm1943, %v1923, %v1642
      %v1957 = vsel %vm1943, %v1924, %v1644
      %v1958 = vsel %vm1943, %v1925, %v1646
      %v1959 = vsel %vm1943, %v1926, %v1648
      %v1960 = vsel %vm1943, %v1927, %v1650
      %v1961 = vsel %vm1943, %v1928, %v1652
      %v1962 = vsel %vm1943, %v1929, %v1654
      %v1963 = vsel %vm1943, %v1930, %v1656
      %v1964 = vsel %vm1943, %v1931, %v1658
      %v1965 = vsel %vm1943, %v1932, %v1660
      %v1966 = vsel %vm1943, %v1933, %v1662
      %v1967 = vsel %vm1943, %v1934, %v1664
      %v1968 = vsel %vm1943, %v1935, %v1666
      %v1969 = vsel %vm1943, %v1936, %v1668
      %v1970 = vsel %vm1943, %v1937, %v1670
      %v1971 = vsel %vm1943, %v1938, %v1672
      %v1972 = vsel %vm1943, %v1939, %v1674
      %v1973 = vsel %vm1943, %v1940, %v1676
      %v1974 = vsel %vm1943, %v1941, %v1678
      %v1975 = vsel %vm1943, %v1942, %v1680
      %v1976 = vld [vmem:[%s1] sm:$0xff]
      %v1977 = vld [vmem:[%s1 + $0x8] sm:$0xff]
      %v1978 = vld [vmem:[%s1 + $0x10] sm:$0xff]
      %v1979 = vld [vmem:[%s1 + $0x18] sm:$0xff]
      %v1980 = vld [vmem:[%s1 + $0x20] sm:$0xf]
      %vm1981 = vcmask 293888
      %v1983 = vsel %vm1981, %v1944, 0
      %v1986 = vsel %vm1981, %v1945, 0
      %v1989 = vsel %vm1981, %v1946, 0
      %v1992 = vsel %vm1981, %v1947, 0
      %v1995 = vsel %vm1981, %v1948, 0
      %v1998 = vsel %vm1981, %v1949, 0
      %v2001 = vsel %vm1981, %v1950, 0
      %v2004 = vsel %vm1981, %v1951, 0
      %v2007 = vsel %vm1981, %v1952, 0
      %v2010 = vsel %vm1981, %v1953, 0
      %v2013 = vsel %vm1981, %v1954, 0
      %v2016 = vsel %vm1981, %v1955, 0
      %v2019 = vsel %vm1981, %v1956, 0
      %v2022 = vsel %vm1981, %v1957, 0
      %v2025 = vsel %vm1981, %v1958, 0
      %v2028 = vsel %vm1981, %v1959, 0
      %v2031 = vsel %vm1981, %v1960, 0
      %v2034 = vsel %vm1981, %v1961, 0
      %v2037 = vsel %vm1981, %v1962, 0
      %v2040 = vsel %vm1981, %v1963, 0
      %v2043 = vsel %vm1981, %v1964, 0
      %v2046 = vsel %vm1981, %v1965, 0
      %v2049 = vsel %vm1981, %v1966, 0
      %v2052 = vsel %vm1981, %v1967, 0
      %v2055 = vsel %vm1981, %v1968, 0
      %v2058 = vsel %vm1981, %v1969, 0
      %v2061 = vsel %vm1981, %v1970, 0
      %v2064 = vsel %vm1981, %v1971, 0
      %v2067 = vsel %vm1981, %v1972, 0
      %v2070 = vsel %vm1981, %v1973, 0
      %v2073 = vsel %vm1981, %v1974, 0
      %v2076 = vsel %vm1981, %v1975, 0
      %vm2078 = vcmask 1043456
      %v2080 = vsel %vm2078, %v1980, 0
      %2082 = vmatpush.msra.mxu0 0.0
      %2083 = vmatpush.msra.mxu0 0.0
      %2084 = vmatpush.msra.mxu0 0.0
      %2085 = vmatpush.msra.mxu0 0.0
      %2086 = vmatpush.msra.mxu0 0.0
      %2087 = vmatpush.msra.mxu0 0.0
      %2088 = vmatpush.msra.mxu0 0.0
      %2089 = vmatpush.msra.mxu0 0.0
      %2090 = vmatpush.msra.mxu0 0.0
      %2091 = vmatpush.msra.mxu0 0.0
      %2092 = vmatpush.msra.mxu0 0.0
      %2093 = vmatpush.msra.mxu0 %v2080
      %2094 = vmatpush.msra.mxu0 %v1979
      %2095 = vmatpush.msra.mxu0 %v1978
      %2096 = vmatpush.msra.mxu0 %v1977
      %2097 = vmatpush.msra.mxu0 %v1976
      %2098 = vmatmul.f32.gmra.mxu0 %v1983
      %v2099 = vpop.f32.mrf.mxu0
      %v2100 = vadd.f32 0.0, %v2099
      %2101 = vmatmul.f32.gmra.mxu0 %v1986
      %v2102 = vpop.f32.mrf.mxu0
      %v2103 = vadd.f32 0.0, %v2102
      %2104 = vmatmul.f32.gmra.mxu0 %v1989
      %v2105 = vpop.f32.mrf.mxu0
      %v2106 = vadd.f32 0.0, %v2105
      %2107 = vmatmul.f32.gmra.mxu0 %v1992
      %v2108 = vpop.f32.mrf.mxu0
      %v2109 = vadd.f32 0.0, %v2108
      %2110 = vmatmul.f32.gmra.mxu0 %v1995
      %v2111 = vpop.f32.mrf.mxu0
      %v2112 = vadd.f32 0.0, %v2111
      %2113 = vmatmul.f32.gmra.mxu0 %v1998
      %v2114 = vpop.f32.mrf.mxu0
      %v2115 = vadd.f32 0.0, %v2114
      %2116 = vmatmul.f32.gmra.mxu0 %v2001
      %v2117 = vpop.f32.mrf.mxu0
      %v2118 = vadd.f32 0.0, %v2117
      %2119 = vmatmul.f32.gmra.mxu0 %v2004
      %v2120 = vpop.f32.mrf.mxu0
      %v2121 = vadd.f32 0.0, %v2120
      %2122 = vmatmul.f32.gmra.mxu0 %v2007
      %v2123 = vpop.f32.mrf.mxu0
      %v2124 = vadd.f32 0.0, %v2123
      %2125 = vmatmul.f32.gmra.mxu0 %v2010
      %v2126 = vpop.f32.mrf.mxu0
      %v2127 = vadd.f32 0.0, %v2126
      %2128 = vmatmul.f32.gmra.mxu0 %v2013
      %v2129 = vpop.f32.mrf.mxu0
      %v2130 = vadd.f32 0.0, %v2129
      %2131 = vmatmul.f32.gmra.mxu0 %v2016
      %v2132 = vpop.f32.mrf.mxu0
      %v2133 = vadd.f32 0.0, %v2132
      %2134 = vmatmul.f32.gmra.mxu0 %v2019
      %v2135 = vpop.f32.mrf.mxu0
      %v2136 = vadd.f32 0.0, %v2135
      %2137 = vmatmul.f32.gmra.mxu0 %v2022
      %v2138 = vpop.f32.mrf.mxu0
      %v2139 = vadd.f32 0.0, %v2138
      %2140 = vmatmul.f32.gmra.mxu0 %v2025
      %v2141 = vpop.f32.mrf.mxu0
      %v2142 = vadd.f32 0.0, %v2141
      %2143 = vmatmul.f32.gmra.mxu0 %v2028
      %v2144 = vpop.f32.mrf.mxu0
      %v2145 = vadd.f32 0.0, %v2144
      %2146 = vmatmul.f32.gmra.mxu0 %v2031
      %v2147 = vpop.f32.mrf.mxu0
      %v2148 = vadd.f32 0.0, %v2147
      %2149 = vmatmul.f32.gmra.mxu0 %v2034
      %v2150 = vpop.f32.mrf.mxu0
      %v2151 = vadd.f32 0.0, %v2150
      %2152 = vmatmul.f32.gmra.mxu0 %v2037
      %v2153 = vpop.f32.mrf.mxu0
      %v2154 = vadd.f32 0.0, %v2153
      %2155 = vmatmul.f32.gmra.mxu0 %v2040
      %v2156 = vpop.f32.mrf.mxu0
      %v2157 = vadd.f32 0.0, %v2156
      %2158 = vmatmul.f32.gmra.mxu0 %v2043
      %v2159 = vpop.f32.mrf.mxu0
      %v2160 = vadd.f32 0.0, %v2159
      %2161 = vmatmul.f32.gmra.mxu0 %v2046
      %v2162 = vpop.f32.mrf.mxu0
      %v2163 = vadd.f32 0.0, %v2162
      %2164 = vmatmul.f32.gmra.mxu0 %v2049
      %v2165 = vpop.f32.mrf.mxu0
      %v2166 = vadd.f32 0.0, %v2165
      %2167 = vmatmul.f32.gmra.mxu0 %v2052
      %v2168 = vpop.f32.mrf.mxu0
      %v2169 = vadd.f32 0.0, %v2168
      %2170 = vmatmul.f32.gmra.mxu0 %v2055
      %v2171 = vpop.f32.mrf.mxu0
      %v2172 = vadd.f32 0.0, %v2171
      %2173 = vmatmul.f32.gmra.mxu0 %v2058
      %v2174 = vpop.f32.mrf.mxu0
      %v2175 = vadd.f32 0.0, %v2174
      %2176 = vmatmul.f32.gmra.mxu0 %v2061
      %v2177 = vpop.f32.mrf.mxu0
      %v2178 = vadd.f32 0.0, %v2177
      %2179 = vmatmul.f32.gmra.mxu0 %v2064
      %v2180 = vpop.f32.mrf.mxu0
      %v2181 = vadd.f32 0.0, %v2180
      %2182 = vmatmul.f32.gmra.mxu0 %v2067
      %v2183 = vpop.f32.mrf.mxu0
      %v2184 = vadd.f32 0.0, %v2183
      %2185 = vmatmul.f32.gmra.mxu0 %v2070
      %v2186 = vpop.f32.mrf.mxu0
      %v2187 = vadd.f32 0.0, %v2186
      %2188 = vmatmul.f32.gmra.mxu0 %v2073
      %v2189 = vpop.f32.mrf.mxu0
      %v2190 = vadd.f32 0.0, %v2189
      %2191 = vmatmul.f32.gmra.mxu0 %v2076
      %v2192 = vpop.f32.mrf.mxu0
      %v2193 = vadd.f32 0.0, %v2192
      %2194 = vdwg.mxu0
      %v2195 = vld [vmem:[%s2] sm:$0x1]
      %v2197 = vperm.slane %v2195, 0
      %v2199 = vmul.f32 %v2100, %v2197
      %v2200 = vmul.f32 %v2103, %v2197
      %v2201 = vmul.f32 %v2106, %v2197
      %v2202 = vmul.f32 %v2109, %v2197
      %v2203 = vmul.f32 %v2112, %v2197
      %v2204 = vmul.f32 %v2115, %v2197
      %v2205 = vmul.f32 %v2118, %v2197
      %v2206 = vmul.f32 %v2121, %v2197
      %v2207 = vmul.f32 %v2124, %v2197
      %v2208 = vmul.f32 %v2127, %v2197
      %v2209 = vmul.f32 %v2130, %v2197
      %v2210 = vmul.f32 %v2133, %v2197
      %v2211 = vmul.f32 %v2136, %v2197
      %v2212 = vmul.f32 %v2139, %v2197
      %v2213 = vmul.f32 %v2142, %v2197
      %v2214 = vmul.f32 %v2145, %v2197
      %v2215 = vmul.f32 %v2148, %v2197
      %v2216 = vmul.f32 %v2151, %v2197
      %v2217 = vmul.f32 %v2154, %v2197
      %v2218 = vmul.f32 %v2157, %v2197
      %v2219 = vmul.f32 %v2160, %v2197
      %v2220 = vmul.f32 %v2163, %v2197
      %v2221 = vmul.f32 %v2166, %v2197
      %v2222 = vmul.f32 %v2169, %v2197
      %v2223 = vmul.f32 %v2172, %v2197
      %v2224 = vmul.f32 %v2175, %v2197
      %v2225 = vmul.f32 %v2178, %v2197
      %v2226 = vmul.f32 %v2181, %v2197
      %v2227 = vmul.f32 %v2184, %v2197
      %v2228 = vmul.f32 %v2187, %v2197
      %v2229 = vmul.f32 %v2190, %v2197
      %v2230 = vmul.f32 %v2193, %v2197
      %v2231 = vld [vmem:[%s3] sm:$0x1]
      %v2233 = vperm.slane %v2231, 0
      %v2235 = vadd.f32 %v2199, %v2233
      %v2236 = vadd.f32 %v2200, %v2233
      %v2237 = vadd.f32 %v2201, %v2233
      %v2238 = vadd.f32 %v2202, %v2233
      %v2239 = vadd.f32 %v2203, %v2233
      %v2240 = vadd.f32 %v2204, %v2233
      %v2241 = vadd.f32 %v2205, %v2233
      %v2242 = vadd.f32 %v2206, %v2233
      %v2243 = vadd.f32 %v2207, %v2233
      %v2244 = vadd.f32 %v2208, %v2233
      %v2245 = vadd.f32 %v2209, %v2233
      %v2246 = vadd.f32 %v2210, %v2233
      %v2247 = vadd.f32 %v2211, %v2233
      %v2248 = vadd.f32 %v2212, %v2233
      %v2249 = vadd.f32 %v2213, %v2233
      %v2250 = vadd.f32 %v2214, %v2233
      %v2251 = vadd.f32 %v2215, %v2233
      %v2252 = vadd.f32 %v2216, %v2233
      %v2253 = vadd.f32 %v2217, %v2233
      %v2254 = vadd.f32 %v2218, %v2233
      %v2255 = vadd.f32 %v2219, %v2233
      %v2256 = vadd.f32 %v2220, %v2233
      %v2257 = vadd.f32 %v2221, %v2233
      %v2258 = vadd.f32 %v2222, %v2233
      %v2259 = vadd.f32 %v2223, %v2233
      %v2260 = vadd.f32 %v2224, %v2233
      %v2261 = vadd.f32 %v2225, %v2233
      %v2262 = vadd.f32 %v2226, %v2233
      %v2263 = vadd.f32 %v2227, %v2233
      %v2264 = vadd.f32 %v2228, %v2233
      %v2265 = vadd.f32 %v2229, %v2233
      %v2266 = vadd.f32 %v2230, %v2233
      %v2267 = vmax.f32 %v2235, 0.0
      %v2268 = vmax.f32 %v2236, 0.0
      %v2269 = vmax.f32 %v2237, 0.0
      %v2270 = vmax.f32 %v2238, 0.0
      %v2271 = vmax.f32 %v2239, 0.0
      %v2272 = vmax.f32 %v2240, 0.0
      %v2273 = vmax.f32 %v2241, 0.0
      %v2274 = vmax.f32 %v2242, 0.0
      %v2275 = vmax.f32 %v2243, 0.0
      %v2276 = vmax.f32 %v2244, 0.0
      %v2277 = vmax.f32 %v2245, 0.0
      %v2278 = vmax.f32 %v2246, 0.0
      %v2279 = vmax.f32 %v2247, 0.0
      %v2280 = vmax.f32 %v2248, 0.0
      %v2281 = vmax.f32 %v2249, 0.0
      %v2282 = vmax.f32 %v2250, 0.0
      %v2283 = vmax.f32 %v2251, 0.0
      %v2284 = vmax.f32 %v2252, 0.0
      %v2285 = vmax.f32 %v2253, 0.0
      %v2286 = vmax.f32 %v2254, 0.0
      %v2287 = vmax.f32 %v2255, 0.0
      %v2288 = vmax.f32 %v2256, 0.0
      %v2289 = vmax.f32 %v2257, 0.0
      %v2290 = vmax.f32 %v2258, 0.0
      %v2291 = vmax.f32 %v2259, 0.0
      %v2292 = vmax.f32 %v2260, 0.0
      %v2293 = vmax.f32 %v2261, 0.0
      %v2294 = vmax.f32 %v2262, 0.0
      %v2295 = vmax.f32 %v2263, 0.0
      %v2296 = vmax.f32 %v2264, 0.0
      %v2297 = vmax.f32 %v2265, 0.0
      %v2298 = vmax.f32 %v2266, 0.0
      %2299 = vst.msk [vmem:[#allocation3] sm:$0xff] %vm1745, 0.0
      %2300 = vst.msk [vmem:[#allocation3 + $0x8] sm:$0xff] %vm1745, 0.0
      %vm2301 = vcmask 58368
      %2302 = vst.msk [vmem:[#allocation3 + $0x10] sm:$0x3] %vm2301, 0.0
      %2303 = vst.msk [vmem:[#allocation3 + $0x18] sm:$0xff] %vm1745, 0.0
      %2304 = vst.msk [vmem:[#allocation3 + $0x20] sm:$0xff] %vm1745, 0.0
      %2305 = vst.msk [vmem:[#allocation3 + $0x28] sm:$0x3] %vm2301, 0.0
      %2306 = vst.msk [vmem:[#allocation3 + $0x30] sm:$0xff] %vm1745, 0.0
      %2307 = vst.msk [vmem:[#allocation3 + $0x38] sm:$0xff] %vm1745, 0.0
      %2308 = vst.msk [vmem:[#allocation3 + $0x40] sm:$0x3] %vm2301, 0.0
      %2309 = vst.msk [vmem:[#allocation3 + $0x48] sm:$0xff] %vm1745, 0.0
      %2310 = vst.msk [vmem:[#allocation3 + $0x50] sm:$0xff] %vm1745, 0.0
      %2311 = vst.msk [vmem:[#allocation3 + $0x58] sm:$0x3] %vm2301, 0.0
      %2312 = vst.msk [vmem:[#allocation3 + $0x60] sm:$0xff] %vm1745, 0.0
      %2313 = vst.msk [vmem:[#allocation3 + $0x68] sm:$0xff] %vm1745, 0.0
      %2314 = vst.msk [vmem:[#allocation3 + $0x70] sm:$0x3] %vm2301, 0.0
      %2315 = vst.msk [vmem:[#allocation3 + $0x78] sm:$0xff] %vm1745, 0.0
      %2316 = vst.msk [vmem:[#allocation3 + $0x80] sm:$0xff] %vm1745, 0.0
      %2317 = vst.msk [vmem:[#allocation3 + $0x88] sm:$0x3] %vm2301, 0.0
      %2318 = vst.msk [vmem:[#allocation3 + $0x90] sm:$0xff] %vm1745, 0.0
      %2319 = vst.msk [vmem:[#allocation3 + $0x98] sm:$0xff] %vm1745, 0.0
      %2320 = vst.msk [vmem:[#allocation3 + $0xa0] sm:$0x3] %vm2301, 0.0
      %2321 = vst.msk [vmem:[#allocation3 + $0xa8] sm:$0xff] %vm1745, 0.0
      %2322 = vst.msk [vmem:[#allocation3 + $0xb0] sm:$0xff] %vm1745, 0.0
      %2323 = vst.msk [vmem:[#allocation3 + $0xb8] sm:$0x3] %vm2301, 0.0
      %2324 = vst.msk [vmem:[#allocation3 + $0xc0] sm:$0xff] %vm1745, 0.0
      %2325 = vst.msk [vmem:[#allocation3 + $0xc8] sm:$0xff] %vm1745, 0.0
      %2326 = vst.msk [vmem:[#allocation3 + $0xd0] sm:$0x3] %vm2301, 0.0
      %2327 = vst.msk [vmem:[#allocation3 + $0xd8] sm:$0xff] %vm1745, 0.0
      %2328 = vst.msk [vmem:[#allocation3 + $0xe0] sm:$0xff] %vm1745, 0.0
      %2329 = vst.msk [vmem:[#allocation3 + $0xe8] sm:$0x3] %vm2301, 0.0
      %2330 = vst.msk [vmem:[#allocation3 + $0xf0] sm:$0xff] %vm1745, 0.0
      %2331 = vst.msk [vmem:[#allocation3 + $0xf8] sm:$0xff] %vm1745, 0.0
      %2332 = vst.msk [vmem:[#allocation3 + $0x100] sm:$0x3] %vm2301, 0.0
      %2333 = vst.msk [vmem:[#allocation3 + $0x108] sm:$0xff] %vm1745, 0.0
      %2334 = vst.msk [vmem:[#allocation3 + $0x110] sm:$0xff] %vm1745, 0.0
      %2335 = vst.msk [vmem:[#allocation3 + $0x118] sm:$0x3] %vm2301, 0.0
      %2336 = vst.msk [vmem:[#allocation3 + $0x120] sm:$0xff] %vm1745, 0.0
      %2337 = vst.msk [vmem:[#allocation3 + $0x128] sm:$0xff] %vm1745, 0.0
      %2338 = vst.msk [vmem:[#allocation3 + $0x130] sm:$0x3] %vm2301, 0.0
      %2339 = vst.msk [vmem:[#allocation3 + $0x138] sm:$0xff] %vm1745, 0.0
      %2340 = vst.msk [vmem:[#allocation3 + $0x140] sm:$0xff] %vm1745, 0.0
      %2341 = vst.msk [vmem:[#allocation3 + $0x148] sm:$0x3] %vm2301, 0.0
      %2342 = vst.msk [vmem:[#allocation3 + $0x150] sm:$0xff] %vm1745, 0.0
      %2343 = vst.msk [vmem:[#allocation3 + $0x158] sm:$0xff] %vm1745, 0.0
      %2344 = vst.msk [vmem:[#allocation3 + $0x160] sm:$0x3] %vm2301, 0.0
      %2345 = vst.msk [vmem:[#allocation3 + $0x168] sm:$0xff] %vm1745, 0.0
      %2346 = vst.msk [vmem:[#allocation3 + $0x170] sm:$0xff] %vm1745, 0.0
      %2347 = vst.msk [vmem:[#allocation3 + $0x178] sm:$0x3] %vm2301, 0.0
      %2348 = vst.msk [vmem:[#allocation3 + $0x180] sm:$0xff] %vm1745, 0.0
      %2349 = vst.msk [vmem:[#allocation3 + $0x188] sm:$0xff] %vm1745, 0.0
      %2350 = vst.msk [vmem:[#allocation3 + $0x190] sm:$0x3] %vm2301, 0.0
      %2351 = vst.msk [vmem:[#allocation3 + $0x198] sm:$0xff] %vm1745, 0.0
      %2352 = vst.msk [vmem:[#allocation3 + $0x1a0] sm:$0xff] %vm1745, 0.0
      %2353 = vst.msk [vmem:[#allocation3 + $0x1a8] sm:$0x3] %vm2301, 0.0
      %s2354 = scalar_lea.vmem [#allocation3], 24
      %2355 = vst.msk [vmem:[%s2354 + $0x1] sm:$0xff] %vm1745, %v2267
      %2356 = vst.msk [vmem:[%s2354 + $0x9] sm:$0xff] %vm1745, %v2268
      %2357 = vst.msk [vmem:[%s2354 + $0x19] sm:$0xff] %vm1745, %v2269
      %2358 = vst.msk [vmem:[%s2354 + $0x21] sm:$0xff] %vm1745, %v2270
      %2359 = vst.msk [vmem:[%s2354 + $0x31] sm:$0xff] %vm1745, %v2271
      %2360 = vst.msk [vmem:[%s2354 + $0x39] sm:$0xff] %vm1745, %v2272
      %2361 = vst.msk [vmem:[%s2354 + $0x49] sm:$0xff] %vm1745, %v2273
      %2362 = vst.msk [vmem:[%s2354 + $0x51] sm:$0xff] %vm1745, %v2274
      %2363 = vst.msk [vmem:[%s2354 + $0x61] sm:$0xff] %vm1745, %v2275
      %2364 = vst.msk [vmem:[%s2354 + $0x69] sm:$0xff] %vm1745, %v2276
      %2365 = vst.msk [vmem:[%s2354 + $0x79] sm:$0xff] %vm1745, %v2277
      %2366 = vst.msk [vmem:[%s2354 + $0x81] sm:$0xff] %vm1745, %v2278
      %2367 = vst.msk [vmem:[%s2354 + $0x91] sm:$0xff] %vm1745, %v2279
      %2368 = vst.msk [vmem:[%s2354 + $0x99] sm:$0xff] %vm1745, %v2280
      %2369 = vst.msk [vmem:[%s2354 + $0xa9] sm:$0xff] %vm1745, %v2281
      %2370 = vst.msk [vmem:[%s2354 + $0xb1] sm:$0xff] %vm1745, %v2282
      %2371 = vst.msk [vmem:[%s2354 + $0xc1] sm:$0xff] %vm1745, %v2283
      %2372 = vst.msk [vmem:[%s2354 + $0xc9] sm:$0xff] %vm1745, %v2284
      %2373 = vst.msk [vmem:[%s2354 + $0xd9] sm:$0xff] %vm1745, %v2285
      %2374 = vst.msk [vmem:[%s2354 + $0xe1] sm:$0xff] %vm1745, %v2286
      %2375 = vst.msk [vmem:[%s2354 + $0xf1] sm:$0xff] %vm1745, %v2287
      %2376 = vst.msk [vmem:[%s2354 + $0xf9] sm:$0xff] %vm1745, %v2288
      %2377 = vst.msk [vmem:[%s2354 + $0x109] sm:$0xff] %vm1745, %v2289
      %2378 = vst.msk [vmem:[%s2354 + $0x111] sm:$0xff] %vm1745, %v2290
      %2379 = vst.msk [vmem:[%s2354 + $0x121] sm:$0xff] %vm1745, %v2291
      %2380 = vst.msk [vmem:[%s2354 + $0x129] sm:$0xff] %vm1745, %v2292
      %2381 = vst.msk [vmem:[%s2354 + $0x139] sm:$0xff] %vm1745, %v2293
      %2382 = vst.msk [vmem:[%s2354 + $0x141] sm:$0xff] %vm1745, %v2294
      %2383 = vst.msk [vmem:[%s2354 + $0x151] sm:$0xff] %vm1745, %v2295
      %2384 = vst.msk [vmem:[%s2354 + $0x159] sm:$0xff] %vm1745, %v2296
      %2385 = vst.msk [vmem:[%s2354 + $0x169] sm:$0xff] %vm1745, %v2297
      %2386 = vst.msk [vmem:[%s2354 + $0x171] sm:$0xff] %vm1745, %v2298
      %v2387 = vld [vmem:[#allocation3] sm:$0xff]
      %v2388 = vld [vmem:[#allocation3 + $0x8] sm:$0xff]
      %v2389 = vld [vmem:[#allocation3 + $0x18] sm:$0xff]
      %v2390 = vld [vmem:[#allocation3 + $0x20] sm:$0xff]
      %v2391 = vld [vmem:[#allocation3 + $0x30] sm:$0xff]
      %v2392 = vld [vmem:[#allocation3 + $0x38] sm:$0xff]
      %v2393 = vld [vmem:[#allocation3 + $0x48] sm:$0xff]
      %v2394 = vld [vmem:[#allocation3 + $0x50] sm:$0xff]
      %v2395 = vld [vmem:[#allocation3 + $0x60] sm:$0xff]
      %v2396 = vld [vmem:[#allocation3 + $0x68] sm:$0xff]
      %v2397 = vld [vmem:[#allocation3 + $0x78] sm:$0xff]
      %v2398 = vld [vmem:[#allocation3 + $0x80] sm:$0xff]
      %v2399 = vld [vmem:[#allocation3 + $0x90] sm:$0xff]
      %v2400 = vld [vmem:[#allocation3 + $0x98] sm:$0xff]
      %v2401 = vld [vmem:[#allocation3 + $0xa8] sm:$0xff]
      %v2402 = vld [vmem:[#allocation3 + $0xb0] sm:$0xff]
      %v2403 = vld [vmem:[#allocation3 + $0xc0] sm:$0xff]
      %v2404 = vld [vmem:[#allocation3 + $0xc8] sm:$0xff]
      %v2405 = vld [vmem:[#allocation3 + $0xd8] sm:$0xff]
      %v2406 = vld [vmem:[#allocation3 + $0xe0] sm:$0xff]
      %v2407 = vld [vmem:[#allocation3 + $0xf0] sm:$0xff]
      %v2408 = vld [vmem:[#allocation3 + $0xf8] sm:$0xff]
      %v2409 = vld [vmem:[#allocation3 + $0x108] sm:$0xff]
      %v2410 = vld [vmem:[#allocation3 + $0x110] sm:$0xff]
      %v2411 = vld [vmem:[#allocation3 + $0x120] sm:$0xff]
      %v2412 = vld [vmem:[#allocation3 + $0x128] sm:$0xff]
      %v2413 = vld [vmem:[#allocation3 + $0x138] sm:$0xff]
      %v2414 = vld [vmem:[#allocation3 + $0x140] sm:$0xff]
      %v2415 = vld [vmem:[#allocation3 + $0x150] sm:$0xff]
      %v2416 = vld [vmem:[#allocation3 + $0x158] sm:$0xff]
      %v2417 = vld [vmem:[#allocation3 + $0x168] sm:$0xff]
      %v2418 = vld [vmem:[#allocation3 + $0x170] sm:$0xff]
      %v2419 = vld [vmem:[#allocation3 + $0x1] sm:$0xff]
      %v2420 = vld [vmem:[#allocation3 + $0x9] sm:$0xff]
      %v2421 = vld [vmem:[#allocation3 + $0x19] sm:$0xff]
      %v2422 = vld [vmem:[#allocation3 + $0x21] sm:$0xff]
      %v2423 = vld [vmem:[#allocation3 + $0x31] sm:$0xff]
      %v2424 = vld [vmem:[#allocation3 + $0x39] sm:$0xff]
      %v2425 = vld [vmem:[#allocation3 + $0x49] sm:$0xff]
      %v2426 = vld [vmem:[#allocation3 + $0x51] sm:$0xff]
      %v2427 = vld [vmem:[#allocation3 + $0x61] sm:$0xff]
      %v2428 = vld [vmem:[#allocation3 + $0x69] sm:$0xff]
      %v2429 = vld [vmem:[#allocation3 + $0x79] sm:$0xff]
      %v2430 = vld [vmem:[#allocation3 + $0x81] sm:$0xff]
      %v2431 = vld [vmem:[#allocation3 + $0x91] sm:$0xff]
      %v2432 = vld [vmem:[#allocation3 + $0x99] sm:$0xff]
      %v2433 = vld [vmem:[#allocation3 + $0xa9] sm:$0xff]
      %v2434 = vld [vmem:[#allocation3 + $0xb1] sm:$0xff]
      %v2435 = vld [vmem:[#allocation3 + $0xc1] sm:$0xff]
      %v2436 = vld [vmem:[#allocation3 + $0xc9] sm:$0xff]
      %v2437 = vld [vmem:[#allocation3 + $0xd9] sm:$0xff]
      %v2438 = vld [vmem:[#allocation3 + $0xe1] sm:$0xff]
      %v2439 = vld [vmem:[#allocation3 + $0xf1] sm:$0xff]
      %v2440 = vld [vmem:[#allocation3 + $0xf9] sm:$0xff]
      %v2441 = vld [vmem:[#allocation3 + $0x109] sm:$0xff]
      %v2442 = vld [vmem:[#allocation3 + $0x111] sm:$0xff]
      %v2443 = vld [vmem:[#allocation3 + $0x121] sm:$0xff]
      %v2444 = vld [vmem:[#allocation3 + $0x129] sm:$0xff]
      %v2445 = vld [vmem:[#allocation3 + $0x139] sm:$0xff]
      %v2446 = vld [vmem:[#allocation3 + $0x141] sm:$0xff]
      %v2447 = vld [vmem:[#allocation3 + $0x151] sm:$0xff]
      %v2448 = vld [vmem:[#allocation3 + $0x159] sm:$0xff]
      %v2449 = vld [vmem:[#allocation3 + $0x169] sm:$0xff]
      %v2450 = vld [vmem:[#allocation3 + $0x171] sm:$0xff]
      %v2451 = vld [vmem:[#allocation3 + $0x2] sm:$0xff]
      %v2452 = vld [vmem:[#allocation3 + $0xa] sm:$0xff]
      %v2453 = vld [vmem:[#allocation3 + $0x1a] sm:$0xff]
      %v2454 = vld [vmem:[#allocation3 + $0x22] sm:$0xff]
      %v2455 = vld [vmem:[#allocation3 + $0x32] sm:$0xff]
      %v2456 = vld [vmem:[#allocation3 + $0x3a] sm:$0xff]
      %v2457 = vld [vmem:[#allocation3 + $0x4a] sm:$0xff]
      %v2458 = vld [vmem:[#allocation3 + $0x52] sm:$0xff]
      %v2459 = vld [vmem:[#allocation3 + $0x62] sm:$0xff]
      %v2460 = vld [vmem:[#allocation3 + $0x6a] sm:$0xff]
      %v2461 = vld [vmem:[#allocation3 + $0x7a] sm:$0xff]
      %v2462 = vld [vmem:[#allocation3 + $0x82] sm:$0xff]
      %v2463 = vld [vmem:[#allocation3 + $0x92] sm:$0xff]
      %v2464 = vld [vmem:[#allocation3 + $0x9a] sm:$0xff]
      %v2465 = vld [vmem:[#allocation3 + $0xaa] sm:$0xff]
      %v2466 = vld [vmem:[#allocation3 + $0xb2] sm:$0xff]
      %v2467 = vld [vmem:[#allocation3 + $0xc2] sm:$0xff]
      %v2468 = vld [vmem:[#allocation3 + $0xca] sm:$0xff]
      %v2469 = vld [vmem:[#allocation3 + $0xda] sm:$0xff]
      %v2470 = vld [vmem:[#allocation3 + $0xe2] sm:$0xff]
      %v2471 = vld [vmem:[#allocation3 + $0xf2] sm:$0xff]
      %v2472 = vld [vmem:[#allocation3 + $0xfa] sm:$0xff]
      %v2473 = vld [vmem:[#allocation3 + $0x10a] sm:$0xff]
      %v2474 = vld [vmem:[#allocation3 + $0x112] sm:$0xff]
      %v2475 = vld [vmem:[#allocation3 + $0x122] sm:$0xff]
      %v2476 = vld [vmem:[#allocation3 + $0x12a] sm:$0xff]
      %v2477 = vld [vmem:[#allocation3 + $0x13a] sm:$0xff]
      %v2478 = vld [vmem:[#allocation3 + $0x142] sm:$0xff]
      %v2479 = vld [vmem:[#allocation3 + $0x152] sm:$0xff]
      %v2480 = vld [vmem:[#allocation3 + $0x15a] sm:$0xff]
      %v2481 = vld [vmem:[#allocation3 + $0x16a] sm:$0xff]
      %v2482 = vld [vmem:[#allocation3 + $0x172] sm:$0xff]
      %v2483 = vld [vmem:[%s2354] sm:$0xff]
      %v2484 = vld [vmem:[%s2354 + $0x8] sm:$0xff]
      %v2485 = vld [vmem:[%s2354 + $0x18] sm:$0xff]
      %v2486 = vld [vmem:[%s2354 + $0x20] sm:$0xff]
      %v2487 = vld [vmem:[%s2354 + $0x30] sm:$0xff]
      %v2488 = vld [vmem:[%s2354 + $0x38] sm:$0xff]
      %v2489 = vld [vmem:[%s2354 + $0x48] sm:$0xff]
      %v2490 = vld [vmem:[%s2354 + $0x50] sm:$0xff]
      %v2491 = vld [vmem:[%s2354 + $0x60] sm:$0xff]
      %v2492 = vld [vmem:[%s2354 + $0x68] sm:$0xff]
      %v2493 = vld [vmem:[%s2354 + $0x78] sm:$0xff]
      %v2494 = vld [vmem:[%s2354 + $0x80] sm:$0xff]
      %v2495 = vld [vmem:[%s2354 + $0x90] sm:$0xff]
      %v2496 = vld [vmem:[%s2354 + $0x98] sm:$0xff]
      %v2497 = vld [vmem:[%s2354 + $0xa8] sm:$0xff]
      %v2498 = vld [vmem:[%s2354 + $0xb0] sm:$0xff]
      %v2499 = vld [vmem:[%s2354 + $0xc0] sm:$0xff]
      %v2500 = vld [vmem:[%s2354 + $0xc8] sm:$0xff]
      %v2501 = vld [vmem:[%s2354 + $0xd8] sm:$0xff]
      %v2502 = vld [vmem:[%s2354 + $0xe0] sm:$0xff]
      %v2503 = vld [vmem:[%s2354 + $0xf0] sm:$0xff]
      %v2504 = vld [vmem:[%s2354 + $0xf8] sm:$0xff]
      %v2505 = vld [vmem:[%s2354 + $0x108] sm:$0xff]
      %v2506 = vld [vmem:[%s2354 + $0x110] sm:$0xff]
      %v2507 = vld [vmem:[%s2354 + $0x120] sm:$0xff]
      %v2508 = vld [vmem:[%s2354 + $0x128] sm:$0xff]
      %v2509 = vld [vmem:[%s2354 + $0x138] sm:$0xff]
      %v2510 = vld [vmem:[%s2354 + $0x140] sm:$0xff]
      %v2511 = vld [vmem:[%s2354 + $0x150] sm:$0xff]
      %v2512 = vld [vmem:[%s2354 + $0x158] sm:$0xff]
      %v2513 = vld [vmem:[%s2354 + $0x168] sm:$0xff]
      %v2514 = vld [vmem:[%s2354 + $0x170] sm:$0xff]
      %v2515 = vld [vmem:[%s2354 + $0x1] sm:$0xff]
      %v2516 = vld [vmem:[%s2354 + $0x9] sm:$0xff]
      %v2517 = vld [vmem:[%s2354 + $0x19] sm:$0xff]
      %v2518 = vld [vmem:[%s2354 + $0x21] sm:$0xff]
      %v2519 = vld [vmem:[%s2354 + $0x31] sm:$0xff]
      %v2520 = vld [vmem:[%s2354 + $0x39] sm:$0xff]
      %v2521 = vld [vmem:[%s2354 + $0x49] sm:$0xff]
      %v2522 = vld [vmem:[%s2354 + $0x51] sm:$0xff]
      %v2523 = vld [vmem:[%s2354 + $0x61] sm:$0xff]
      %v2524 = vld [vmem:[%s2354 + $0x69] sm:$0xff]
      %v2525 = vld [vmem:[%s2354 + $0x79] sm:$0xff]
      %v2526 = vld [vmem:[%s2354 + $0x81] sm:$0xff]
      %v2527 = vld [vmem:[%s2354 + $0x91] sm:$0xff]
      %v2528 = vld [vmem:[%s2354 + $0x99] sm:$0xff]
      %v2529 = vld [vmem:[%s2354 + $0xa9] sm:$0xff]
      %v2530 = vld [vmem:[%s2354 + $0xb1] sm:$0xff]
      %v2531 = vld [vmem:[%s2354 + $0xc1] sm:$0xff]
      %v2532 = vld [vmem:[%s2354 + $0xc9] sm:$0xff]
      %v2533 = vld [vmem:[%s2354 + $0xd9] sm:$0xff]
      %v2534 = vld [vmem:[%s2354 + $0xe1] sm:$0xff]
      %v2535 = vld [vmem:[%s2354 + $0xf1] sm:$0xff]
      %v2536 = vld [vmem:[%s2354 + $0xf9] sm:$0xff]
      %v2537 = vld [vmem:[%s2354 + $0x109] sm:$0xff]
      %v2538 = vld [vmem:[%s2354 + $0x111] sm:$0xff]
      %v2539 = vld [vmem:[%s2354 + $0x121] sm:$0xff]
      %v2540 = vld [vmem:[%s2354 + $0x129] sm:$0xff]
      %v2541 = vld [vmem:[%s2354 + $0x139] sm:$0xff]
      %v2542 = vld [vmem:[%s2354 + $0x141] sm:$0xff]
      %v2543 = vld [vmem:[%s2354 + $0x151] sm:$0xff]
      %v2544 = vld [vmem:[%s2354 + $0x159] sm:$0xff]
      %v2545 = vld [vmem:[%s2354 + $0x169] sm:$0xff]
      %v2546 = vld [vmem:[%s2354 + $0x171] sm:$0xff]
      %v2547 = vld [vmem:[%s2354 + $0x2] sm:$0xff]
      %v2548 = vld [vmem:[%s2354 + $0xa] sm:$0xff]
      %v2549 = vld [vmem:[%s2354 + $0x1a] sm:$0xff]
      %v2550 = vld [vmem:[%s2354 + $0x22] sm:$0xff]
      %v2551 = vld [vmem:[%s2354 + $0x32] sm:$0xff]
      %v2552 = vld [vmem:[%s2354 + $0x3a] sm:$0xff]
      %v2553 = vld [vmem:[%s2354 + $0x4a] sm:$0xff]
      %v2554 = vld [vmem:[%s2354 + $0x52] sm:$0xff]
      %v2555 = vld [vmem:[%s2354 + $0x62] sm:$0xff]
      %v2556 = vld [vmem:[%s2354 + $0x6a] sm:$0xff]
      %v2557 = vld [vmem:[%s2354 + $0x7a] sm:$0xff]
      %v2558 = vld [vmem:[%s2354 + $0x82] sm:$0xff]
      %v2559 = vld [vmem:[%s2354 + $0x92] sm:$0xff]
      %v2560 = vld [vmem:[%s2354 + $0x9a] sm:$0xff]
      %v2561 = vld [vmem:[%s2354 + $0xaa] sm:$0xff]
      %v2562 = vld [vmem:[%s2354 + $0xb2] sm:$0xff]
      %v2563 = vld [vmem:[%s2354 + $0xc2] sm:$0xff]
      %v2564 = vld [vmem:[%s2354 + $0xca] sm:$0xff]
      %v2565 = vld [vmem:[%s2354 + $0xda] sm:$0xff]
      %v2566 = vld [vmem:[%s2354 + $0xe2] sm:$0xff]
      %v2567 = vld [vmem:[%s2354 + $0xf2] sm:$0xff]
      %v2568 = vld [vmem:[%s2354 + $0xfa] sm:$0xff]
      %v2569 = vld [vmem:[%s2354 + $0x10a] sm:$0xff]
      %v2570 = vld [vmem:[%s2354 + $0x112] sm:$0xff]
      %v2571 = vld [vmem:[%s2354 + $0x122] sm:$0xff]
      %v2572 = vld [vmem:[%s2354 + $0x12a] sm:$0xff]
      %v2573 = vld [vmem:[%s2354 + $0x13a] sm:$0xff]
      %v2574 = vld [vmem:[%s2354 + $0x142] sm:$0xff]
      %v2575 = vld [vmem:[%s2354 + $0x152] sm:$0xff]
      %v2576 = vld [vmem:[%s2354 + $0x15a] sm:$0xff]
      %v2577 = vld [vmem:[%s2354 + $0x16a] sm:$0xff]
      %v2578 = vld [vmem:[%s2354 + $0x172] sm:$0xff]
      %s2579 = scalar_lea.vmem [#allocation3], 48
      %v2580 = vld [vmem:[%s2579] sm:$0xff]
      %v2581 = vld [vmem:[%s2579 + $0x8] sm:$0xff]
      %v2582 = vld [vmem:[%s2579 + $0x18] sm:$0xff]
      %v2583 = vld [vmem:[%s2579 + $0x20] sm:$0xff]
      %v2584 = vld [vmem:[%s2579 + $0x30] sm:$0xff]
      %v2585 = vld [vmem:[%s2579 + $0x38] sm:$0xff]
      %v2586 = vld [vmem:[%s2579 + $0x48] sm:$0xff]
      %v2587 = vld [vmem:[%s2579 + $0x50] sm:$0xff]
      %v2588 = vld [vmem:[%s2579 + $0x60] sm:$0xff]
      %v2589 = vld [vmem:[%s2579 + $0x68] sm:$0xff]
      %v2590 = vld [vmem:[%s2579 + $0x78] sm:$0xff]
      %v2591 = vld [vmem:[%s2579 + $0x80] sm:$0xff]
      %v2592 = vld [vmem:[%s2579 + $0x90] sm:$0xff]
      %v2593 = vld [vmem:[%s2579 + $0x98] sm:$0xff]
      %v2594 = vld [vmem:[%s2579 + $0xa8] sm:$0xff]
      %v2595 = vld [vmem:[%s2579 + $0xb0] sm:$0xff]
      %v2596 = vld [vmem:[%s2579 + $0xc0] sm:$0xff]
      %v2597 = vld [vmem:[%s2579 + $0xc8] sm:$0xff]
      %v2598 = vld [vmem:[%s2579 + $0xd8] sm:$0xff]
      %v2599 = vld [vmem:[%s2579 + $0xe0] sm:$0xff]
      %v2600 = vld [vmem:[%s2579 + $0xf0] sm:$0xff]
      %v2601 = vld [vmem:[%s2579 + $0xf8] sm:$0xff]
      %v2602 = vld [vmem:[%s2579 + $0x108] sm:$0xff]
      %v2603 = vld [vmem:[%s2579 + $0x110] sm:$0xff]
      %v2604 = vld [vmem:[%s2579 + $0x120] sm:$0xff]
      %v2605 = vld [vmem:[%s2579 + $0x128] sm:$0xff]
      %v2606 = vld [vmem:[%s2579 + $0x138] sm:$0xff]
      %v2607 = vld [vmem:[%s2579 + $0x140] sm:$0xff]
      %v2608 = vld [vmem:[%s2579 + $0x150] sm:$0xff]
      %v2609 = vld [vmem:[%s2579 + $0x158] sm:$0xff]
      %v2610 = vld [vmem:[%s2579 + $0x168] sm:$0xff]
      %v2611 = vld [vmem:[%s2579 + $0x170] sm:$0xff]
      %v2612 = vld [vmem:[%s2579 + $0x1] sm:$0xff]
      %v2613 = vld [vmem:[%s2579 + $0x9] sm:$0xff]
      %v2614 = vld [vmem:[%s2579 + $0x19] sm:$0xff]
      %v2615 = vld [vmem:[%s2579 + $0x21] sm:$0xff]
      %v2616 = vld [vmem:[%s2579 + $0x31] sm:$0xff]
      %v2617 = vld [vmem:[%s2579 + $0x39] sm:$0xff]
      %v2618 = vld [vmem:[%s2579 + $0x49] sm:$0xff]
      %v2619 = vld [vmem:[%s2579 + $0x51] sm:$0xff]
      %v2620 = vld [vmem:[%s2579 + $0x61] sm:$0xff]
      %v2621 = vld [vmem:[%s2579 + $0x69] sm:$0xff]
      %v2622 = vld [vmem:[%s2579 + $0x79] sm:$0xff]
      %v2623 = vld [vmem:[%s2579 + $0x81] sm:$0xff]
      %v2624 = vld [vmem:[%s2579 + $0x91] sm:$0xff]
      %v2625 = vld [vmem:[%s2579 + $0x99] sm:$0xff]
      %v2626 = vld [vmem:[%s2579 + $0xa9] sm:$0xff]
      %v2627 = vld [vmem:[%s2579 + $0xb1] sm:$0xff]
      %v2628 = vld [vmem:[%s2579 + $0xc1] sm:$0xff]
      %v2629 = vld [vmem:[%s2579 + $0xc9] sm:$0xff]
      %v2630 = vld [vmem:[%s2579 + $0xd9] sm:$0xff]
      %v2631 = vld [vmem:[%s2579 + $0xe1] sm:$0xff]
      %v2632 = vld [vmem:[%s2579 + $0xf1] sm:$0xff]
      %v2633 = vld [vmem:[%s2579 + $0xf9] sm:$0xff]
      %v2634 = vld [vmem:[%s2579 + $0x109] sm:$0xff]
      %v2635 = vld [vmem:[%s2579 + $0x111] sm:$0xff]
      %v2636 = vld [vmem:[%s2579 + $0x121] sm:$0xff]
      %v2637 = vld [vmem:[%s2579 + $0x129] sm:$0xff]
      %v2638 = vld [vmem:[%s2579 + $0x139] sm:$0xff]
      %v2639 = vld [vmem:[%s2579 + $0x141] sm:$0xff]
      %v2640 = vld [vmem:[%s2579 + $0x151] sm:$0xff]
      %v2641 = vld [vmem:[%s2579 + $0x159] sm:$0xff]
      %v2642 = vld [vmem:[%s2579 + $0x169] sm:$0xff]
      %v2643 = vld [vmem:[%s2579 + $0x171] sm:$0xff]
      %v2644 = vld [vmem:[%s2579 + $0x2] sm:$0xff]
      %v2645 = vld [vmem:[%s2579 + $0xa] sm:$0xff]
      %v2646 = vld [vmem:[%s2579 + $0x1a] sm:$0xff]
      %v2647 = vld [vmem:[%s2579 + $0x22] sm:$0xff]
      %v2648 = vld [vmem:[%s2579 + $0x32] sm:$0xff]
      %v2649 = vld [vmem:[%s2579 + $0x3a] sm:$0xff]
      %v2650 = vld [vmem:[%s2579 + $0x4a] sm:$0xff]
      %v2651 = vld [vmem:[%s2579 + $0x52] sm:$0xff]
      %v2652 = vld [vmem:[%s2579 + $0x62] sm:$0xff]
      %v2653 = vld [vmem:[%s2579 + $0x6a] sm:$0xff]
      %v2654 = vld [vmem:[%s2579 + $0x7a] sm:$0xff]
      %v2655 = vld [vmem:[%s2579 + $0x82] sm:$0xff]
      %v2656 = vld [vmem:[%s2579 + $0x92] sm:$0xff]
      %v2657 = vld [vmem:[%s2579 + $0x9a] sm:$0xff]
      %v2658 = vld [vmem:[%s2579 + $0xaa] sm:$0xff]
      %v2659 = vld [vmem:[%s2579 + $0xb2] sm:$0xff]
      %v2660 = vld [vmem:[%s2579 + $0xc2] sm:$0xff]
      %v2661 = vld [vmem:[%s2579 + $0xca] sm:$0xff]
      %v2662 = vld [vmem:[%s2579 + $0xda] sm:$0xff]
      %v2663 = vld [vmem:[%s2579 + $0xe2] sm:$0xff]
      %v2664 = vld [vmem:[%s2579 + $0xf2] sm:$0xff]
      %v2665 = vld [vmem:[%s2579 + $0xfa] sm:$0xff]
      %v2666 = vld [vmem:[%s2579 + $0x10a] sm:$0xff]
      %v2667 = vld [vmem:[%s2579 + $0x112] sm:$0xff]
      %v2668 = vld [vmem:[%s2579 + $0x122] sm:$0xff]
      %v2669 = vld [vmem:[%s2579 + $0x12a] sm:$0xff]
      %v2670 = vld [vmem:[%s2579 + $0x13a] sm:$0xff]
      %v2671 = vld [vmem:[%s2579 + $0x142] sm:$0xff]
      %v2672 = vld [vmem:[%s2579 + $0x152] sm:$0xff]
      %v2673 = vld [vmem:[%s2579 + $0x15a] sm:$0xff]
      %v2674 = vld [vmem:[%s2579 + $0x16a] sm:$0xff]
      %v2675 = vld [vmem:[%s2579 + $0x172] sm:$0xff]
      %2708 = vrot.lane.b32.xlu0 %v2419, 8
      %v2709 = vpop.permute.xlu0 %2708
      %2710 = vrot.lane.b32.xlu0 %v2420, 8
      %v2711 = vpop.permute.xlu0 %2710
      %2712 = vrot.lane.b32.xlu0 %v2421, 8
      %v2713 = vpop.permute.xlu0 %2712
      %2714 = vrot.lane.b32.xlu0 %v2422, 8
      %v2715 = vpop.permute.xlu0 %2714
      %2716 = vrot.lane.b32.xlu0 %v2423, 8
      %v2717 = vpop.permute.xlu0 %2716
      %2718 = vrot.lane.b32.xlu0 %v2424, 8
      %v2719 = vpop.permute.xlu0 %2718
      %2720 = vrot.lane.b32.xlu0 %v2425, 8
      %v2721 = vpop.permute.xlu0 %2720
      %2722 = vrot.lane.b32.xlu0 %v2426, 8
      %v2723 = vpop.permute.xlu0 %2722
      %2724 = vrot.lane.b32.xlu0 %v2427, 8
      %v2725 = vpop.permute.xlu0 %2724
      %2726 = vrot.lane.b32.xlu0 %v2428, 8
      %v2727 = vpop.permute.xlu0 %2726
      %2728 = vrot.lane.b32.xlu0 %v2429, 8
      %v2729 = vpop.permute.xlu0 %2728
      %2730 = vrot.lane.b32.xlu0 %v2430, 8
      %v2731 = vpop.permute.xlu0 %2730
      %2732 = vrot.lane.b32.xlu0 %v2431, 8
      %v2733 = vpop.permute.xlu0 %2732
      %2734 = vrot.lane.b32.xlu0 %v2432, 8
      %v2735 = vpop.permute.xlu0 %2734
      %2736 = vrot.lane.b32.xlu0 %v2433, 8
      %v2737 = vpop.permute.xlu0 %2736
      %2738 = vrot.lane.b32.xlu0 %v2434, 8
      %v2739 = vpop.permute.xlu0 %2738
      %2740 = vrot.lane.b32.xlu0 %v2435, 8
      %v2741 = vpop.permute.xlu0 %2740
      %2742 = vrot.lane.b32.xlu0 %v2436, 8
      %v2743 = vpop.permute.xlu0 %2742
      %2744 = vrot.lane.b32.xlu0 %v2437, 8
      %v2745 = vpop.permute.xlu0 %2744
      %2746 = vrot.lane.b32.xlu0 %v2438, 8
      %v2747 = vpop.permute.xlu0 %2746
      %2748 = vrot.lane.b32.xlu0 %v2439, 8
      %v2749 = vpop.permute.xlu0 %2748
      %2750 = vrot.lane.b32.xlu0 %v2440, 8
      %v2751 = vpop.permute.xlu0 %2750
      %2752 = vrot.lane.b32.xlu0 %v2441, 8
      %v2753 = vpop.permute.xlu0 %2752
      %2754 = vrot.lane.b32.xlu0 %v2442, 8
      %v2755 = vpop.permute.xlu0 %2754
      %2756 = vrot.lane.b32.xlu0 %v2443, 8
      %v2757 = vpop.permute.xlu0 %2756
      %2758 = vrot.lane.b32.xlu0 %v2444, 8
      %v2759 = vpop.permute.xlu0 %2758
      %2760 = vrot.lane.b32.xlu0 %v2445, 8
      %v2761 = vpop.permute.xlu0 %2760
      %2762 = vrot.lane.b32.xlu0 %v2446, 8
      %v2763 = vpop.permute.xlu0 %2762
      %2764 = vrot.lane.b32.xlu0 %v2447, 8
      %v2765 = vpop.permute.xlu0 %2764
      %2766 = vrot.lane.b32.xlu0 %v2448, 8
      %v2767 = vpop.permute.xlu0 %2766
      %2768 = vrot.lane.b32.xlu0 %v2449, 8
      %v2769 = vpop.permute.xlu0 %2768
      %2770 = vrot.lane.b32.xlu0 %v2450, 8
      %v2771 = vpop.permute.xlu0 %2770
      %2836 = vrot.lane.b32.xlu0 %v2451, 16
      %v2837 = vpop.permute.xlu0 %2836
      %2838 = vrot.lane.b32.xlu0 %v2452, 16
      %v2839 = vpop.permute.xlu0 %2838
      %2840 = vrot.lane.b32.xlu0 %v2453, 16
      %v2841 = vpop.permute.xlu0 %2840
      %2842 = vrot.lane.b32.xlu0 %v2454, 16
      %v2843 = vpop.permute.xlu0 %2842
      %2844 = vrot.lane.b32.xlu0 %v2455, 16
      %v2845 = vpop.permute.xlu0 %2844
      %2846 = vrot.lane.b32.xlu0 %v2456, 16
      %v2847 = vpop.permute.xlu0 %2846
      %2848 = vrot.lane.b32.xlu0 %v2457, 16
      %v2849 = vpop.permute.xlu0 %2848
      %2850 = vrot.lane.b32.xlu0 %v2458, 16
      %v2851 = vpop.permute.xlu0 %2850
      %2852 = vrot.lane.b32.xlu0 %v2459, 16
      %v2853 = vpop.permute.xlu0 %2852
      %2854 = vrot.lane.b32.xlu0 %v2460, 16
      %v2855 = vpop.permute.xlu0 %2854
      %2856 = vrot.lane.b32.xlu0 %v2461, 16
      %v2857 = vpop.permute.xlu0 %2856
      %2858 = vrot.lane.b32.xlu0 %v2462, 16
      %v2859 = vpop.permute.xlu0 %2858
      %2860 = vrot.lane.b32.xlu0 %v2463, 16
      %v2861 = vpop.permute.xlu0 %2860
      %2862 = vrot.lane.b32.xlu0 %v2464, 16
      %v2863 = vpop.permute.xlu0 %2862
      %2864 = vrot.lane.b32.xlu0 %v2465, 16
      %v2865 = vpop.permute.xlu0 %2864
      %2866 = vrot.lane.b32.xlu0 %v2466, 16
      %v2867 = vpop.permute.xlu0 %2866
      %2868 = vrot.lane.b32.xlu0 %v2467, 16
      %v2869 = vpop.permute.xlu0 %2868
      %2870 = vrot.lane.b32.xlu0 %v2468, 16
      %v2871 = vpop.permute.xlu0 %2870
      %2872 = vrot.lane.b32.xlu0 %v2469, 16
      %v2873 = vpop.permute.xlu0 %2872
      %2874 = vrot.lane.b32.xlu0 %v2470, 16
      %v2875 = vpop.permute.xlu0 %2874
      %2876 = vrot.lane.b32.xlu0 %v2471, 16
      %v2877 = vpop.permute.xlu0 %2876
      %2878 = vrot.lane.b32.xlu0 %v2472, 16
      %v2879 = vpop.permute.xlu0 %2878
      %2880 = vrot.lane.b32.xlu0 %v2473, 16
      %v2881 = vpop.permute.xlu0 %2880
      %2882 = vrot.lane.b32.xlu0 %v2474, 16
      %v2883 = vpop.permute.xlu0 %2882
      %2884 = vrot.lane.b32.xlu0 %v2475, 16
      %v2885 = vpop.permute.xlu0 %2884
      %2886 = vrot.lane.b32.xlu0 %v2476, 16
      %v2887 = vpop.permute.xlu0 %2886
      %2888 = vrot.lane.b32.xlu0 %v2477, 16
      %v2889 = vpop.permute.xlu0 %2888
      %2890 = vrot.lane.b32.xlu0 %v2478, 16
      %v2891 = vpop.permute.xlu0 %2890
      %2892 = vrot.lane.b32.xlu0 %v2479, 16
      %v2893 = vpop.permute.xlu0 %2892
      %2894 = vrot.lane.b32.xlu0 %v2480, 16
      %v2895 = vpop.permute.xlu0 %2894
      %2896 = vrot.lane.b32.xlu0 %v2481, 16
      %v2897 = vpop.permute.xlu0 %2896
      %2898 = vrot.lane.b32.xlu0 %v2482, 16
      %v2899 = vpop.permute.xlu0 %2898
      %2964 = vrot.lane.b32.xlu0 %v2483, 24
      %v2965 = vpop.permute.xlu0 %2964
      %2966 = vrot.lane.b32.xlu0 %v2484, 24
      %v2967 = vpop.permute.xlu0 %2966
      %2968 = vrot.lane.b32.xlu0 %v2485, 24
      %v2969 = vpop.permute.xlu0 %2968
      %2970 = vrot.lane.b32.xlu0 %v2486, 24
      %v2971 = vpop.permute.xlu0 %2970
      %2972 = vrot.lane.b32.xlu0 %v2487, 24
      %v2973 = vpop.permute.xlu0 %2972
      %2974 = vrot.lane.b32.xlu0 %v2488, 24
      %v2975 = vpop.permute.xlu0 %2974
      %2976 = vrot.lane.b32.xlu0 %v2489, 24
      %v2977 = vpop.permute.xlu0 %2976
      %2978 = vrot.lane.b32.xlu0 %v2490, 24
      %v2979 = vpop.permute.xlu0 %2978
      %2980 = vrot.lane.b32.xlu0 %v2491, 24
      %v2981 = vpop.permute.xlu0 %2980
      %2982 = vrot.lane.b32.xlu0 %v2492, 24
      %v2983 = vpop.permute.xlu0 %2982
      %2984 = vrot.lane.b32.xlu0 %v2493, 24
      %v2985 = vpop.permute.xlu0 %2984
      %2986 = vrot.lane.b32.xlu0 %v2494, 24
      %v2987 = vpop.permute.xlu0 %2986
      %2988 = vrot.lane.b32.xlu0 %v2495, 24
      %v2989 = vpop.permute.xlu0 %2988
      %2990 = vrot.lane.b32.xlu0 %v2496, 24
      %v2991 = vpop.permute.xlu0 %2990
      %2992 = vrot.lane.b32.xlu0 %v2497, 24
      %v2993 = vpop.permute.xlu0 %2992
      %2994 = vrot.lane.b32.xlu0 %v2498, 24
      %v2995 = vpop.permute.xlu0 %2994
      %2996 = vrot.lane.b32.xlu0 %v2499, 24
      %v2997 = vpop.permute.xlu0 %2996
      %2998 = vrot.lane.b32.xlu0 %v2500, 24
      %v2999 = vpop.permute.xlu0 %2998
      %3000 = vrot.lane.b32.xlu0 %v2501, 24
      %v3001 = vpop.permute.xlu0 %3000
      %3002 = vrot.lane.b32.xlu0 %v2502, 24
      %v3003 = vpop.permute.xlu0 %3002
      %3004 = vrot.lane.b32.xlu0 %v2503, 24
      %v3005 = vpop.permute.xlu0 %3004
      %3006 = vrot.lane.b32.xlu0 %v2504, 24
      %v3007 = vpop.permute.xlu0 %3006
      %3008 = vrot.lane.b32.xlu0 %v2505, 24
      %v3009 = vpop.permute.xlu0 %3008
      %3010 = vrot.lane.b32.xlu0 %v2506, 24
      %v3011 = vpop.permute.xlu0 %3010
      %3012 = vrot.lane.b32.xlu0 %v2507, 24
      %v3013 = vpop.permute.xlu0 %3012
      %3014 = vrot.lane.b32.xlu0 %v2508, 24
      %v3015 = vpop.permute.xlu0 %3014
      %3016 = vrot.lane.b32.xlu0 %v2509, 24
      %v3017 = vpop.permute.xlu0 %3016
      %3018 = vrot.lane.b32.xlu0 %v2510, 24
      %v3019 = vpop.permute.xlu0 %3018
      %3020 = vrot.lane.b32.xlu0 %v2511, 24
      %v3021 = vpop.permute.xlu0 %3020
      %3022 = vrot.lane.b32.xlu0 %v2512, 24
      %v3023 = vpop.permute.xlu0 %3022
      %3024 = vrot.lane.b32.xlu0 %v2513, 24
      %v3025 = vpop.permute.xlu0 %3024
      %3026 = vrot.lane.b32.xlu0 %v2514, 24
      %v3027 = vpop.permute.xlu0 %3026
      %3092 = vrot.lane.b32.xlu0 %v2515, 32
      %v3093 = vpop.permute.xlu0 %3092
      %3094 = vrot.lane.b32.xlu0 %v2516, 32
      %v3095 = vpop.permute.xlu0 %3094
      %3096 = vrot.lane.b32.xlu0 %v2517, 32
      %v3097 = vpop.permute.xlu0 %3096
      %3098 = vrot.lane.b32.xlu0 %v2518, 32
      %v3099 = vpop.permute.xlu0 %3098
      %3100 = vrot.lane.b32.xlu0 %v2519, 32
      %v3101 = vpop.permute.xlu0 %3100
      %3102 = vrot.lane.b32.xlu0 %v2520, 32
      %v3103 = vpop.permute.xlu0 %3102
      %3104 = vrot.lane.b32.xlu0 %v2521, 32
      %v3105 = vpop.permute.xlu0 %3104
      %3106 = vrot.lane.b32.xlu0 %v2522, 32
      %v3107 = vpop.permute.xlu0 %3106
      %3108 = vrot.lane.b32.xlu0 %v2523, 32
      %v3109 = vpop.permute.xlu0 %3108
      %3110 = vrot.lane.b32.xlu0 %v2524, 32
      %v3111 = vpop.permute.xlu0 %3110
      %3112 = vrot.lane.b32.xlu0 %v2525, 32
      %v3113 = vpop.permute.xlu0 %3112
      %3114 = vrot.lane.b32.xlu0 %v2526, 32
      %v3115 = vpop.permute.xlu0 %3114
      %3116 = vrot.lane.b32.xlu0 %v2527, 32
      %v3117 = vpop.permute.xlu0 %3116
      %3118 = vrot.lane.b32.xlu0 %v2528, 32
      %v3119 = vpop.permute.xlu0 %3118
      %3120 = vrot.lane.b32.xlu0 %v2529, 32
      %v3121 = vpop.permute.xlu0 %3120
      %3122 = vrot.lane.b32.xlu0 %v2530, 32
      %v3123 = vpop.permute.xlu0 %3122
      %3124 = vrot.lane.b32.xlu0 %v2531, 32
      %v3125 = vpop.permute.xlu0 %3124
      %3126 = vrot.lane.b32.xlu0 %v2532, 32
      %v3127 = vpop.permute.xlu0 %3126
      %3128 = vrot.lane.b32.xlu0 %v2533, 32
      %v3129 = vpop.permute.xlu0 %3128
      %3130 = vrot.lane.b32.xlu0 %v2534, 32
      %v3131 = vpop.permute.xlu0 %3130
      %3132 = vrot.lane.b32.xlu0 %v2535, 32
      %v3133 = vpop.permute.xlu0 %3132
      %3134 = vrot.lane.b32.xlu0 %v2536, 32
      %v3135 = vpop.permute.xlu0 %3134
      %3136 = vrot.lane.b32.xlu0 %v2537, 32
      %v3137 = vpop.permute.xlu0 %3136
      %3138 = vrot.lane.b32.xlu0 %v2538, 32
      %v3139 = vpop.permute.xlu0 %3138
      %3140 = vrot.lane.b32.xlu0 %v2539, 32
      %v3141 = vpop.permute.xlu0 %3140
      %3142 = vrot.lane.b32.xlu0 %v2540, 32
      %v3143 = vpop.permute.xlu0 %3142
      %3144 = vrot.lane.b32.xlu0 %v2541, 32
      %v3145 = vpop.permute.xlu0 %3144
      %3146 = vrot.lane.b32.xlu0 %v2542, 32
      %v3147 = vpop.permute.xlu0 %3146
      %3148 = vrot.lane.b32.xlu0 %v2543, 32
      %v3149 = vpop.permute.xlu0 %3148
      %3150 = vrot.lane.b32.xlu0 %v2544, 32
      %v3151 = vpop.permute.xlu0 %3150
      %3152 = vrot.lane.b32.xlu0 %v2545, 32
      %v3153 = vpop.permute.xlu0 %3152
      %3154 = vrot.lane.b32.xlu0 %v2546, 32
      %v3155 = vpop.permute.xlu0 %3154
      %3220 = vrot.lane.b32.xlu0 %v2547, 40
      %v3221 = vpop.permute.xlu0 %3220
      %3222 = vrot.lane.b32.xlu0 %v2548, 40
      %v3223 = vpop.permute.xlu0 %3222
      %3224 = vrot.lane.b32.xlu0 %v2549, 40
      %v3225 = vpop.permute.xlu0 %3224
      %3226 = vrot.lane.b32.xlu0 %v2550, 40
      %v3227 = vpop.permute.xlu0 %3226
      %3228 = vrot.lane.b32.xlu0 %v2551, 40
      %v3229 = vpop.permute.xlu0 %3228
      %3230 = vrot.lane.b32.xlu0 %v2552, 40
      %v3231 = vpop.permute.xlu0 %3230
      %3232 = vrot.lane.b32.xlu0 %v2553, 40
      %v3233 = vpop.permute.xlu0 %3232
      %3234 = vrot.lane.b32.xlu0 %v2554, 40
      %v3235 = vpop.permute.xlu0 %3234
      %3236 = vrot.lane.b32.xlu0 %v2555, 40
      %v3237 = vpop.permute.xlu0 %3236
      %3238 = vrot.lane.b32.xlu0 %v2556, 40
      %v3239 = vpop.permute.xlu0 %3238
      %3240 = vrot.lane.b32.xlu0 %v2557, 40
      %v3241 = vpop.permute.xlu0 %3240
      %3242 = vrot.lane.b32.xlu0 %v2558, 40
      %v3243 = vpop.permute.xlu0 %3242
      %3244 = vrot.lane.b32.xlu0 %v2559, 40
      %v3245 = vpop.permute.xlu0 %3244
      %3246 = vrot.lane.b32.xlu0 %v2560, 40
      %v3247 = vpop.permute.xlu0 %3246
      %3248 = vrot.lane.b32.xlu0 %v2561, 40
      %v3249 = vpop.permute.xlu0 %3248
      %3250 = vrot.lane.b32.xlu0 %v2562, 40
      %v3251 = vpop.permute.xlu0 %3250
      %3252 = vrot.lane.b32.xlu0 %v2563, 40
      %v3253 = vpop.permute.xlu0 %3252
      %3254 = vrot.lane.b32.xlu0 %v2564, 40
      %v3255 = vpop.permute.xlu0 %3254
      %3256 = vrot.lane.b32.xlu0 %v2565, 40
      %v3257 = vpop.permute.xlu0 %3256
      %3258 = vrot.lane.b32.xlu0 %v2566, 40
      %v3259 = vpop.permute.xlu0 %3258
      %3260 = vrot.lane.b32.xlu0 %v2567, 40
      %v3261 = vpop.permute.xlu0 %3260
      %3262 = vrot.lane.b32.xlu0 %v2568, 40
      %v3263 = vpop.permute.xlu0 %3262
      %3264 = vrot.lane.b32.xlu0 %v2569, 40
      %v3265 = vpop.permute.xlu0 %3264
      %3266 = vrot.lane.b32.xlu0 %v2570, 40
      %v3267 = vpop.permute.xlu0 %3266
      %3268 = vrot.lane.b32.xlu0 %v2571, 40
      %v3269 = vpop.permute.xlu0 %3268
      %3270 = vrot.lane.b32.xlu0 %v2572, 40
      %v3271 = vpop.permute.xlu0 %3270
      %3272 = vrot.lane.b32.xlu0 %v2573, 40
      %v3273 = vpop.permute.xlu0 %3272
      %3274 = vrot.lane.b32.xlu0 %v2574, 40
      %v3275 = vpop.permute.xlu0 %3274
      %3276 = vrot.lane.b32.xlu0 %v2575, 40
      %v3277 = vpop.permute.xlu0 %3276
      %3278 = vrot.lane.b32.xlu0 %v2576, 40
      %v3279 = vpop.permute.xlu0 %3278
      %3280 = vrot.lane.b32.xlu0 %v2577, 40
      %v3281 = vpop.permute.xlu0 %3280
      %3282 = vrot.lane.b32.xlu0 %v2578, 40
      %v3283 = vpop.permute.xlu0 %3282
      %3348 = vrot.lane.b32.xlu0 %v2580, 48
      %v3349 = vpop.permute.xlu0 %3348
      %3350 = vrot.lane.b32.xlu0 %v2581, 48
      %v3351 = vpop.permute.xlu0 %3350
      %3352 = vrot.lane.b32.xlu0 %v2582, 48
      %v3353 = vpop.permute.xlu0 %3352
      %3354 = vrot.lane.b32.xlu0 %v2583, 48
      %v3355 = vpop.permute.xlu0 %3354
      %3356 = vrot.lane.b32.xlu0 %v2584, 48
      %v3357 = vpop.permute.xlu0 %3356
      %3358 = vrot.lane.b32.xlu0 %v2585, 48
      %v3359 = vpop.permute.xlu0 %3358
      %3360 = vrot.lane.b32.xlu0 %v2586, 48
      %v3361 = vpop.permute.xlu0 %3360
      %3362 = vrot.lane.b32.xlu0 %v2587, 48
      %v3363 = vpop.permute.xlu0 %3362
      %3364 = vrot.lane.b32.xlu0 %v2588, 48
      %v3365 = vpop.permute.xlu0 %3364
      %3366 = vrot.lane.b32.xlu0 %v2589, 48
      %v3367 = vpop.permute.xlu0 %3366
      %3368 = vrot.lane.b32.xlu0 %v2590, 48
      %v3369 = vpop.permute.xlu0 %3368
      %3370 = vrot.lane.b32.xlu0 %v2591, 48
      %v3371 = vpop.permute.xlu0 %3370
      %3372 = vrot.lane.b32.xlu0 %v2592, 48
      %v3373 = vpop.permute.xlu0 %3372
      %3374 = vrot.lane.b32.xlu0 %v2593, 48
      %v3375 = vpop.permute.xlu0 %3374
      %3376 = vrot.lane.b32.xlu0 %v2594, 48
      %v3377 = vpop.permute.xlu0 %3376
      %3378 = vrot.lane.b32.xlu0 %v2595, 48
      %v3379 = vpop.permute.xlu0 %3378
      %3380 = vrot.lane.b32.xlu0 %v2596, 48
      %v3381 = vpop.permute.xlu0 %3380
      %3382 = vrot.lane.b32.xlu0 %v2597, 48
      %v3383 = vpop.permute.xlu0 %3382
      %3384 = vrot.lane.b32.xlu0 %v2598, 48
      %v3385 = vpop.permute.xlu0 %3384
      %3386 = vrot.lane.b32.xlu0 %v2599, 48
      %v3387 = vpop.permute.xlu0 %3386
      %3388 = vrot.lane.b32.xlu0 %v2600, 48
      %v3389 = vpop.permute.xlu0 %3388
      %3390 = vrot.lane.b32.xlu0 %v2601, 48
      %v3391 = vpop.permute.xlu0 %3390
      %3392 = vrot.lane.b32.xlu0 %v2602, 48
      %v3393 = vpop.permute.xlu0 %3392
      %3394 = vrot.lane.b32.xlu0 %v2603, 48
      %v3395 = vpop.permute.xlu0 %3394
      %3396 = vrot.lane.b32.xlu0 %v2604, 48
      %v3397 = vpop.permute.xlu0 %3396
      %3398 = vrot.lane.b32.xlu0 %v2605, 48
      %v3399 = vpop.permute.xlu0 %3398
      %3400 = vrot.lane.b32.xlu0 %v2606, 48
      %v3401 = vpop.permute.xlu0 %3400
      %3402 = vrot.lane.b32.xlu0 %v2607, 48
      %v3403 = vpop.permute.xlu0 %3402
      %3404 = vrot.lane.b32.xlu0 %v2608, 48
      %v3405 = vpop.permute.xlu0 %3404
      %3406 = vrot.lane.b32.xlu0 %v2609, 48
      %v3407 = vpop.permute.xlu0 %3406
      %3408 = vrot.lane.b32.xlu0 %v2610, 48
      %v3409 = vpop.permute.xlu0 %3408
      %3410 = vrot.lane.b32.xlu0 %v2611, 48
      %v3411 = vpop.permute.xlu0 %3410
      %3476 = vrot.lane.b32.xlu0 %v2612, 56
      %v3477 = vpop.permute.xlu0 %3476
      %3478 = vrot.lane.b32.xlu0 %v2613, 56
      %v3479 = vpop.permute.xlu0 %3478
      %3480 = vrot.lane.b32.xlu0 %v2614, 56
      %v3481 = vpop.permute.xlu0 %3480
      %3482 = vrot.lane.b32.xlu0 %v2615, 56
      %v3483 = vpop.permute.xlu0 %3482
      %3484 = vrot.lane.b32.xlu0 %v2616, 56
      %v3485 = vpop.permute.xlu0 %3484
      %3486 = vrot.lane.b32.xlu0 %v2617, 56
      %v3487 = vpop.permute.xlu0 %3486
      %3488 = vrot.lane.b32.xlu0 %v2618, 56
      %v3489 = vpop.permute.xlu0 %3488
      %3490 = vrot.lane.b32.xlu0 %v2619, 56
      %v3491 = vpop.permute.xlu0 %3490
      %3492 = vrot.lane.b32.xlu0 %v2620, 56
      %v3493 = vpop.permute.xlu0 %3492
      %3494 = vrot.lane.b32.xlu0 %v2621, 56
      %v3495 = vpop.permute.xlu0 %3494
      %3496 = vrot.lane.b32.xlu0 %v2622, 56
      %v3497 = vpop.permute.xlu0 %3496
      %3498 = vrot.lane.b32.xlu0 %v2623, 56
      %v3499 = vpop.permute.xlu0 %3498
      %3500 = vrot.lane.b32.xlu0 %v2624, 56
      %v3501 = vpop.permute.xlu0 %3500
      %3502 = vrot.lane.b32.xlu0 %v2625, 56
      %v3503 = vpop.permute.xlu0 %3502
      %3504 = vrot.lane.b32.xlu0 %v2626, 56
      %v3505 = vpop.permute.xlu0 %3504
      %3506 = vrot.lane.b32.xlu0 %v2627, 56
      %v3507 = vpop.permute.xlu0 %3506
      %3508 = vrot.lane.b32.xlu0 %v2628, 56
      %v3509 = vpop.permute.xlu0 %3508
      %3510 = vrot.lane.b32.xlu0 %v2629, 56
      %v3511 = vpop.permute.xlu0 %3510
      %3512 = vrot.lane.b32.xlu0 %v2630, 56
      %v3513 = vpop.permute.xlu0 %3512
      %3514 = vrot.lane.b32.xlu0 %v2631, 56
      %v3515 = vpop.permute.xlu0 %3514
      %3516 = vrot.lane.b32.xlu0 %v2632, 56
      %v3517 = vpop.permute.xlu0 %3516
      %3518 = vrot.lane.b32.xlu0 %v2633, 56
      %v3519 = vpop.permute.xlu0 %3518
      %3520 = vrot.lane.b32.xlu0 %v2634, 56
      %v3521 = vpop.permute.xlu0 %3520
      %3522 = vrot.lane.b32.xlu0 %v2635, 56
      %v3523 = vpop.permute.xlu0 %3522
      %3524 = vrot.lane.b32.xlu0 %v2636, 56
      %v3525 = vpop.permute.xlu0 %3524
      %3526 = vrot.lane.b32.xlu0 %v2637, 56
      %v3527 = vpop.permute.xlu0 %3526
      %3528 = vrot.lane.b32.xlu0 %v2638, 56
      %v3529 = vpop.permute.xlu0 %3528
      %3530 = vrot.lane.b32.xlu0 %v2639, 56
      %v3531 = vpop.permute.xlu0 %3530
      %3532 = vrot.lane.b32.xlu0 %v2640, 56
      %v3533 = vpop.permute.xlu0 %3532
      %3534 = vrot.lane.b32.xlu0 %v2641, 56
      %v3535 = vpop.permute.xlu0 %3534
      %3536 = vrot.lane.b32.xlu0 %v2642, 56
      %v3537 = vpop.permute.xlu0 %3536
      %3538 = vrot.lane.b32.xlu0 %v2643, 56
      %v3539 = vpop.permute.xlu0 %3538
      %3604 = vrot.lane.b32.xlu0 %v2644, 64
      %v3605 = vpop.permute.xlu0 %3604
      %3606 = vrot.lane.b32.xlu0 %v2645, 64
      %v3607 = vpop.permute.xlu0 %3606
      %3608 = vrot.lane.b32.xlu0 %v2646, 64
      %v3609 = vpop.permute.xlu0 %3608
      %3610 = vrot.lane.b32.xlu0 %v2647, 64
      %v3611 = vpop.permute.xlu0 %3610
      %3612 = vrot.lane.b32.xlu0 %v2648, 64
      %v3613 = vpop.permute.xlu0 %3612
      %3614 = vrot.lane.b32.xlu0 %v2649, 64
      %v3615 = vpop.permute.xlu0 %3614
      %3616 = vrot.lane.b32.xlu0 %v2650, 64
      %v3617 = vpop.permute.xlu0 %3616
      %3618 = vrot.lane.b32.xlu0 %v2651, 64
      %v3619 = vpop.permute.xlu0 %3618
      %3620 = vrot.lane.b32.xlu0 %v2652, 64
      %v3621 = vpop.permute.xlu0 %3620
      %3622 = vrot.lane.b32.xlu0 %v2653, 64
      %v3623 = vpop.permute.xlu0 %3622
      %3624 = vrot.lane.b32.xlu0 %v2654, 64
      %v3625 = vpop.permute.xlu0 %3624
      %3626 = vrot.lane.b32.xlu0 %v2655, 64
      %v3627 = vpop.permute.xlu0 %3626
      %3628 = vrot.lane.b32.xlu0 %v2656, 64
      %v3629 = vpop.permute.xlu0 %3628
      %3630 = vrot.lane.b32.xlu0 %v2657, 64
      %v3631 = vpop.permute.xlu0 %3630
      %3632 = vrot.lane.b32.xlu0 %v2658, 64
      %v3633 = vpop.permute.xlu0 %3632
      %3634 = vrot.lane.b32.xlu0 %v2659, 64
      %v3635 = vpop.permute.xlu0 %3634
      %3636 = vrot.lane.b32.xlu0 %v2660, 64
      %v3637 = vpop.permute.xlu0 %3636
      %3638 = vrot.lane.b32.xlu0 %v2661, 64
      %v3639 = vpop.permute.xlu0 %3638
      %3640 = vrot.lane.b32.xlu0 %v2662, 64
      %v3641 = vpop.permute.xlu0 %3640
      %3642 = vrot.lane.b32.xlu0 %v2663, 64
      %v3643 = vpop.permute.xlu0 %3642
      %3644 = vrot.lane.b32.xlu0 %v2664, 64
      %v3645 = vpop.permute.xlu0 %3644
      %3646 = vrot.lane.b32.xlu0 %v2665, 64
      %v3647 = vpop.permute.xlu0 %3646
      %3648 = vrot.lane.b32.xlu0 %v2666, 64
      %v3649 = vpop.permute.xlu0 %3648
      %3650 = vrot.lane.b32.xlu0 %v2667, 64
      %v3651 = vpop.permute.xlu0 %3650
      %3652 = vrot.lane.b32.xlu0 %v2668, 64
      %v3653 = vpop.permute.xlu0 %3652
      %3654 = vrot.lane.b32.xlu0 %v2669, 64
      %v3655 = vpop.permute.xlu0 %3654
      %3656 = vrot.lane.b32.xlu0 %v2670, 64
      %v3657 = vpop.permute.xlu0 %3656
      %3658 = vrot.lane.b32.xlu0 %v2671, 64
      %v3659 = vpop.permute.xlu0 %3658
      %3660 = vrot.lane.b32.xlu0 %v2672, 64
      %v3661 = vpop.permute.xlu0 %3660
      %3662 = vrot.lane.b32.xlu0 %v2673, 64
      %v3663 = vpop.permute.xlu0 %3662
      %3664 = vrot.lane.b32.xlu0 %v2674, 64
      %v3665 = vpop.permute.xlu0 %3664
      %3666 = vrot.lane.b32.xlu0 %v2675, 64
      %v3667 = vpop.permute.xlu0 %3666
      %v3700 = vsel %vm1745, %v2387, %v2709
      %v3701 = vsel %vm1745, %v2388, %v2711
      %v3702 = vsel %vm1745, %v2389, %v2713
      %v3703 = vsel %vm1745, %v2390, %v2715
      %v3704 = vsel %vm1745, %v2391, %v2717
      %v3705 = vsel %vm1745, %v2392, %v2719
      %v3706 = vsel %vm1745, %v2393, %v2721
      %v3707 = vsel %vm1745, %v2394, %v2723
      %v3708 = vsel %vm1745, %v2395, %v2725
      %v3709 = vsel %vm1745, %v2396, %v2727
      %v3710 = vsel %vm1745, %v2397, %v2729
      %v3711 = vsel %vm1745, %v2398, %v2731
      %v3712 = vsel %vm1745, %v2399, %v2733
      %v3713 = vsel %vm1745, %v2400, %v2735
      %v3714 = vsel %vm1745, %v2401, %v2737
      %v3715 = vsel %vm1745, %v2402, %v2739
      %v3716 = vsel %vm1745, %v2403, %v2741
      %v3717 = vsel %vm1745, %v2404, %v2743
      %v3718 = vsel %vm1745, %v2405, %v2745
      %v3719 = vsel %vm1745, %v2406, %v2747
      %v3720 = vsel %vm1745, %v2407, %v2749
      %v3721 = vsel %vm1745, %v2408, %v2751
      %v3722 = vsel %vm1745, %v2409, %v2753
      %v3723 = vsel %vm1745, %v2410, %v2755
      %v3724 = vsel %vm1745, %v2411, %v2757
      %v3725 = vsel %vm1745, %v2412, %v2759
      %v3726 = vsel %vm1745, %v2413, %v2761
      %v3727 = vsel %vm1745, %v2414, %v2763
      %v3728 = vsel %vm1745, %v2415, %v2765
      %v3729 = vsel %vm1745, %v2416, %v2767
      %v3730 = vsel %vm1745, %v2417, %v2769
      %v3731 = vsel %vm1745, %v2418, %v2771
      %v3732 = vsel %vm1811, %v3700, %v2837
      %v3733 = vsel %vm1811, %v3701, %v2839
      %v3734 = vsel %vm1811, %v3702, %v2841
      %v3735 = vsel %vm1811, %v3703, %v2843
      %v3736 = vsel %vm1811, %v3704, %v2845
      %v3737 = vsel %vm1811, %v3705, %v2847
      %v3738 = vsel %vm1811, %v3706, %v2849
      %v3739 = vsel %vm1811, %v3707, %v2851
      %v3740 = vsel %vm1811, %v3708, %v2853
      %v3741 = vsel %vm1811, %v3709, %v2855
      %v3742 = vsel %vm1811, %v3710, %v2857
      %v3743 = vsel %vm1811, %v3711, %v2859
      %v3744 = vsel %vm1811, %v3712, %v2861
      %v3745 = vsel %vm1811, %v3713, %v2863
      %v3746 = vsel %vm1811, %v3714, %v2865
      %v3747 = vsel %vm1811, %v3715, %v2867
      %v3748 = vsel %vm1811, %v3716, %v2869
      %v3749 = vsel %vm1811, %v3717, %v2871
      %v3750 = vsel %vm1811, %v3718, %v2873
      %v3751 = vsel %vm1811, %v3719, %v2875
      %v3752 = vsel %vm1811, %v3720, %v2877
      %v3753 = vsel %vm1811, %v3721, %v2879
      %v3754 = vsel %vm1811, %v3722, %v2881
      %v3755 = vsel %vm1811, %v3723, %v2883
      %v3756 = vsel %vm1811, %v3724, %v2885
      %v3757 = vsel %vm1811, %v3725, %v2887
      %v3758 = vsel %vm1811, %v3726, %v2889
      %v3759 = vsel %vm1811, %v3727, %v2891
      %v3760 = vsel %vm1811, %v3728, %v2893
      %v3761 = vsel %vm1811, %v3729, %v2895
      %v3762 = vsel %vm1811, %v3730, %v2897
      %v3763 = vsel %vm1811, %v3731, %v2899
      %v3764 = vsel %vm1877, %v3732, %v2965
      %v3765 = vsel %vm1877, %v3733, %v2967
      %v3766 = vsel %vm1877, %v3734, %v2969
      %v3767 = vsel %vm1877, %v3735, %v2971
      %v3768 = vsel %vm1877, %v3736, %v2973
      %v3769 = vsel %vm1877, %v3737, %v2975
      %v3770 = vsel %vm1877, %v3738, %v2977
      %v3771 = vsel %vm1877, %v3739, %v2979
      %v3772 = vsel %vm1877, %v3740, %v2981
      %v3773 = vsel %vm1877, %v3741, %v2983
      %v3774 = vsel %vm1877, %v3742, %v2985
      %v3775 = vsel %vm1877, %v3743, %v2987
      %v3776 = vsel %vm1877, %v3744, %v2989
      %v3777 = vsel %vm1877, %v3745, %v2991
      %v3778 = vsel %vm1877, %v3746, %v2993
      %v3779 = vsel %vm1877, %v3747, %v2995
      %v3780 = vsel %vm1877, %v3748, %v2997
      %v3781 = vsel %vm1877, %v3749, %v2999
      %v3782 = vsel %vm1877, %v3750, %v3001
      %v3783 = vsel %vm1877, %v3751, %v3003
      %v3784 = vsel %vm1877, %v3752, %v3005
      %v3785 = vsel %vm1877, %v3753, %v3007
      %v3786 = vsel %vm1877, %v3754, %v3009
      %v3787 = vsel %vm1877, %v3755, %v3011
      %v3788 = vsel %vm1877, %v3756, %v3013
      %v3789 = vsel %vm1877, %v3757, %v3015
      %v3790 = vsel %vm1877, %v3758, %v3017
      %v3791 = vsel %vm1877, %v3759, %v3019
      %v3792 = vsel %vm1877, %v3760, %v3021
      %v3793 = vsel %vm1877, %v3761, %v3023
      %v3794 = vsel %vm1877, %v3762, %v3025
      %v3795 = vsel %vm1877, %v3763, %v3027
      %v3796 = vsel %vm1943, %v3764, %v3093
      %v3797 = vsel %vm1943, %v3765, %v3095
      %v3798 = vsel %vm1943, %v3766, %v3097
      %v3799 = vsel %vm1943, %v3767, %v3099
      %v3800 = vsel %vm1943, %v3768, %v3101
      %v3801 = vsel %vm1943, %v3769, %v3103
      %v3802 = vsel %vm1943, %v3770, %v3105
      %v3803 = vsel %vm1943, %v3771, %v3107
      %v3804 = vsel %vm1943, %v3772, %v3109
      %v3805 = vsel %vm1943, %v3773, %v3111
      %v3806 = vsel %vm1943, %v3774, %v3113
      %v3807 = vsel %vm1943, %v3775, %v3115
      %v3808 = vsel %vm1943, %v3776, %v3117
      %v3809 = vsel %vm1943, %v3777, %v3119
      %v3810 = vsel %vm1943, %v3778, %v3121
      %v3811 = vsel %vm1943, %v3779, %v3123
      %v3812 = vsel %vm1943, %v3780, %v3125
      %v3813 = vsel %vm1943, %v3781, %v3127
      %v3814 = vsel %vm1943, %v3782, %v3129
      %v3815 = vsel %vm1943, %v3783, %v3131
      %v3816 = vsel %vm1943, %v3784, %v3133
      %v3817 = vsel %vm1943, %v3785, %v3135
      %v3818 = vsel %vm1943, %v3786, %v3137
      %v3819 = vsel %vm1943, %v3787, %v3139
      %v3820 = vsel %vm1943, %v3788, %v3141
      %v3821 = vsel %vm1943, %v3789, %v3143
      %v3822 = vsel %vm1943, %v3790, %v3145
      %v3823 = vsel %vm1943, %v3791, %v3147
      %v3824 = vsel %vm1943, %v3792, %v3149
      %v3825 = vsel %vm1943, %v3793, %v3151
      %v3826 = vsel %vm1943, %v3794, %v3153
      %v3827 = vsel %vm1943, %v3795, %v3155
      %vm3828 = vcmask 326656
      %v3829 = vsel %vm3828, %v3796, %v3221
      %v3830 = vsel %vm3828, %v3797, %v3223
      %v3831 = vsel %vm3828, %v3798, %v3225
      %v3832 = vsel %vm3828, %v3799, %v3227
      %v3833 = vsel %vm3828, %v3800, %v3229
      %v3834 = vsel %vm3828, %v3801, %v3231
      %v3835 = vsel %vm3828, %v3802, %v3233
      %v3836 = vsel %vm3828, %v3803, %v3235
      %v3837 = vsel %vm3828, %v3804, %v3237
      %v3838 = vsel %vm3828, %v3805, %v3239
      %v3839 = vsel %vm3828, %v3806, %v3241
      %v3840 = vsel %vm3828, %v3807, %v3243
      %v3841 = vsel %vm3828, %v3808, %v3245
      %v3842 = vsel %vm3828, %v3809, %v3247
      %v3843 = vsel %vm3828, %v3810, %v3249
      %v3844 = vsel %vm3828, %v3811, %v3251
      %v3845 = vsel %vm3828, %v3812, %v3253
      %v3846 = vsel %vm3828, %v3813, %v3255
      %v3847 = vsel %vm3828, %v3814, %v3257
      %v3848 = vsel %vm3828, %v3815, %v3259
      %v3849 = vsel %vm3828, %v3816, %v3261
      %v3850 = vsel %vm3828, %v3817, %v3263
      %v3851 = vsel %vm3828, %v3818, %v3265
      %v3852 = vsel %vm3828, %v3819, %v3267
      %v3853 = vsel %vm3828, %v3820, %v3269
      %v3854 = vsel %vm3828, %v3821, %v3271
      %v3855 = vsel %vm3828, %v3822, %v3273
      %v3856 = vsel %vm3828, %v3823, %v3275
      %v3857 = vsel %vm3828, %v3824, %v3277
      %v3858 = vsel %vm3828, %v3825, %v3279
      %v3859 = vsel %vm3828, %v3826, %v3281
      %v3860 = vsel %vm3828, %v3827, %v3283
      %vm3861 = vcmask 392192
      %v3862 = vsel %vm3861, %v3829, %v3349
      %v3863 = vsel %vm3861, %v3830, %v3351
      %v3864 = vsel %vm3861, %v3831, %v3353
      %v3865 = vsel %vm3861, %v3832, %v3355
      %v3866 = vsel %vm3861, %v3833, %v3357
      %v3867 = vsel %vm3861, %v3834, %v3359
      %v3868 = vsel %vm3861, %v3835, %v3361
      %v3869 = vsel %vm3861, %v3836, %v3363
      %v3870 = vsel %vm3861, %v3837, %v3365
      %v3871 = vsel %vm3861, %v3838, %v3367
      %v3872 = vsel %vm3861, %v3839, %v3369
      %v3873 = vsel %vm3861, %v3840, %v3371
      %v3874 = vsel %vm3861, %v3841, %v3373
      %v3875 = vsel %vm3861, %v3842, %v3375
      %v3876 = vsel %vm3861, %v3843, %v3377
      %v3877 = vsel %vm3861, %v3844, %v3379
      %v3878 = vsel %vm3861, %v3845, %v3381
      %v3879 = vsel %vm3861, %v3846, %v3383
      %v3880 = vsel %vm3861, %v3847, %v3385
      %v3881 = vsel %vm3861, %v3848, %v3387
      %v3882 = vsel %vm3861, %v3849, %v3389
      %v3883 = vsel %vm3861, %v3850, %v3391
      %v3884 = vsel %vm3861, %v3851, %v3393
      %v3885 = vsel %vm3861, %v3852, %v3395
      %v3886 = vsel %vm3861, %v3853, %v3397
      %v3887 = vsel %vm3861, %v3854, %v3399
      %v3888 = vsel %vm3861, %v3855, %v3401
      %v3889 = vsel %vm3861, %v3856, %v3403
      %v3890 = vsel %vm3861, %v3857, %v3405
      %v3891 = vsel %vm3861, %v3858, %v3407
      %v3892 = vsel %vm3861, %v3859, %v3409
      %v3893 = vsel %vm3861, %v3860, %v3411
      %vm3894 = vcmask 457728
      %v3895 = vsel %vm3894, %v3862, %v3477
      %v3896 = vsel %vm3894, %v3863, %v3479
      %v3897 = vsel %vm3894, %v3864, %v3481
      %v3898 = vsel %vm3894, %v3865, %v3483
      %v3899 = vsel %vm3894, %v3866, %v3485
      %v3900 = vsel %vm3894, %v3867, %v3487
      %v3901 = vsel %vm3894, %v3868, %v3489
      %v3902 = vsel %vm3894, %v3869, %v3491
      %v3903 = vsel %vm3894, %v3870, %v3493
      %v3904 = vsel %vm3894, %v3871, %v3495
      %v3905 = vsel %vm3894, %v3872, %v3497
      %v3906 = vsel %vm3894, %v3873, %v3499
      %v3907 = vsel %vm3894, %v3874, %v3501
      %v3908 = vsel %vm3894, %v3875, %v3503
      %v3909 = vsel %vm3894, %v3876, %v3505
      %v3910 = vsel %vm3894, %v3877, %v3507
      %v3911 = vsel %vm3894, %v3878, %v3509
      %v3912 = vsel %vm3894, %v3879, %v3511
      %v3913 = vsel %vm3894, %v3880, %v3513
      %v3914 = vsel %vm3894, %v3881, %v3515
      %v3915 = vsel %vm3894, %v3882, %v3517
      %v3916 = vsel %vm3894, %v3883, %v3519
      %v3917 = vsel %vm3894, %v3884, %v3521
      %v3918 = vsel %vm3894, %v3885, %v3523
      %v3919 = vsel %vm3894, %v3886, %v3525
      %v3920 = vsel %vm3894, %v3887, %v3527
      %v3921 = vsel %vm3894, %v3888, %v3529
      %v3922 = vsel %vm3894, %v3889, %v3531
      %v3923 = vsel %vm3894, %v3890, %v3533
      %v3924 = vsel %vm3894, %v3891, %v3535
      %v3925 = vsel %vm3894, %v3892, %v3537
      %v3926 = vsel %vm3894, %v3893, %v3539
      %vm3927 = vcmask 523264
      %v3928 = vsel %vm3927, %v3895, %v3605
      %v3929 = vsel %vm3927, %v3896, %v3607
      %v3930 = vsel %vm3927, %v3897, %v3609
      %v3931 = vsel %vm3927, %v3898, %v3611
      %v3932 = vsel %vm3927, %v3899, %v3613
      %v3933 = vsel %vm3927, %v3900, %v3615
      %v3934 = vsel %vm3927, %v3901, %v3617
      %v3935 = vsel %vm3927, %v3902, %v3619
      %v3936 = vsel %vm3927, %v3903, %v3621
      %v3937 = vsel %vm3927, %v3904, %v3623
      %v3938 = vsel %vm3927, %v3905, %v3625
      %v3939 = vsel %vm3927, %v3906, %v3627
      %v3940 = vsel %vm3927, %v3907, %v3629
      %v3941 = vsel %vm3927, %v3908, %v3631
      %v3942 = vsel %vm3927, %v3909, %v3633
      %v3943 = vsel %vm3927, %v3910, %v3635
      %v3944 = vsel %vm3927, %v3911, %v3637
      %v3945 = vsel %vm3927, %v3912, %v3639
      %v3946 = vsel %vm3927, %v3913, %v3641
      %v3947 = vsel %vm3927, %v3914, %v3643
      %v3948 = vsel %vm3927, %v3915, %v3645
      %v3949 = vsel %vm3927, %v3916, %v3647
      %v3950 = vsel %vm3927, %v3917, %v3649
      %v3951 = vsel %vm3927, %v3918, %v3651
      %v3952 = vsel %vm3927, %v3919, %v3653
      %v3953 = vsel %vm3927, %v3920, %v3655
      %v3954 = vsel %vm3927, %v3921, %v3657
      %v3955 = vsel %vm3927, %v3922, %v3659
      %v3956 = vsel %vm3927, %v3923, %v3661
      %v3957 = vsel %vm3927, %v3924, %v3663
      %v3958 = vsel %vm3927, %v3925, %v3665
      %v3959 = vsel %vm3927, %v3926, %v3667
      %v3960 = vld [vmem:[%s4] sm:$0xff]
      %v3961 = vld [vmem:[%s4 + $0x8] sm:$0xff]
      %v3962 = vld [vmem:[%s4 + $0x10] sm:$0xff]
      %v3963 = vld [vmem:[%s4 + $0x18] sm:$0xff]
      %v3964 = vld [vmem:[%s4 + $0x20] sm:$0xff]
      %v3965 = vld [vmem:[%s4 + $0x28] sm:$0xff]
      %v3966 = vld [vmem:[%s4 + $0x30] sm:$0xff]
      %v3967 = vld [vmem:[%s4 + $0x38] sm:$0xff]
      %v3968 = vld [vmem:[%s4 + $0x40] sm:$0xff]
      %vm3969 = vcmask 588800
      %v3971 = vsel %vm3969, %v3928, 0
      %v3974 = vsel %vm3969, %v3929, 0
      %v3977 = vsel %vm3969, %v3930, 0
      %v3980 = vsel %vm3969, %v3931, 0
      %v3983 = vsel %vm3969, %v3932, 0
      %v3986 = vsel %vm3969, %v3933, 0
      %v3989 = vsel %vm3969, %v3934, 0
      %v3992 = vsel %vm3969, %v3935, 0
      %v3995 = vsel %vm3969, %v3936, 0
      %v3998 = vsel %vm3969, %v3937, 0
      %v4001 = vsel %vm3969, %v3938, 0
      %v4004 = vsel %vm3969, %v3939, 0
      %v4007 = vsel %vm3969, %v3940, 0
      %v4010 = vsel %vm3969, %v3941, 0
      %v4013 = vsel %vm3969, %v3942, 0
      %v4016 = vsel %vm3969, %v3943, 0
      %v4019 = vsel %vm3969, %v3944, 0
      %v4022 = vsel %vm3969, %v3945, 0
      %v4025 = vsel %vm3969, %v3946, 0
      %v4028 = vsel %vm3969, %v3947, 0
      %v4031 = vsel %vm3969, %v3948, 0
      %v4034 = vsel %vm3969, %v3949, 0
      %v4037 = vsel %vm3969, %v3950, 0
      %v4040 = vsel %vm3969, %v3951, 0
      %v4043 = vsel %vm3969, %v3952, 0
      %v4046 = vsel %vm3969, %v3953, 0
      %v4049 = vsel %vm3969, %v3954, 0
      %v4052 = vsel %vm3969, %v3955, 0
      %v4055 = vsel %vm3969, %v3956, 0
      %v4058 = vsel %vm3969, %v3957, 0
      %v4061 = vsel %vm3969, %v3958, 0
      %v4064 = vsel %vm3969, %v3959, 0
      %4066 = vmatpush.msra.mxu0 0.0
      %4067 = vmatpush.msra.mxu0 0.0
      %4068 = vmatpush.msra.mxu0 0.0
      %4069 = vmatpush.msra.mxu0 0.0
      %4070 = vmatpush.msra.mxu0 0.0
      %4071 = vmatpush.msra.mxu0 0.0
      %4072 = vmatpush.msra.mxu0 0.0
      %4073 = vmatpush.msra.mxu0 %v3968
      %4074 = vmatpush.msra.mxu0 %v3967
      %4075 = vmatpush.msra.mxu0 %v3966
      %4076 = vmatpush.msra.mxu0 %v3965
      %4077 = vmatpush.msra.mxu0 %v3964
      %4078 = vmatpush.msra.mxu0 %v3963
      %4079 = vmatpush.msra.mxu0 %v3962
      %4080 = vmatpush.msra.mxu0 %v3961
      %4081 = vmatpush.msra.mxu0 %v3960
      %4082 = vmatmul.f32.gmra.mxu0 %v3971
      %v4083 = vpop.f32.mrf.mxu0
      %v4084 = vadd.f32 0.0, %v4083
      %4085 = vmatmul.f32.gmra.mxu0 %v3974
      %v4086 = vpop.f32.mrf.mxu0
      %v4087 = vadd.f32 0.0, %v4086
      %4088 = vmatmul.f32.gmra.mxu0 %v3977
      %v4089 = vpop.f32.mrf.mxu0
      %v4090 = vadd.f32 0.0, %v4089
      %4091 = vmatmul.f32.gmra.mxu0 %v3980
      %v4092 = vpop.f32.mrf.mxu0
      %v4093 = vadd.f32 0.0, %v4092
      %4094 = vmatmul.f32.gmra.mxu0 %v3983
      %v4095 = vpop.f32.mrf.mxu0
      %v4096 = vadd.f32 0.0, %v4095
      %4097 = vmatmul.f32.gmra.mxu0 %v3986
      %v4098 = vpop.f32.mrf.mxu0
      %v4099 = vadd.f32 0.0, %v4098
      %4100 = vmatmul.f32.gmra.mxu0 %v3989
      %v4101 = vpop.f32.mrf.mxu0
      %v4102 = vadd.f32 0.0, %v4101
      %4103 = vmatmul.f32.gmra.mxu0 %v3992
      %v4104 = vpop.f32.mrf.mxu0
      %v4105 = vadd.f32 0.0, %v4104
      %4106 = vmatmul.f32.gmra.mxu0 %v3995
      %v4107 = vpop.f32.mrf.mxu0
      %v4108 = vadd.f32 0.0, %v4107
      %4109 = vmatmul.f32.gmra.mxu0 %v3998
      %v4110 = vpop.f32.mrf.mxu0
      %v4111 = vadd.f32 0.0, %v4110
      %4112 = vmatmul.f32.gmra.mxu0 %v4001
      %v4113 = vpop.f32.mrf.mxu0
      %v4114 = vadd.f32 0.0, %v4113
      %4115 = vmatmul.f32.gmra.mxu0 %v4004
      %v4116 = vpop.f32.mrf.mxu0
      %v4117 = vadd.f32 0.0, %v4116
      %4118 = vmatmul.f32.gmra.mxu0 %v4007
      %v4119 = vpop.f32.mrf.mxu0
      %v4120 = vadd.f32 0.0, %v4119
      %4121 = vmatmul.f32.gmra.mxu0 %v4010
      %v4122 = vpop.f32.mrf.mxu0
      %v4123 = vadd.f32 0.0, %v4122
      %4124 = vmatmul.f32.gmra.mxu0 %v4013
      %v4125 = vpop.f32.mrf.mxu0
      %v4126 = vadd.f32 0.0, %v4125
      %4127 = vmatmul.f32.gmra.mxu0 %v4016
      %v4128 = vpop.f32.mrf.mxu0
      %v4129 = vadd.f32 0.0, %v4128
      %4130 = vmatmul.f32.gmra.mxu0 %v4019
      %v4131 = vpop.f32.mrf.mxu0
      %v4132 = vadd.f32 0.0, %v4131
      %4133 = vmatmul.f32.gmra.mxu0 %v4022
      %v4134 = vpop.f32.mrf.mxu0
      %v4135 = vadd.f32 0.0, %v4134
      %4136 = vmatmul.f32.gmra.mxu0 %v4025
      %v4137 = vpop.f32.mrf.mxu0
      %v4138 = vadd.f32 0.0, %v4137
      %4139 = vmatmul.f32.gmra.mxu0 %v4028
      %v4140 = vpop.f32.mrf.mxu0
      %v4141 = vadd.f32 0.0, %v4140
      %4142 = vmatmul.f32.gmra.mxu0 %v4031
      %v4143 = vpop.f32.mrf.mxu0
      %v4144 = vadd.f32 0.0, %v4143
      %4145 = vmatmul.f32.gmra.mxu0 %v4034
      %v4146 = vpop.f32.mrf.mxu0
      %v4147 = vadd.f32 0.0, %v4146
      %4148 = vmatmul.f32.gmra.mxu0 %v4037
      %v4149 = vpop.f32.mrf.mxu0
      %v4150 = vadd.f32 0.0, %v4149
      %4151 = vmatmul.f32.gmra.mxu0 %v4040
      %v4152 = vpop.f32.mrf.mxu0
      %v4153 = vadd.f32 0.0, %v4152
      %4154 = vmatmul.f32.gmra.mxu0 %v4043
      %v4155 = vpop.f32.mrf.mxu0
      %v4156 = vadd.f32 0.0, %v4155
      %4157 = vmatmul.f32.gmra.mxu0 %v4046
      %v4158 = vpop.f32.mrf.mxu0
      %v4159 = vadd.f32 0.0, %v4158
      %4160 = vmatmul.f32.gmra.mxu0 %v4049
      %v4161 = vpop.f32.mrf.mxu0
      %v4162 = vadd.f32 0.0, %v4161
      %4163 = vmatmul.f32.gmra.mxu0 %v4052
      %v4164 = vpop.f32.mrf.mxu0
      %v4165 = vadd.f32 0.0, %v4164
      %4166 = vmatmul.f32.gmra.mxu0 %v4055
      %v4167 = vpop.f32.mrf.mxu0
      %v4168 = vadd.f32 0.0, %v4167
      %4169 = vmatmul.f32.gmra.mxu0 %v4058
      %v4170 = vpop.f32.mrf.mxu0
      %v4171 = vadd.f32 0.0, %v4170
      %4172 = vmatmul.f32.gmra.mxu0 %v4061
      %v4173 = vpop.f32.mrf.mxu0
      %v4174 = vadd.f32 0.0, %v4173
      %4175 = vmatmul.f32.gmra.mxu0 %v4064
      %v4176 = vpop.f32.mrf.mxu0
      %v4177 = vadd.f32 0.0, %v4176
      %4178 = vdwg.mxu0
      %v4179 = vld [vmem:[%s5] sm:$0x1]
      %v4181 = vperm.slane %v4179, 0
      %v4183 = vmul.f32 %v4084, %v4181
      %v4184 = vmul.f32 %v4087, %v4181
      %v4185 = vmul.f32 %v4090, %v4181
      %v4186 = vmul.f32 %v4093, %v4181
      %v4187 = vmul.f32 %v4096, %v4181
      %v4188 = vmul.f32 %v4099, %v4181
      %v4189 = vmul.f32 %v4102, %v4181
      %v4190 = vmul.f32 %v4105, %v4181
      %v4191 = vmul.f32 %v4108, %v4181
      %v4192 = vmul.f32 %v4111, %v4181
      %v4193 = vmul.f32 %v4114, %v4181
      %v4194 = vmul.f32 %v4117, %v4181
      %v4195 = vmul.f32 %v4120, %v4181
      %v4196 = vmul.f32 %v4123, %v4181
      %v4197 = vmul.f32 %v4126, %v4181
      %v4198 = vmul.f32 %v4129, %v4181
      %v4199 = vmul.f32 %v4132, %v4181
      %v4200 = vmul.f32 %v4135, %v4181
      %v4201 = vmul.f32 %v4138, %v4181
      %v4202 = vmul.f32 %v4141, %v4181
      %v4203 = vmul.f32 %v4144, %v4181
      %v4204 = vmul.f32 %v4147, %v4181
      %v4205 = vmul.f32 %v4150, %v4181
      %v4206 = vmul.f32 %v4153, %v4181
      %v4207 = vmul.f32 %v4156, %v4181
      %v4208 = vmul.f32 %v4159, %v4181
      %v4209 = vmul.f32 %v4162, %v4181
      %v4210 = vmul.f32 %v4165, %v4181
      %v4211 = vmul.f32 %v4168, %v4181
      %v4212 = vmul.f32 %v4171, %v4181
      %v4213 = vmul.f32 %v4174, %v4181
      %v4214 = vmul.f32 %v4177, %v4181
      %v4215 = vld [vmem:[%s6] sm:$0x1]
      %v4217 = vperm.slane %v4215, 0
      %v4219 = vadd.f32 %v4183, %v4217
      %v4220 = vadd.f32 %v4184, %v4217
      %v4221 = vadd.f32 %v4185, %v4217
      %v4222 = vadd.f32 %v4186, %v4217
      %v4223 = vadd.f32 %v4187, %v4217
      %v4224 = vadd.f32 %v4188, %v4217
      %v4225 = vadd.f32 %v4189, %v4217
      %v4226 = vadd.f32 %v4190, %v4217
      %v4227 = vadd.f32 %v4191, %v4217
      %v4228 = vadd.f32 %v4192, %v4217
      %v4229 = vadd.f32 %v4193, %v4217
      %v4230 = vadd.f32 %v4194, %v4217
      %v4231 = vadd.f32 %v4195, %v4217
      %v4232 = vadd.f32 %v4196, %v4217
      %v4233 = vadd.f32 %v4197, %v4217
      %v4234 = vadd.f32 %v4198, %v4217
      %v4235 = vadd.f32 %v4199, %v4217
      %v4236 = vadd.f32 %v4200, %v4217
      %v4237 = vadd.f32 %v4201, %v4217
      %v4238 = vadd.f32 %v4202, %v4217
      %v4239 = vadd.f32 %v4203, %v4217
      %v4240 = vadd.f32 %v4204, %v4217
      %v4241 = vadd.f32 %v4205, %v4217
      %v4242 = vadd.f32 %v4206, %v4217
      %v4243 = vadd.f32 %v4207, %v4217
      %v4244 = vadd.f32 %v4208, %v4217
      %v4245 = vadd.f32 %v4209, %v4217
      %v4246 = vadd.f32 %v4210, %v4217
      %v4247 = vadd.f32 %v4211, %v4217
      %v4248 = vadd.f32 %v4212, %v4217
      %v4249 = vadd.f32 %v4213, %v4217
      %v4250 = vadd.f32 %v4214, %v4217
      %v4251 = vmax.f32 %v4219, 0.0
      %v4252 = vmax.f32 %v4220, 0.0
      %v4253 = vmax.f32 %v4221, 0.0
      %v4254 = vmax.f32 %v4222, 0.0
      %v4255 = vmax.f32 %v4223, 0.0
      %v4256 = vmax.f32 %v4224, 0.0
      %v4257 = vmax.f32 %v4225, 0.0
      %v4258 = vmax.f32 %v4226, 0.0
      %v4259 = vmax.f32 %v4227, 0.0
      %v4260 = vmax.f32 %v4228, 0.0
      %v4261 = vmax.f32 %v4229, 0.0
      %v4262 = vmax.f32 %v4230, 0.0
      %v4263 = vmax.f32 %v4231, 0.0
      %v4264 = vmax.f32 %v4232, 0.0
      %v4265 = vmax.f32 %v4233, 0.0
      %v4266 = vmax.f32 %v4234, 0.0
      %v4267 = vmax.f32 %v4235, 0.0
      %v4268 = vmax.f32 %v4236, 0.0
      %v4269 = vmax.f32 %v4237, 0.0
      %v4270 = vmax.f32 %v4238, 0.0
      %v4271 = vmax.f32 %v4239, 0.0
      %v4272 = vmax.f32 %v4240, 0.0
      %v4273 = vmax.f32 %v4241, 0.0
      %v4274 = vmax.f32 %v4242, 0.0
      %v4275 = vmax.f32 %v4243, 0.0
      %v4276 = vmax.f32 %v4244, 0.0
      %v4277 = vmax.f32 %v4245, 0.0
      %v4278 = vmax.f32 %v4246, 0.0
      %v4279 = vmax.f32 %v4247, 0.0
      %v4280 = vmax.f32 %v4248, 0.0
      %v4281 = vmax.f32 %v4249, 0.0
      %v4282 = vmax.f32 %v4250, 0.0
      %4283 = vst.msk [vmem:[%s278] sm:$0xff] %vm1745, %v4251
      %4284 = vst.msk [vmem:[%s278 + $0x8] sm:$0xff] %vm1745, %v4252
      %4285 = vst.msk [vmem:[%s278 + $0x10] sm:$0xff] %vm1745, %v4253
      %4286 = vst.msk [vmem:[%s278 + $0x18] sm:$0xff] %vm1745, %v4254
      %4287 = vst.msk [vmem:[%s278 + $0x20] sm:$0xff] %vm1745, %v4255
      %4288 = vst.msk [vmem:[%s278 + $0x28] sm:$0xff] %vm1745, %v4256
      %4289 = vst.msk [vmem:[%s278 + $0x30] sm:$0xff] %vm1745, %v4257
      %4290 = vst.msk [vmem:[%s278 + $0x38] sm:$0xff] %vm1745, %v4258
      %4291 = vst.msk [vmem:[%s278 + $0x40] sm:$0xff] %vm1745, %v4259
      %4292 = vst.msk [vmem:[%s278 + $0x48] sm:$0xff] %vm1745, %v4260
      %4293 = vst.msk [vmem:[%s278 + $0x50] sm:$0xff] %vm1745, %v4261
      %4294 = vst.msk [vmem:[%s278 + $0x58] sm:$0xff] %vm1745, %v4262
      %4295 = vst.msk [vmem:[%s278 + $0x60] sm:$0xff] %vm1745, %v4263
      %4296 = vst.msk [vmem:[%s278 + $0x68] sm:$0xff] %vm1745, %v4264
      %4297 = vst.msk [vmem:[%s278 + $0x70] sm:$0xff] %vm1745, %v4265
      %4298 = vst.msk [vmem:[%s278 + $0x78] sm:$0xff] %vm1745, %v4266
      %4299 = vst.msk [vmem:[%s278 + $0x80] sm:$0xff] %vm1745, %v4267
      %4300 = vst.msk [vmem:[%s278 + $0x88] sm:$0xff] %vm1745, %v4268
      %4301 = vst.msk [vmem:[%s278 + $0x90] sm:$0xff] %vm1745, %v4269
      %4302 = vst.msk [vmem:[%s278 + $0x98] sm:$0xff] %vm1745, %v4270
      %4303 = vst.msk [vmem:[%s278 + $0xa0] sm:$0xff] %vm1745, %v4271
      %4304 = vst.msk [vmem:[%s278 + $0xa8] sm:$0xff] %vm1745, %v4272
      %4305 = vst.msk [vmem:[%s278 + $0xb0] sm:$0xff] %vm1745, %v4273
      %4306 = vst.msk [vmem:[%s278 + $0xb8] sm:$0xff] %vm1745, %v4274
      %4307 = vst.msk [vmem:[%s278 + $0xc0] sm:$0xff] %vm1745, %v4275
      %4308 = vst.msk [vmem:[%s278 + $0xc8] sm:$0xff] %vm1745, %v4276
      %4309 = vst.msk [vmem:[%s278 + $0xd0] sm:$0xff] %vm1745, %v4277
      %4310 = vst.msk [vmem:[%s278 + $0xd8] sm:$0xff] %vm1745, %v4278
      %4311 = vst.msk [vmem:[%s278 + $0xe0] sm:$0xff] %vm1745, %v4279
      %4312 = vst.msk [vmem:[%s278 + $0xe8] sm:$0xff] %vm1745, %v4280
      %4313 = vst.msk [vmem:[%s278 + $0xf0] sm:$0xff] %vm1745, %v4281
      %4314 = vst.msk [vmem:[%s278 + $0xf8] sm:$0xff] %vm1745, %v4282
      %p4315 = scmp.lt.s32.totalorder %s18, 1
      %s4316 = scalar_select %p4315, %s18, 1
      %s4317 = smul.addr %s4316, 32
      %s4318 = smul.addr %s4317, 8
      %s4319 = scalar_lea.vmem %s7, %s4318
      // Predicated region
      $region49: #{tpu_custom_call.1} parent=47 // pred_check
        %p4320 = pneg %p188
      $region50: #{tpu_custom_call.1} parent=47 // pred_check_branch
        %4322 = sbr.rel (%p4320) target = $region52
      $region51: #{tpu_custom_call.1} parent=47 // pred_region
        _
      $region52: #{tpu_custom_call.1} parent=47 // pred_fallthru
        _
    $region48: #{tpu_custom_call.1} parent=5 // pred_fallthru
      _
    %p4323 = scmp.le.s32.totalorder 2, %s13
    // Predicated region
    $region53: #{tpu_custom_call.1} parent=5 // pred_check
      %p4324 = pneg %p4323
    $region54: #{tpu_custom_call.1} parent=5 // pred_check_branch
      %4326 = sbr.rel (%p4324) target = $region56
    $region55: #{tpu_custom_call.1} parent=5 // pred_region
      %s4327 = ssub.s32 %s13, 2
      // Predicated region
      $region57: #{tpu_custom_call.1} parent=55 // pred_check
        %p4328 = pneg %p194
      $region58: #{tpu_custom_call.1} parent=55 // pred_check_branch
        %4330 = sbr.rel (%p4328) target = $region60
      $region59: #{tpu_custom_call.1} parent=55 // pred_region
        %p4331 = scmp.lt.s32.totalorder %s19, 1
        %s4332 = scalar_select %p4331, %s19, 1
        %s4333 = smul.addr %s4332, 32
        %s4334 = smul.addr %s4333, 8
        %s4335 = scalar_lea.vmem %s7, %s4334
      $region60: #{tpu_custom_call.1} parent=55 // pred_fallthru
        _
    $region56: #{tpu_custom_call.1} parent=5 // pred_fallthru
      _
  $region6: #{tpu_custom_call.1} parent=0 // loop_footer
    %s17 = sadd.s32 1, %s13
  $region7: #{tpu_custom_call.1} parent=0 // loop_footer_branch
    %12 = sbr.rel target = $region3
  $region8: #{tpu_custom_call.1} parent=0 // loop_exit
    _

</llo_original>
